<compile_context>
chip_gen: v7x
topology: tpu7x:2x2x1
jax: 0.10.0
libtpu: 0.0.40
codegen_flags: <defaults>
</compile_context>

<pallas_src>
import jax
import jax.numpy as jnp
from jax.experimental import pallas as pl
from jax.experimental.pallas import tpu as pltpu

F32 = jnp.float32
BF16 = jnp.bfloat16

KERNEL_PARAM_ORDER = ["w1t", "wc", "bc", "w2", "b2", "wmv", "bmv",
                      "wd1z", "wd2", "bd2", "wd3", "bd3"]


# --------------------------------------------------------------------------- kernel
def cvae_kernel(x_ref, c_ref, eps_ref,
                w1t_ref, wc_ref, bc_ref, w2_ref, b2_ref,
                wmv_ref, bmv_ref, wd1z_ref, wd2_ref, bd2_ref, wd3_ref, bd3_ref,
                xpred_ref, stats_ref,
                pooled_sc, cproj_sc):
    p = pl.program_id(1)
    n_chunks = pl.num_programs(1)

    bt, _, nc = x_ref.shape
    hidden = w2_ref.shape[0]
    z_dim = wmv_ref.shape[1] // 2

    # ---- once per batch tile: running-max init + fused conditioning projection ----
    @pl.when(p == 0)
    def _init():
        pooled_sc[...] = jnp.full_like(pooled_sc, -jnp.inf)
        # cproj = [ c@W1c + b1 | c@Wd1c + bd1 ]   (encoder + decoder condition biases)
        cproj_sc[...] = (jnp.dot(c_ref[...].astype(BF16), wc_ref[...],
                                 preferred_element_type=F32) + bc_ref[...])

    # ---- encoder on this point chunk: per-point MLP + running max-pool ----
    x_blk = x_ref[...]                                     # (bt, 3, nc) channel-major f32
    w1t = w1t_ref[...]                                     # (hidden, 3) f32
    # K=3 layer as 3 broadcast FMAs on the VPU (feature-major, no lane padding of x).
    acc = x_blk[:, 0:1, :] * w1t[None, :, 0:1]
    acc = acc + x_blk[:, 1:2, :] * w1t[None, :, 1:2]
    acc = acc + x_blk[:, 2:3, :] * w1t[None, :, 2:3]       # (bt, hidden, nc)
    # lane-dense transpose to point-major, then bias + ReLU with hidden on lanes.
    h = jnp.transpose(acc, (0, 2, 1))                      # (bt, nc, hidden)
    cb1 = cproj_sc[:, 0:hidden]                            # (bt, hidden)
    h = jnp.maximum(h + cb1[:, None, :], 0.0)

    h2 = jnp.dot(h.reshape(bt * nc, hidden).astype(BF16), w2_ref[...],
                 preferred_element_type=F32) + b2_ref[...]
    h2 = jnp.maximum(h2, 0.0).reshape(bt, nc, hidden)
    pooled_sc[...] = jnp.maximum(pooled_sc[...], jnp.max(h2, axis=1))

    # ---- last chunk: heads, reparameterize, decoder, outputs ----
    @pl.when(p == n_chunks - 1)
    def _finish():
        pooled = pooled_sc[...].astype(BF16)
        mv = jnp.dot(pooled, wmv_ref[...],
                     preferred_element_type=F32) + bmv_ref[...]            # (bt, 2z)
        mean = mv[:, 0:z_dim]
        log_var = mv[:, z_dim:2 * z_dim]
        std = jnp.exp(0.5 * log_var)                                       # f32 EUP
        z = mean + eps_ref[...] * std

        cd1 = cproj_sc[:, hidden:2 * hidden]                               # c@Wd1c + bd1
        hd = jnp.maximum(jnp.dot(z.astype(BF16), wd1z_ref[...],
                                 preferred_element_type=F32) + cd1, 0.0)
        hd = jnp.maximum(jnp.dot(hd.astype(BF16), wd2_ref[...],
                                 preferred_element_type=F32) + bd2_ref[...], 0.0)
        out = jnp.dot(hd.astype(BF16), wd3_ref[...],
                      preferred_element_type=F32) + bd3_ref[...]           # (bt, 3*np)
        xpred_ref[...] = out

        # lane-dense stats slab: [ mean | log_var | z | zero pad ]
        stats_ref[...] = jnp.zeros(stats_ref.shape, stats_ref.dtype)
        stats_ref[:, 0:2 * z_dim] = mv
        stats_ref[:, 2 * z_dim:3 * z_dim] = z


# --------------------------------------------------------------------------- host utils
def _round_up(v, m):
    return -(-v // m) * m


def _tpu_budget():
    """Best-effort (vmem_capacity_bytes, tensorcores_per_chip) with safe fallbacks."""
    vmem = 64 * 1024 * 1024          # conservative default (v7x per-TC VMEM)
    cores = 1
    try:
        info = pltpu.get_tpu_info()
        vmem = int(getattr(info, "vmem_capacity_bytes", vmem))
    except Exception:
        pass
    try:
        kind = jax.devices()[0].device_kind.lower()
        if "v7" in kind:             # 2 TensorCores per chip
            cores = 2
    except Exception:
        pass
    return vmem, cores


def _choose_point_chunk(N, target=512):
    if N <= target or N % 128 != 0:
        return N
    nc = min(target, N)
    nc -= nc % 128
    while nc >= 128 and N % nc != 0:
        nc -= 128
    return nc if nc >= 128 else N


def _estimate_vmem_bytes(bt, nc, hidden, c_dim, z_dim, out_dim, stat_pad, weights):
    f32b = 4
    lane = lambda v: _round_up(v, 128)
    sub = lambda v: _round_up(v, 8)
    inputs = 2 * (bt * sub(3) * lane(nc)
                  + sub(bt) * lane(c_dim)
                  + sub(bt) * lane(z_dim)) * f32b
    w_bytes = 2 * sum(sub(int(w.shape[0])) * lane(int(w.shape[1])) * w.dtype.itemsize
                      for w in weights)
    outputs = 2 * bt * (lane(out_dim) + stat_pad) * f32b
    act = (2 * bt * sub(hidden) * lane(nc) * f32b          # acc + transpose result
           + bt * sub(nc) * lane(hidden) * (2 + f32b)      # bf16 MXU copy + f32 h2
           + bt * lane(out_dim) * f32b                     # decoder output tile
           + 4 * bt * lane(hidden) * f32b)                 # decoder hiddens / pooled temps
    scratch = bt * (lane(hidden) + lane(2 * hidden)) * f32b
    return inputs + w_bytes + outputs + act + scratch


def _choose_b_tile(B, cores, fits):
    cands = sorted({t for t in range(8, B + 1, 8) if B % t == 0} | {B}, reverse=True)
    fitting = [t for t in cands if fits(t)]
    if not fitting:
        return cands[-1]
    if cores > 1:
        multi = [t for t in fitting if B // t >= cores]
        if multi:
            return multi[0]          # largest tile that still feeds every TensorCore
    return fitting[0]                # single-TC chips: largest fitting tile (grid may be 1)


# --------------------------------------------------------------------------- params
def init_params(key, c_dim, z_dim, hidden, num_points):
    ks = jax.random.split(key, 9)
    p = {}
    p["w1x"] = 0.05 * jax.random.normal(ks[0], (3, hidden), F32)
    p["w1c"] = 0.05 * jax.random.normal(ks[1], (c_dim, hidden), F32)
    p["b1"] = jnp.zeros((1, hidden), F32)
    p["w2"] = 0.05 * jax.random.normal(ks[2], (hidden, hidden), F32)
    p["b2"] = jnp.zeros((1, hidden), F32)
    p["wm"] = 0.05 * jax.random.normal(ks[3], (hidden, z_dim), F32)
    p["bm"] = jnp.zeros((1, z_dim), F32)
    p["wv"] = 0.05 * jax.random.normal(ks[4], (hidden, z_dim), F32)
    p["bv"] = jnp.zeros((1, z_dim), F32)
    p["wd1z"] = 0.05 * jax.random.normal(ks[5], (z_dim, hidden), F32)
    p["wd1c"] = 0.05 * jax.random.normal(ks[6], (c_dim, hidden), F32)
    p["bd1"] = jnp.zeros((1, hidden), F32)
    p["wd2"] = 0.05 * jax.random.normal(ks[7], (hidden, hidden), F32)
    p["bd2"] = jnp.zeros((1, hidden), F32)
    p["wd3"] = 0.05 * jax.random.normal(ks[8], (hidden, 3 * num_points), F32)
    p["bd3"] = jnp.zeros((1, 3 * num_points), F32)
    return p


def pack_params(params):
    """Host-side packing: fuse the tiny matmuls and lay weights out for the kernel."""
    f = lambda a: jnp.asarray(a, F32)
    return dict(
        w1t=jnp.transpose(f(params["w1x"])),                                   # (H, 3) f32
        wc=jnp.concatenate([params["w1c"], params["wd1c"]], axis=1).astype(BF16),
        bc=jnp.concatenate([f(params["b1"]), f(params["bd1"])], axis=1),       # (1, 2H)
        w2=params["w2"].astype(BF16), b2=f(params["b2"]),
        wmv=jnp.concatenate([params["wm"], params["wv"]], axis=1).astype(BF16),
        bmv=jnp.concatenate([f(params["bm"]), f(params["bv"])], axis=1),       # (1, 2z)
        wd1z=params["wd1z"].astype(BF16),
        wd2=params["wd2"].astype(BF16), bd2=f(params["bd2"]),
        wd3=params["wd3"].astype(BF16), bd3=f(params["bd3"]),
    )


# --------------------------------------------------------------------------- forward
def cvae_forward(x, c, eps, params, *, num_points, b_tile=None, point_chunk=None):
    B, N, three = x.shape
    assert three == 3
    c_dim = c.shape[-1]
    z_dim = eps.shape[-1]
    hidden = params["w2"].shape[0]
    out_dim = 3 * num_points
    assert params["wd3"].shape[1] == out_dim
    stat_pad = max(128, _round_up(3 * z_dim, 128))

    packed = pack_params(params)
    weight_args = [packed[k] for k in KERNEL_PARAM_ORDER]

    # channel-major x: contiguous DMA rows, no 3->128 lane padding inside the kernel.
    x_cm = jnp.transpose(x.astype(F32), (0, 2, 1))          # (B, 3, N)

    vmem_cap, cores = _tpu_budget()
    budget = int(vmem_cap * 3 // 4)                         # ~48 MiB v7x, ~96 MiB v5e/v6e

    nc = point_chunk if point_chunk is not None else _choose_point_chunk(N)
    assert N % nc == 0

    def est(bt, nc_):
        return _estimate_vmem_bytes(bt, nc_, hidden, c_dim, z_dim, out_dim,
                                    stat_pad, weight_args)

    if b_tile is None:
        while True:
            b_tile = _choose_b_tile(B, cores, lambda t: est(t, nc) <= budget)
            if est(b_tile, nc) <= budget or nc % 256 != 0 or nc <= 128:
                break
            nc //= 2
    assert B % b_tile == 0 and (b_tile % 8 == 0 or b_tile == B)

    n_chunks = N // nc
    grid = (B // b_tile, n_chunks)

    def const_spec(w):
        # constant index_map -> DMA'd into VMEM once for the whole grid.
        return pl.BlockSpec(w.shape, lambda b, p: (0, 0))

    in_specs = [
        pl.BlockSpec((b_tile, 3, nc), lambda b, p: (b, 0, p)),
        pl.BlockSpec((b_tile, c_dim), lambda b, p: (b, 0)),
        pl.BlockSpec((b_tile, z_dim), lambda b, p: (b, 0)),
    ] + [const_spec(w) for w in weight_args]

    out_specs = [
        pl.BlockSpec((b_tile, out_dim), lambda b, p: (b, 0)),
        pl.BlockSpec((b_tile, stat_pad), lambda b, p: (b, 0)),
    ]
    out_shape = (
        jax.ShapeDtypeStruct((B, out_dim), F32),
        jax.ShapeDtypeStruct((B, stat_pad), F32),
    )

    flops = 2 * B * (N * 3 * hidden + N * hidden * hidden
                     + c_dim * 2 * hidden + hidden * 2 * z_dim
                     + z_dim * hidden + hidden * hidden + hidden * out_dim)
    bytes_accessed = (x_cm.size * 4 + c.size * 4 + eps.size * 4
                      + sum(int(w.size) * w.dtype.itemsize for w in weight_args)
                      + B * out_dim * 4 + B * stat_pad * 4)
    cost = pl.CostEstimate(flops=int(flops), transcendentals=int(B * z_dim),
                           bytes_accessed=int(bytes_accessed))

    xpred_flat, stats = pl.pallas_call(
        cvae_kernel,
        out_shape=out_shape,
        grid_spec=pltpu.PrefetchScalarGridSpec(
            num_scalar_prefetch=0,
            grid=grid,
            in_specs=in_specs,
            out_specs=out_specs,
            scratch_shapes=[pltpu.VMEM((b_tile, hidden), F32),        # running max-pool
                            pltpu.VMEM((b_tile, 2 * hidden), F32)],   # fused c-projection
        ),
        compiler_params=pltpu.CompilerParams(
            dimension_semantics=("parallel", "arbitrary"),
            vmem_limit_bytes=budget,
        ),
        cost_estimate=cost,
    )(x_cm, c.astype(F32), eps.astype(F32), *weight_args)

    x_pred = xpred_flat.reshape(B, num_points, 3)
    mean = stats[:, :z_dim]
    log_var = stats[:, z_dim:2 * z_dim]
    z = stats[:, 2 * z_dim:3 * z_dim]
    return x_pred, mean, log_var, z


# --------------------------------------------------------------------------- reference
def cvae_reference(x, c, eps, params):
    h = jax.nn.relu(x @ params["w1x"] + (c @ params["w1c"] + params["b1"])[:, None, :])
    h = jax.nn.relu(h @ params["w2"] + params["b2"])
    pooled = h.max(axis=1)
    mean = pooled @ params["wm"] + params["bm"]
    log_var = pooled @ params["wv"] + params["bv"]
    z = mean + eps * jnp.exp(0.5 * log_var)
    hd = jax.nn.relu(z @ params["wd1z"] + c @ params["wd1c"] + params["bd1"])
    hd = jax.nn.relu(hd @ params["wd2"] + params["bd2"])
    out = hd @ params["wd3"] + params["bd3"]
    return out.reshape(x.shape[0], -1, 3), mean, log_var, z


if __name__ == "__main__":
    B = 16
    num_points = 128        # encoder input points == decoder output points
    z_dim = 8
    c_dim = 16
    hidden = 128

    key = jax.random.PRNGKey(0)
    k_x, k_c, k_eps, k_p = jax.random.split(key, 4)

    x = jax.random.normal(k_x, (B, num_points, 3), jnp.float32)
    c = jax.random.normal(k_c, (B, c_dim), jnp.float32)
    # eps for reparameterize (torch.randn_like equivalent, precomputed for determinism)
    eps = jax.random.normal(k_eps, (B, z_dim), jnp.float32)

    params = init_params(k_p, c_dim, z_dim, hidden, num_points)

    outs = cvae_forward(x, c, eps, params, num_points=num_points)
    jax.block_until_ready(outs)
    x_pred, mean, log_var, z = outs

    assert x_pred.shape == (B, num_points, 3)
    assert mean.shape == (B, z_dim)
    assert log_var.shape == (B, z_dim)
    assert z.shape == (B, z_dim)

    # pure-JAX f32 reference (kernel uses bf16 MXU operands -> loose tolerance)
    refs = cvae_reference(x, c, eps, params)
    for got, want in zip((x_pred, mean, log_var, z), refs):
        assert jnp.allclose(got, want, atol=2e-2, rtol=2e-1), float(
            jnp.max(jnp.abs(got - want)))

    print("KERNEL_OK")
</pallas_src>

<mosaic_0001>
module attributes {stable_mosaic.version = 11 : i64} {
  func.func @cvae_kernel(%arg0: i32, %arg1: i32, %arg2: memref<16x3x128xf32, #tpu.memory_space<vmem>>, %arg3: memref<16x16xf32, #tpu.memory_space<vmem>>, %arg4: memref<16x8xf32, #tpu.memory_space<vmem>>, %arg5: memref<128x3xf32, #tpu.memory_space<vmem>>, %arg6: memref<16x256xbf16, #tpu.memory_space<vmem>>, %arg7: memref<1x256xf32, #tpu.memory_space<vmem>>, %arg8: memref<128x128xbf16, #tpu.memory_space<vmem>>, %arg9: memref<1x128xf32, #tpu.memory_space<vmem>>, %arg10: memref<128x16xbf16, #tpu.memory_space<vmem>>, %arg11: memref<1x16xf32, #tpu.memory_space<vmem>>, %arg12: memref<8x128xbf16, #tpu.memory_space<vmem>>, %arg13: memref<128x128xbf16, #tpu.memory_space<vmem>>, %arg14: memref<1x128xf32, #tpu.memory_space<vmem>>, %arg15: memref<128x384xbf16, #tpu.memory_space<vmem>>, %arg16: memref<1x384xf32, #tpu.memory_space<vmem>>, %arg17: memref<16x384xf32, #tpu.memory_space<vmem>>, %arg18: memref<16x128xf32, #tpu.memory_space<vmem>>, %arg19: memref<16x128xf32, #tpu.memory_space<vmem>>, %arg20: memref<16x256xf32, #tpu.memory_space<vmem>>) attributes {dimension_semantics = [#tpu.dimension_semantics<parallel>, #tpu.dimension_semantics<arbitrary>], iteration_bounds = array<i64: 1, 1>, scalar_prefetch = 0 : i64, scratch_operands = 2 : i64, tpu.core_type = #tpu.core_type<tc>, window_params = [{transform_indices = @transform_0, window_bounds = array<i64: 16, 3, 128>}, {transform_indices = @transform_1, window_bounds = array<i64: 16, 16>}, {transform_indices = @transform_2, window_bounds = array<i64: 16, 8>}, {pipeline_mode = #tpu.pipeline_mode<synchronous>, transform_indices = @transform_3, window_bounds = array<i64: 128, 3>}, {pipeline_mode = #tpu.pipeline_mode<synchronous>, transform_indices = @transform_4, window_bounds = array<i64: 16, 256>}, {pipeline_mode = #tpu.pipeline_mode<synchronous>, transform_indices = @transform_5, window_bounds = array<i64: 1, 256>}, {pipeline_mode = #tpu.pipeline_mode<synchronous>, transform_indices = @transform_6, window_bounds = array<i64: 128, 128>}, {pipeline_mode = #tpu.pipeline_mode<synchronous>, transform_indices = @transform_7, window_bounds = array<i64: 1, 128>}, {pipeline_mode = #tpu.pipeline_mode<synchronous>, transform_indices = @transform_8, window_bounds = array<i64: 128, 16>}, {pipeline_mode = #tpu.pipeline_mode<synchronous>, transform_indices = @transform_9, window_bounds = array<i64: 1, 16>}, {pipeline_mode = #tpu.pipeline_mode<synchronous>, transform_indices = @transform_10, window_bounds = array<i64: 8, 128>}, {pipeline_mode = #tpu.pipeline_mode<synchronous>, transform_indices = @transform_11, window_bounds = array<i64: 128, 128>}, {pipeline_mode = #tpu.pipeline_mode<synchronous>, transform_indices = @transform_12, window_bounds = array<i64: 1, 128>}, {pipeline_mode = #tpu.pipeline_mode<synchronous>, transform_indices = @transform_13, window_bounds = array<i64: 128, 384>}, {pipeline_mode = #tpu.pipeline_mode<synchronous>, transform_indices = @transform_14, window_bounds = array<i64: 1, 384>}, {transform_indices = @transform_15, window_bounds = array<i64: 16, 384>}, {transform_indices = @transform_16, window_bounds = array<i64: 16, 128>}]} {
    %c0_i32 = arith.constant 0 : i32
    %0 = arith.cmpi eq, %arg1, %c0_i32 : i32
    %1 = arith.extui %0 : i1 to i32
    %c0_i32_0 = arith.constant 0 : i32
    %2 = arith.cmpi ne, %1, %c0_i32_0 : i32
    scf.if %2 {
      %cst_20 = arith.constant 0xFF800000 : f32
      %49 = vector.broadcast %cst_20 : f32 to vector<16x128xf32>
      %c0_21 = arith.constant 0 : index
      %c0_22 = arith.constant 0 : index
      %50 = vector.load %arg19[%c0_21, %c0_22] : memref<16x128xf32, #tpu.memory_space<vmem>>, vector<16x128xf32>
      tpu.vector_store %arg19[%c0_21, %c0_22], %49 {strides = array<i32>} : memref<16x128xf32, #tpu.memory_space<vmem>>, vector<16x128xf32>,
      %c0_23 = arith.constant 0 : index
      %c0_24 = arith.constant 0 : index
      %51 = vector.load %arg3[%c0_23, %c0_24] : memref<16x16xf32, #tpu.memory_space<vmem>>, vector<16x16xf32>
      %52 = arith.truncf %51 : vector<16x16xf32> to vector<16x16xbf16>
      %c0_25 = arith.constant 0 : index
      %c0_26 = arith.constant 0 : index
      %53 = vector.load %arg6[%c0_25, %c0_26] : memref<16x256xbf16, #tpu.memory_space<vmem>>, vector<16x256xbf16>
      %cst_27 = arith.constant dense<0.000000e+00> : vector<16x256xf32>
      %54 = tpu.matmul %52, %53, %cst_27 {dimension_numbers = #tpu.dot_dimension_numbers<[1], [0], [0], [1], [0, 0, 1, 1], [], []>} : vector<16x16xbf16>, vector<16x256xbf16>, vector<16x256xf32> -> vector<16x256xf32>
      %c0_28 = arith.constant 0 : index
      %c0_29 = arith.constant 0 : index
      %55 = vector.load %arg7[%c0_28, %c0_29] : memref<1x256xf32, #tpu.memory_space<vmem>>, vector<1x256xf32>
      %56 = vector.broadcast %55 : vector<1x256xf32> to vector<16x256xf32>
      %57 = arith.addf %54, %56 : vector<16x256xf32>
      %c0_30 = arith.constant 0 : index
      %c0_31 = arith.constant 0 : index
      %58 = vector.load %arg20[%c0_30, %c0_31] : memref<16x256xf32, #tpu.memory_space<vmem>>, vector<16x256xf32>
      tpu.vector_store %arg20[%c0_30, %c0_31], %57 {strides = array<i32>} : memref<16x256xf32, #tpu.memory_space<vmem>>, vector<16x256xf32>,
    } else {
    }
    %c0 = arith.constant 0 : index
    %c0_1 = arith.constant 0 : index
    %c0_2 = arith.constant 0 : index
    %3 = vector.load %arg2[%c0, %c0_1, %c0_2] : memref<16x3x128xf32, #tpu.memory_space<vmem>>, vector<16x3x128xf32>
    %c0_3 = arith.constant 0 : index
    %c0_4 = arith.constant 0 : index
    %4 = vector.load %arg5[%c0_3, %c0_4] : memref<128x3xf32, #tpu.memory_space<vmem>>, vector<128x3xf32>
    %5 = vector.extract_strided_slice %3 {offsets = [0, 0, 0], sizes = [16, 1, 128], strides = [1, 1, 1]} : vector<16x3x128xf32> to vector<16x1x128xf32>
    %6 = vector.extract_strided_slice %4 {offsets = [0, 0], sizes = [128, 1], strides = [1, 1]} : vector<128x3xf32> to vector<128x1xf32>
    %7 = vector.shape_cast %6 : vector<128x1xf32> to vector<1x128x1xf32>
    %8 = vector.broadcast %5 : vector<16x1x128xf32> to vector<16x128x128xf32>
    %9 = vector.broadcast %7 : vector<1x128x1xf32> to vector<16x128x128xf32>
    %10 = arith.mulf %8, %9 : vector<16x128x128xf32>
    %11 = vector.extract_strided_slice %3 {offsets = [0, 1, 0], sizes = [16, 1, 128], strides = [1, 1, 1]} : vector<16x3x128xf32> to vector<16x1x128xf32>
    %12 = vector.extract_strided_slice %4 {offsets = [0, 1], sizes = [128, 1], strides = [1, 1]} : vector<128x3xf32> to vector<128x1xf32>
    %13 = vector.shape_cast %12 : vector<128x1xf32> to vector<1x128x1xf32>
    %14 = vector.broadcast %11 : vector<16x1x128xf32> to vector<16x128x128xf32>
    %15 = vector.broadcast %13 : vector<1x128x1xf32> to vector<16x128x128xf32>
    %16 = arith.mulf %14, %15 : vector<16x128x128xf32>
    %17 = arith.addf %10, %16 : vector<16x128x128xf32>
    %18 = vector.extract_strided_slice %3 {offsets = [0, 2, 0], sizes = [16, 1, 128], strides = [1, 1, 1]} : vector<16x3x128xf32> to vector<16x1x128xf32>
    %19 = vector.extract_strided_slice %4 {offsets = [0, 2], sizes = [128, 1], strides = [1, 1]} : vector<128x3xf32> to vector<128x1xf32>
    %20 = vector.shape_cast %19 : vector<128x1xf32> to vector<1x128x1xf32>
    %21 = vector.broadcast %18 : vector<16x1x128xf32> to vector<16x128x128xf32>
    %22 = vector.broadcast %20 : vector<1x128x1xf32> to vector<16x128x128xf32>
    %23 = arith.mulf %21, %22 : vector<16x128x128xf32>
    %24 = arith.addf %17, %23 : vector<16x128x128xf32>
    %25 = tpu.transpose %24, [0, 2, 1] : vector<16x128x128xf32> -> vector<16x128x128xf32>
    %c0_5 = arith.constant 0 : index
    %c0_6 = arith.constant 0 : index
    %26 = vector.load %arg20[%c0_5, %c0_6] : memref<16x256xf32, #tpu.memory_space<vmem>>, vector<16x128xf32>
    %27 = vector.shape_cast %26 : vector<16x128xf32> to vector<16x1x128xf32>
    %28 = vector.broadcast %27 : vector<16x1x128xf32> to vector<16x128x128xf32>
    %29 = arith.addf %25, %28 : vector<16x128x128xf32>
    %cst = arith.constant 0.000000e+00 : f32
    %30 = vector.broadcast %cst : f32 to vector<16x128x128xf32>
    %31 = arith.maximumf %29, %30 : vector<16x128x128xf32>
    %32 = vector.shape_cast %31 : vector<16x128x128xf32> to vector<2048x128xf32>
    %33 = arith.truncf %32 : vector<2048x128xf32> to vector<2048x128xbf16>
    %c0_7 = arith.constant 0 : index
    %c0_8 = arith.constant 0 : index
    %34 = vector.load %arg8[%c0_7, %c0_8] : memref<128x128xbf16, #tpu.memory_space<vmem>>, vector<128x128xbf16>
    %cst_9 = arith.constant dense<0.000000e+00> : vector<2048x128xf32>
    %35 = tpu.matmul %33, %34, %cst_9 {dimension_numbers = #tpu.dot_dimension_numbers<[1], [0], [0], [1], [0, 0, 1, 1], [], []>} : vector<2048x128xbf16>, vector<128x128xbf16>, vector<2048x128xf32> -> vector<2048x128xf32>
    %c0_10 = arith.constant 0 : index
    %c0_11 = arith.constant 0 : index
    %36 = vector.load %arg9[%c0_10, %c0_11] : memref<1x128xf32, #tpu.memory_space<vmem>>, vector<1x128xf32>
    %37 = vector.broadcast %36 : vector<1x128xf32> to vector<2048x128xf32>
    %38 = arith.addf %35, %37 : vector<2048x128xf32>
    %cst_12 = arith.constant 0.000000e+00 : f32
    %39 = vector.broadcast %cst_12 : f32 to vector<2048x128xf32>
    %40 = arith.maximumf %38, %39 : vector<2048x128xf32>
    %41 = vector.shape_cast %40 : vector<2048x128xf32> to vector<16x128x128xf32>
    %c0_13 = arith.constant 0 : index
    %c0_14 = arith.constant 0 : index
    %42 = vector.load %arg19[%c0_13, %c0_14] : memref<16x128xf32, #tpu.memory_space<vmem>>, vector<16x128xf32>
    %cst_15 = arith.constant dense<0xFF800000> : vector<16x128xf32>
    %43 = vector.multi_reduction <maximumf>, %41, %cst_15 [1] : vector<16x128x128xf32> to vector<16x128xf32>
    %44 = arith.maximumf %42, %43 : vector<16x128xf32>
    %c0_16 = arith.constant 0 : index
    %c0_17 = arith.constant 0 : index
    %45 = vector.load %arg19[%c0_16, %c0_17] : memref<16x128xf32, #tpu.memory_space<vmem>>, vector<16x128xf32>
    tpu.vector_store %arg19[%c0_16, %c0_17], %44 {strides = array<i32>} : memref<16x128xf32, #tpu.memory_space<vmem>>, vector<16x128xf32>,
    %c0_i32_18 = arith.constant 0 : i32
    %46 = arith.cmpi eq, %arg1, %c0_i32_18 : i32
    %47 = arith.extui %46 : i1 to i32
    %c0_i32_19 = arith.constant 0 : i32
    %48 = arith.cmpi ne, %47, %c0_i32_19 : i32
    scf.if %48 {
      %c0_20 = arith.constant 0 : index
      %c0_21 = arith.constant 0 : index
      %49 = vector.load %arg19[%c0_20, %c0_21] : memref<16x128xf32, #tpu.memory_space<vmem>>, vector<16x128xf32>
      %50 = arith.truncf %49 : vector<16x128xf32> to vector<16x128xbf16>
      %c0_22 = arith.constant 0 : index
      %c0_23 = arith.constant 0 : index
      %51 = vector.load %arg10[%c0_22, %c0_23] : memref<128x16xbf16, #tpu.memory_space<vmem>>, vector<128x16xbf16>
      %cst_24 = arith.constant dense<0.000000e+00> : vector<16x16xf32>
      %52 = tpu.matmul %50, %51, %cst_24 {dimension_numbers = #tpu.dot_dimension_numbers<[1], [0], [0], [1], [0, 0, 1, 1], [], []>} : vector<16x128xbf16>, vector<128x16xbf16>, vector<16x16xf32> -> vector<16x16xf32>
      %c0_25 = arith.constant 0 : index
      %c0_26 = arith.constant 0 : index
      %53 = vector.load %arg11[%c0_25, %c0_26] : memref<1x16xf32, #tpu.memory_space<vmem>>, vector<1x16xf32>
      %54 = vector.broadcast %53 : vector<1x16xf32> to vector<16x16xf32>
      %55 = arith.addf %52, %54 : vector<16x16xf32>
      %56 = vector.extract_strided_slice %55 {offsets = [0, 0], sizes = [16, 8], strides = [1, 1]} : vector<16x16xf32> to vector<16x8xf32>
      %57 = vector.extract_strided_slice %55 {offsets = [0, 8], sizes = [16, 8], strides = [1, 1]} : vector<16x16xf32> to vector<16x8xf32>
      %cst_27 = arith.constant 5.000000e-01 : f32
      %58 = vector.broadcast %cst_27 : f32 to vector<16x8xf32>
      %59 = arith.mulf %58, %57 : vector<16x8xf32>
      %60 = math.exp %59 : vector<16x8xf32>
      %c0_28 = arith.constant 0 : index
      %c0_29 = arith.constant 0 : index
      %61 = vector.load %arg4[%c0_28, %c0_29] : memref<16x8xf32, #tpu.memory_space<vmem>>, vector<16x8xf32>
      %62 = arith.mulf %61, %60 : vector<16x8xf32>
      %63 = arith.addf %56, %62 : vector<16x8xf32>
      %c0_30 = arith.constant 0 : index
      %c128 = arith.constant 128 : index
      %64 = vector.load %arg20[%c0_30, %c128] : memref<16x256xf32, #tpu.memory_space<vmem>>, vector<16x128xf32>
      %65 = arith.truncf %63 : vector<16x8xf32> to vector<16x8xbf16>
      %c0_31 = arith.constant 0 : index
      %c0_32 = arith.constant 0 : index
      %66 = vector.load %arg12[%c0_31, %c0_32] : memref<8x128xbf16, #tpu.memory_space<vmem>>, vector<8x128xbf16>
      %cst_33 = arith.constant dense<0.000000e+00> : vector<16x128xf32>
      %67 = tpu.matmul %65, %66, %cst_33 {dimension_numbers = #tpu.dot_dimension_numbers<[1], [0], [0], [1], [0, 0, 1, 1], [], []>} : vector<16x8xbf16>, vector<8x128xbf16>, vector<16x128xf32> -> vector<16x128xf32>
      %68 = arith.addf %67, %64 : vector<16x128xf32>
      %cst_34 = arith.constant 0.000000e+00 : f32
      %69 = vector.broadcast %cst_34 : f32 to vector<16x128xf32>
      %70 = arith.maximumf %68, %69 : vector<16x128xf32>
      %71 = arith.truncf %70 : vector<16x128xf32> to vector<16x128xbf16>
      %c0_35 = arith.constant 0 : index
      %c0_36 = arith.constant 0 : index
      %72 = vector.load %arg13[%c0_35, %c0_36] : memref<128x128xbf16, #tpu.memory_space<vmem>>, vector<128x128xbf16>
      %cst_37 = arith.constant dense<0.000000e+00> : vector<16x128xf32>
      %73 = tpu.matmul %71, %72, %cst_37 {dimension_numbers = #tpu.dot_dimension_numbers<[1], [0], [0], [1], [0, 0, 1, 1], [], []>} : vector<16x128xbf16>, vector<128x128xbf16>, vector<16x128xf32> -> vector<16x128xf32>
      %c0_38 = arith.constant 0 : index
      %c0_39 = arith.constant 0 : index
      %74 = vector.load %arg14[%c0_38, %c0_39] : memref<1x128xf32, #tpu.memory_space<vmem>>, vector<1x128xf32>
      %75 = vector.broadcast %74 : vector<1x128xf32> to vector<16x128xf32>
      %76 = arith.addf %73, %75 : vector<16x128xf32>
      %cst_40 = arith.constant 0.000000e+00 : f32
      %77 = vector.broadcast %cst_40 : f32 to vector<16x128xf32>
      %78 = arith.maximumf %76, %77 : vector<16x128xf32>
      %79 = arith.truncf %78 : vector<16x128xf32> to vector<16x128xbf16>
      %c0_41 = arith.constant 0 : index
      %c0_42 = arith.constant 0 : index
      %80 = vector.load %arg15[%c0_41, %c0_42] : memref<128x384xbf16, #tpu.memory_space<vmem>>, vector<128x384xbf16>
      %cst_43 = arith.constant dense<0.000000e+00> : vector<16x384xf32>
      %81 = tpu.matmul %79, %80, %cst_43 {dimension_numbers = #tpu.dot_dimension_numbers<[1], [0], [0], [1], [0, 0, 1, 1], [], []>} : vector<16x128xbf16>, vector<128x384xbf16>, vector<16x384xf32> -> vector<16x384xf32>
      %c0_44 = arith.constant 0 : index
      %c0_45 = arith.constant 0 : index
      %82 = vector.load %arg16[%c0_44, %c0_45] : memref<1x384xf32, #tpu.memory_space<vmem>>, vector<1x384xf32>
      %83 = vector.broadcast %82 : vector<1x384xf32> to vector<16x384xf32>
      %84 = arith.addf %81, %83 : vector<16x384xf32>
      %c0_46 = arith.constant 0 : index
      %c0_47 = arith.constant 0 : index
      %85 = vector.load %arg17[%c0_46, %c0_47] : memref<16x384xf32, #tpu.memory_space<vmem>>, vector<16x384xf32>
      tpu.vector_store %arg17[%c0_46, %c0_47], %84 {strides = array<i32>} : memref<16x384xf32, #tpu.memory_space<vmem>>, vector<16x384xf32>,
      %cst_48 = arith.constant 0.000000e+00 : f32
      %86 = vector.broadcast %cst_48 : f32 to vector<16x128xf32>
      %c0_49 = arith.constant 0 : index
      %c0_50 = arith.constant 0 : index
      %87 = vector.load %arg18[%c0_49, %c0_50] : memref<16x128xf32, #tpu.memory_space<vmem>>, vector<16x128xf32>
      tpu.vector_store %arg18[%c0_49, %c0_50], %86 {strides = array<i32>} : memref<16x128xf32, #tpu.memory_space<vmem>>, vector<16x128xf32>,
      %c0_51 = arith.constant 0 : index
      %c0_52 = arith.constant 0 : index
      %88 = vector.load %arg18[%c0_51, %c0_52] : memref<16x128xf32, #tpu.memory_space<vmem>>, vector<16x16xf32>
      tpu.vector_store %arg18[%c0_51, %c0_52], %55 {strides = array<i32>} : memref<16x128xf32, #tpu.memory_space<vmem>>, vector<16x16xf32>,
      %c0_53 = arith.constant 0 : index
      %c16 = arith.constant 16 : index
      %89 = vector.load %arg18[%c0_53, %c16] : memref<16x128xf32, #tpu.memory_space<vmem>>, vector<16x8xf32>
      tpu.vector_store %arg18[%c0_53, %c16], %63 {strides = array<i32>} : memref<16x128xf32, #tpu.memory_space<vmem>>, vector<16x8xf32>,
    } else {
    }
    return
  }
  func.func @transform_0(%arg0: i32, %arg1: i32) -> (i32, i32, i32) {
    %c0_i32 = arith.constant 0 : i32
    %c0_i32_0 = arith.constant 0 : i32
    return %arg0, %c0_i32, %arg1 : i32, i32, i32
  }
  func.func @transform_1(%arg0: i32, %arg1: i32) -> (i32, i32) {
    %c0_i32 = arith.constant 0 : i32
    %c0_i32_0 = arith.constant 0 : i32
    return %arg0, %c0_i32 : i32, i32
  }
  func.func @transform_2(%arg0: i32, %arg1: i32) -> (i32, i32) {
    %c0_i32 = arith.constant 0 : i32
    %c0_i32_0 = arith.constant 0 : i32
    return %arg0, %c0_i32 : i32, i32
  }
  func.func @transform_3(%arg0: i32, %arg1: i32) -> (i32, i32) {
    %c0_i32 = arith.constant 0 : i32
    %c0_i32_0 = arith.constant 0 : i32
    %c0_i32_1 = arith.constant 0 : i32
    return %c0_i32, %c0_i32_0 : i32, i32
  }
  func.func @transform_4(%arg0: i32, %arg1: i32) -> (i32, i32) {
    %c0_i32 = arith.constant 0 : i32
    %c0_i32_0 = arith.constant 0 : i32
    %c0_i32_1 = arith.constant 0 : i32
    return %c0_i32, %c0_i32_0 : i32, i32
  }
  func.func @transform_5(%arg0: i32, %arg1: i32) -> (i32, i32) {
    %c0_i32 = arith.constant 0 : i32
    %c0_i32_0 = arith.constant 0 : i32
    %c0_i32_1 = arith.constant 0 : i32
    return %c0_i32, %c0_i32_0 : i32, i32
  }
  func.func @transform_6(%arg0: i32, %arg1: i32) -> (i32, i32) {
    %c0_i32 = arith.constant 0 : i32
    %c0_i32_0 = arith.constant 0 : i32
    %c0_i32_1 = arith.constant 0 : i32
    return %c0_i32, %c0_i32_0 : i32, i32
  }
  func.func @transform_7(%arg0: i32, %arg1: i32) -> (i32, i32) {
    %c0_i32 = arith.constant 0 : i32
    %c0_i32_0 = arith.constant 0 : i32
    %c0_i32_1 = arith.constant 0 : i32
    return %c0_i32, %c0_i32_0 : i32, i32
  }
  func.func @transform_8(%arg0: i32, %arg1: i32) -> (i32, i32) {
    %c0_i32 = arith.constant 0 : i32
    %c0_i32_0 = arith.constant 0 : i32
    %c0_i32_1 = arith.constant 0 : i32
    return %c0_i32, %c0_i32_0 : i32, i32
  }
  func.func @transform_9(%arg0: i32, %arg1: i32) -> (i32, i32) {
    %c0_i32 = arith.constant 0 : i32
    %c0_i32_0 = arith.constant 0 : i32
    %c0_i32_1 = arith.constant 0 : i32
    return %c0_i32, %c0_i32_0 : i32, i32
  }
  func.func @transform_10(%arg0: i32, %arg1: i32) -> (i32, i32) {
    %c0_i32 = arith.constant 0 : i32
    %c0_i32_0 = arith.constant 0 : i32
    %c0_i32_1 = arith.constant 0 : i32
    return %c0_i32, %c0_i32_0 : i32, i32
  }
  func.func @transform_11(%arg0: i32, %arg1: i32) -> (i32, i32) {
    %c0_i32 = arith.constant 0 : i32
    %c0_i32_0 = arith.constant 0 : i32
    %c0_i32_1 = arith.constant 0 : i32
    return %c0_i32, %c0_i32_0 : i32, i32
  }
  func.func @transform_12(%arg0: i32, %arg1: i32) -> (i32, i32) {
    %c0_i32 = arith.constant 0 : i32
    %c0_i32_0 = arith.constant 0 : i32
    %c0_i32_1 = arith.constant 0 : i32
    return %c0_i32, %c0_i32_0 : i32, i32
  }
  func.func @transform_13(%arg0: i32, %arg1: i32) -> (i32, i32) {
    %c0_i32 = arith.constant 0 : i32
    %c0_i32_0 = arith.constant 0 : i32
    %c0_i32_1 = arith.constant 0 : i32
    return %c0_i32, %c0_i32_0 : i32, i32
  }
  func.func @transform_14(%arg0: i32, %arg1: i32) -> (i32, i32) {
    %c0_i32 = arith.constant 0 : i32
    %c0_i32_0 = arith.constant 0 : i32
    %c0_i32_1 = arith.constant 0 : i32
    return %c0_i32, %c0_i32_0 : i32, i32
  }
  func.func @transform_15(%arg0: i32, %arg1: i32) -> (i32, i32) {
    %c0_i32 = arith.constant 0 : i32
    %c0_i32_0 = arith.constant 0 : i32
    return %arg0, %c0_i32 : i32, i32
  }
  func.func @transform_16(%arg0: i32, %arg1: i32) -> (i32, i32) {
    %c0_i32 = arith.constant 0 : i32
    %c0_i32_0 = arith.constant 0 : i32
    return %arg0, %c0_i32 : i32, i32
  }
}

</mosaic_0001>

<llo_original>
// kernel: tpu_custom_call.1
$region0: #{tpu_custom_call.1}
  #allocation0 [shape = 'u32[]', space=smem, size = 0x4, offset = 0x4, fixed_abs, tag = 'smem constant byte address 0x4 - core index']
  #allocation1 [shape = 'u32[144,128]{1,0:T(1,128)}', space=vmem, size = 0x12000, scoped, tag = 'internal scratch']
  #allocation2 [shape = 'f32[16,128]{1,0:T(8,128)}', space=vmem, size = 0x2000, scoped, tag = 'scratch operand']
  #allocation3 [shape = 'f32[16,256]{1,0:T(8,128)}', space=vmem, size = 0x4000, scoped, tag = 'scratch operand']
  %s0 = inlined_call_operand.vmem [shape: f32[16,3,128], index: 0, kind: input, shape index: {}]
  %s1 = inlined_call_operand.vmem [shape: f32[16,16], index: 1, kind: input, shape index: {}]
  %s2 = inlined_call_operand.vmem [shape: f32[16,8], index: 2, kind: input, shape index: {}]
  %s3 = inlined_call_operand.vmem [shape: f32[128,3], index: 3, kind: input, shape index: {}]
  %s4 = inlined_call_operand.vmem [shape: bf16[16,256], index: 4, kind: input, shape index: {}]
  %s5 = inlined_call_operand.vmem [shape: f32[1,256], index: 5, kind: input, shape index: {}]
  %s6 = inlined_call_operand.vmem [shape: bf16[128,128], index: 6, kind: input, shape index: {}]
  %s7 = inlined_call_operand.vmem [shape: f32[1,128], index: 7, kind: input, shape index: {}]
  %s8 = inlined_call_operand.vmem [shape: bf16[128,16], index: 8, kind: input, shape index: {}]
  %s9 = inlined_call_operand.vmem [shape: f32[1,16], index: 9, kind: input, shape index: {}]
  %s10 = inlined_call_operand.vmem [shape: bf16[8,128], index: 10, kind: input, shape index: {}]
  %s11 = inlined_call_operand.vmem [shape: bf16[128,128], index: 11, kind: input, shape index: {}]
  %s12 = inlined_call_operand.vmem [shape: f32[1,128], index: 12, kind: input, shape index: {}]
  %s13 = inlined_call_operand.vmem [shape: bf16[128,384], index: 13, kind: input, shape index: {}]
  %s14 = inlined_call_operand.vmem [shape: f32[1,384], index: 14, kind: input, shape index: {}]
  %s15 = inlined_call_operand.hbm [shape: f32[16,384], index: 15, kind: output, shape index: {0}]
  %s16 = inlined_call_operand.hbm [shape: f32[16,128], index: 16, kind: output, shape index: {1}]
  %17 = xla_tuple %s15, %s16
  %s18 = sld [smem:[#allocation0]]
  $region86: #{tpu_custom_call.1} parent=0
    _
  %s20 = ssub.s32 1, %s18
  %s21 = scalar_select 0, %s20, %s18
  $region1: #{tpu_custom_call.1} parent=0
    #allocation4 [shape = 'u8[24576]{0}', space=vmem, size = 0x6000, scoped, tag = 'output window, operand 0, single buffered']
    #allocation5 [shape = 's32[1]{0}', space=sflag, size = 0x4, scoped, tag = 'scoped memory for tpu_custom_call.1']
    #allocation6 [shape = 'u8[8192]{0}', space=vmem, size = 0x2000, scoped, tag = 'output window, operand 1, single buffered']
    #allocation7 [shape = 's32[1]{0}', space=sflag, size = 0x4, scoped, tag = 'scoped memory for tpu_custom_call.1']
    %22 = vsyncpa [#allocation5], 0
    %23 = vsyncpa [#allocation7], 0
    // Predicated region
    $region2: #{tpu_custom_call.1} parent=1 // pred_check
      _
    $region3: #{tpu_custom_call.1} parent=1 // pred_check_branch
      %25 = sbr.rel (0) target = $region5
    $region4: #{tpu_custom_call.1} parent=1 // pred_region
      _
    $region5: #{tpu_custom_call.1} parent=1 // pred_fallthru
      _
    // Predicated region
    $region6: #{tpu_custom_call.1} parent=1 // pred_check
      _
    $region7: #{tpu_custom_call.1} parent=1 // pred_check_branch
      %27 = sbr.rel (0) target = $region9
    $region8: #{tpu_custom_call.1} parent=1 // pred_region
      _
    $region9: #{tpu_custom_call.1} parent=1 // pred_fallthru
      _
    // Predicated region
    $region10: #{tpu_custom_call.1} parent=1 // pred_check
      _
    $region11: #{tpu_custom_call.1} parent=1 // pred_check_branch
      %29 = sbr.rel (0) target = $region13
    $region12: #{tpu_custom_call.1} parent=1 // pred_region
      _
    $region13: #{tpu_custom_call.1} parent=1 // pred_fallthru
      _
    // Predicated region
    $region14: #{tpu_custom_call.1} parent=1 // pred_check
      _
    $region15: #{tpu_custom_call.1} parent=1 // pred_check_branch
      %31 = sbr.rel (0) target = $region17
    $region16: #{tpu_custom_call.1} parent=1 // pred_region
      _
    $region17: #{tpu_custom_call.1} parent=1 // pred_fallthru
      _
    // Predicated region
    $region18: #{tpu_custom_call.1} parent=1 // pred_check
      _
    $region19: #{tpu_custom_call.1} parent=1 // pred_check_branch
      %33 = sbr.rel (0) target = $region21
    $region20: #{tpu_custom_call.1} parent=1 // pred_region
      _
    $region21: #{tpu_custom_call.1} parent=1 // pred_fallthru
      _
    // Predicated region
    $region22: #{tpu_custom_call.1} parent=1 // pred_check
      _
    $region23: #{tpu_custom_call.1} parent=1 // pred_check_branch
      %35 = sbr.rel (0) target = $region25
    $region24: #{tpu_custom_call.1} parent=1 // pred_region
      _
    $region25: #{tpu_custom_call.1} parent=1 // pred_fallthru
      _
    // Predicated region
    $region26: #{tpu_custom_call.1} parent=1 // pred_check
      _
    $region27: #{tpu_custom_call.1} parent=1 // pred_check_branch
      %37 = sbr.rel (0) target = $region29
    $region28: #{tpu_custom_call.1} parent=1 // pred_region
      _
    $region29: #{tpu_custom_call.1} parent=1 // pred_fallthru
      _
    // Predicated region
    $region30: #{tpu_custom_call.1} parent=1 // pred_check
      _
    $region31: #{tpu_custom_call.1} parent=1 // pred_check_branch
      %39 = sbr.rel (0) target = $region33
    $region32: #{tpu_custom_call.1} parent=1 // pred_region
      _
    $region33: #{tpu_custom_call.1} parent=1 // pred_fallthru
      _
    // Predicated region
    $region34: #{tpu_custom_call.1} parent=1 // pred_check
      _
    $region35: #{tpu_custom_call.1} parent=1 // pred_check_branch
      %41 = sbr.rel (0) target = $region37
    $region36: #{tpu_custom_call.1} parent=1 // pred_region
      _
    $region37: #{tpu_custom_call.1} parent=1 // pred_fallthru
      _
    // Predicated region
    $region38: #{tpu_custom_call.1} parent=1 // pred_check
      _
    $region39: #{tpu_custom_call.1} parent=1 // pred_check_branch
      %43 = sbr.rel (0) target = $region41
    $region40: #{tpu_custom_call.1} parent=1 // pred_region
      _
    $region41: #{tpu_custom_call.1} parent=1 // pred_fallthru
      _
    // Predicated region
    $region42: #{tpu_custom_call.1} parent=1 // pred_check
      _
    $region43: #{tpu_custom_call.1} parent=1 // pred_check_branch
      %45 = sbr.rel (0) target = $region45
    $region44: #{tpu_custom_call.1} parent=1 // pred_region
      _
    $region45: #{tpu_custom_call.1} parent=1 // pred_fallthru
      _
    // Predicated region
    $region46: #{tpu_custom_call.1} parent=1 // pred_check
      _
    $region47: #{tpu_custom_call.1} parent=1 // pred_check_branch
      %47 = sbr.rel (0) target = $region49
    $region48: #{tpu_custom_call.1} parent=1 // pred_region
      _
    $region49: #{tpu_custom_call.1} parent=1 // pred_fallthru
      _
    // Predicated region
    $region50: #{tpu_custom_call.1} parent=1 // pred_check
      _
    $region51: #{tpu_custom_call.1} parent=1 // pred_check_branch
      %49 = sbr.rel (0) target = $region53
    $region52: #{tpu_custom_call.1} parent=1 // pred_region
      _
    $region53: #{tpu_custom_call.1} parent=1 // pred_fallthru
      _
    // Predicated region
    $region54: #{tpu_custom_call.1} parent=1 // pred_check
      _
    $region55: #{tpu_custom_call.1} parent=1 // pred_check_branch
      %51 = sbr.rel (0) target = $region57
    $region56: #{tpu_custom_call.1} parent=1 // pred_region
      _
    $region57: #{tpu_custom_call.1} parent=1 // pred_fallthru
      _
    // Predicated region
    $region58: #{tpu_custom_call.1} parent=1 // pred_check
      _
    $region59: #{tpu_custom_call.1} parent=1 // pred_check_branch
      %53 = sbr.rel (0) target = $region61
    $region60: #{tpu_custom_call.1} parent=1 // pred_region
      _
    $region61: #{tpu_custom_call.1} parent=1 // pred_fallthru
      _
    %p55 = scmp.eq.s32.totalorder 0, 0
    // Predicated region
    $region62: #{tpu_custom_call.1} parent=1 // pred_check
      %p56 = pneg %p55
    $region63: #{tpu_custom_call.1} parent=1 // pred_check_branch
      %58 = sbr.rel (%p56) target = $region65
    $region64: #{tpu_custom_call.1} parent=1 // pred_region
      %59 = vst [vmem:[#allocation2] sm:$0xff] -inf
      %60 = vst [vmem:[#allocation2 + $0x8] sm:$0xff] -inf
      %v61 = vld [vmem:[%s1] sm:$0xff]
      %v62 = vld [vmem:[%s1 + $0x8] sm:$0xff]
      %v63 = vpack.c.bf16 %v62, %v61
      %v64 = vld [vmem:[%s4] sm:$0xff]
      %v65 = vld [vmem:[%s4 + $0x8] sm:$0xff]
      %v66 = vld [vmem:[%s5] sm:$0x3]
      %v68 = vlaneseq
      %v69 = vshrl.u32 %v68, 7
      %v70 = vsub.s32 0, %v69
      %v71 = vrot.slane %v66, %v70
      %v72 = vlaneseq
      %v73 = vshrl.u32 %v72, 7
      %v74 = vsub.s32 1, %v73
      %v75 = vrot.slane %v66, %v74
      %v80 = vunpack.c.l.b16 %v64
      %v81 = vunpack.c.h.b16 %v64
      %v82 = vunpack.c.l.b16 %v65
      %v83 = vunpack.c.h.b16 %v65
      %v84 = vpack.c.b16 %v82, %v80
      %v85 = vpack.c.b16 %v83, %v81
      %vm88 = vcmask 130048
      %v90 = vsel %vm88, %v63, 0
      %92 = vmatprep.subr.bf16.mxu0 %v85
      %93 = vmatpush1.bf16.msra.mxu0 %v84
      %94 = vmatprep.subr.bf16.mxu0 0
      %95 = vmatpush1.bf16.msra.mxu0 0
      %96 = vmatprep.subr.bf16.mxu0 0
      %97 = vmatpush1.bf16.msra.mxu0 0
      %98 = vmatprep.subr.bf16.mxu0 0
      %99 = vmatpush1.bf16.msra.mxu0 0
      %100 = vmatprep.subr.bf16.mxu0 0
      %101 = vmatpush1.bf16.msra.mxu0 0
      %102 = vmatprep.subr.bf16.mxu0 0
      %103 = vmatpush1.bf16.msra.mxu0 0
      %104 = vmatprep.subr.bf16.mxu0 0
      %105 = vmatpush1.bf16.msra.mxu0 0
      %106 = vmatprep.subr.bf16.mxu0 0
      %107 = vmatpush1.bf16.msra.mxu0 0
      %108 = vmatprep.subr.bf16.mxu0 0
      %109 = vmatpush1.bf16.msra.mxu0 0
      %110 = vmatprep.subr.bf16.mxu0 0
      %111 = vmatpush1.bf16.msra.mxu0 0
      %112 = vmatprep.subr.bf16.mxu0 0
      %113 = vmatpush1.bf16.msra.mxu0 0
      %114 = vmatprep.subr.bf16.mxu0 0
      %115 = vmatpush1.bf16.msra.mxu0 0
      %116 = vmatprep.subr.bf16.mxu0 0
      %117 = vmatpush1.bf16.msra.mxu0 0
      %118 = vmatprep.subr.bf16.mxu0 0
      %119 = vmatpush1.bf16.msra.mxu0 0
      %120 = vmatprep.subr.bf16.mxu0 0
      %121 = vmatpush1.bf16.msra.mxu0 0
      %122 = vmatprep.subr.bf16.mxu0 0
      %123 = vmatpush1.bf16.msra.mxu0 0
      %124 = vmatprep.mubr.bf16.mxu0 0
      %125 = vmatmul.mubr.bf16.gmra.mrb[0].mxu0 %v90
      %v126 = vpop.f32.mrb[0].mxu0
      %v127 = vadd.f32 %v71, %v126
      %v128 = vpop.f32.mrb[0].mxu0
      %v129 = vadd.f32 %v75, %v128
      %v130 = vpop.f32.mrb[0].mxu0
      %v131 = vadd.f32 %v71, %v130
      %v132 = vpop.f32.mrb[0].mxu0
      %v133 = vadd.f32 %v75, %v132
      %134 = vdwg.mxu0
      %135 = vst [vmem:[#allocation3] sm:$0xff] %v127
      %136 = vst [vmem:[#allocation3 + $0x8] sm:$0xff] %v129
      %137 = vst [vmem:[#allocation3 + $0x10] sm:$0xff] %v131
      %138 = vst [vmem:[#allocation3 + $0x18] sm:$0xff] %v133
    $region65: #{tpu_custom_call.1} parent=1 // pred_fallthru
      _
    %v139 = vld [vmem:[%s0] sm:$0x7]
    %v140 = vld [vmem:[%s0 + $0x4] sm:$0x7]
    %v141 = vld [vmem:[%s0 + $0x8] sm:$0x7]
    %v142 = vld [vmem:[%s0 + $0xc] sm:$0x7]
    %v143 = vld [vmem:[%s0 + $0x10] sm:$0x7]
    %v144 = vld [vmem:[%s0 + $0x14] sm:$0x7]
    %v145 = vld [vmem:[%s0 + $0x18] sm:$0x7]
    %v146 = vld [vmem:[%s0 + $0x1c] sm:$0x7]
    %v147 = vld [vmem:[%s0 + $0x20] sm:$0x7]
    %v148 = vld [vmem:[%s0 + $0x24] sm:$0x7]
    %v149 = vld [vmem:[%s0 + $0x28] sm:$0x7]
    %v150 = vld [vmem:[%s0 + $0x2c] sm:$0x7]
    %v151 = vld [vmem:[%s0 + $0x30] sm:$0x7]
    %v152 = vld [vmem:[%s0 + $0x34] sm:$0x7]
    %v153 = vld [vmem:[%s0 + $0x38] sm:$0x7]
    %v154 = vld [vmem:[%s0 + $0x3c] sm:$0x7]
    %v155 = vld [vmem:[%s3] sm:$0xff]
    %v156 = vld [vmem:[%s3 + $0x8] sm:$0xff]
    %v157 = vld [vmem:[%s3 + $0x10] sm:$0xff]
    %v158 = vld [vmem:[%s3 + $0x18] sm:$0xff]
    %v159 = vld [vmem:[%s3 + $0x20] sm:$0xff]
    %v160 = vld [vmem:[%s3 + $0x28] sm:$0xff]
    %v161 = vld [vmem:[%s3 + $0x30] sm:$0xff]
    %v162 = vld [vmem:[%s3 + $0x38] sm:$0xff]
    %v163 = vld [vmem:[%s3 + $0x40] sm:$0xff]
    %v164 = vld [vmem:[%s3 + $0x48] sm:$0xff]
    %v165 = vld [vmem:[%s3 + $0x50] sm:$0xff]
    %v166 = vld [vmem:[%s3 + $0x58] sm:$0xff]
    %v167 = vld [vmem:[%s3 + $0x60] sm:$0xff]
    %v168 = vld [vmem:[%s3 + $0x68] sm:$0xff]
    %v169 = vld [vmem:[%s3 + $0x70] sm:$0xff]
    %v170 = vld [vmem:[%s3 + $0x78] sm:$0xff]
    %v171 = vlaneseq
    %v172 = vshrl.u32 %v171, 7
    %v173 = vsub.s32 0, %v172
    %v174 = vrot.slane %v139, %v173
    %v175 = vlaneseq
    %v176 = vshrl.u32 %v175, 7
    %v177 = vsub.s32 0, %v176
    %v178 = vrot.slane %v140, %v177
    %v179 = vlaneseq
    %v180 = vshrl.u32 %v179, 7
    %v181 = vsub.s32 0, %v180
    %v182 = vrot.slane %v141, %v181
    %v183 = vlaneseq
    %v184 = vshrl.u32 %v183, 7
    %v185 = vsub.s32 0, %v184
    %v186 = vrot.slane %v142, %v185
    %v187 = vlaneseq
    %v188 = vshrl.u32 %v187, 7
    %v189 = vsub.s32 0, %v188
    %v190 = vrot.slane %v143, %v189
    %v191 = vlaneseq
    %v192 = vshrl.u32 %v191, 7
    %v193 = vsub.s32 0, %v192
    %v194 = vrot.slane %v144, %v193
    %v195 = vlaneseq
    %v196 = vshrl.u32 %v195, 7
    %v197 = vsub.s32 0, %v196
    %v198 = vrot.slane %v145, %v197
    %v199 = vlaneseq
    %v200 = vshrl.u32 %v199, 7
    %v201 = vsub.s32 0, %v200
    %v202 = vrot.slane %v146, %v201
    %v203 = vlaneseq
    %v204 = vshrl.u32 %v203, 7
    %v205 = vsub.s32 0, %v204
    %v206 = vrot.slane %v147, %v205
    %v207 = vlaneseq
    %v208 = vshrl.u32 %v207, 7
    %v209 = vsub.s32 0, %v208
    %v210 = vrot.slane %v148, %v209
    %v211 = vlaneseq
    %v212 = vshrl.u32 %v211, 7
    %v213 = vsub.s32 0, %v212
    %v214 = vrot.slane %v149, %v213
    %v215 = vlaneseq
    %v216 = vshrl.u32 %v215, 7
    %v217 = vsub.s32 0, %v216
    %v218 = vrot.slane %v150, %v217
    %v219 = vlaneseq
    %v220 = vshrl.u32 %v219, 7
    %v221 = vsub.s32 0, %v220
    %v222 = vrot.slane %v151, %v221
    %v223 = vlaneseq
    %v224 = vshrl.u32 %v223, 7
    %v225 = vsub.s32 0, %v224
    %v226 = vrot.slane %v152, %v225
    %v227 = vlaneseq
    %v228 = vshrl.u32 %v227, 7
    %v229 = vsub.s32 0, %v228
    %v230 = vrot.slane %v153, %v229
    %v231 = vlaneseq
    %v232 = vshrl.u32 %v231, 7
    %v233 = vsub.s32 0, %v232
    %v234 = vrot.slane %v154, %v233
    %236 = vset.pattern.permute.xlu0 0
    %237 = vperm.xlu0 %236, %v155
    %v238 = vpop.permute.xlu0 %237
    %241 = vset.pattern.permute.xlu0 0
    %242 = vperm.xlu0 %241, %v156
    %v243 = vpop.permute.xlu0 %242
    %246 = vset.pattern.permute.xlu0 0
    %247 = vperm.xlu0 %246, %v157
    %v248 = vpop.permute.xlu0 %247
    %251 = vset.pattern.permute.xlu0 0
    %252 = vperm.xlu0 %251, %v158
    %v253 = vpop.permute.xlu0 %252
    %256 = vset.pattern.permute.xlu0 0
    %257 = vperm.xlu0 %256, %v159
    %v258 = vpop.permute.xlu0 %257
    %261 = vset.pattern.permute.xlu0 0
    %262 = vperm.xlu0 %261, %v160
    %v263 = vpop.permute.xlu0 %262
    %266 = vset.pattern.permute.xlu0 0
    %267 = vperm.xlu0 %266, %v161
    %v268 = vpop.permute.xlu0 %267
    %271 = vset.pattern.permute.xlu0 0
    %272 = vperm.xlu0 %271, %v162
    %v273 = vpop.permute.xlu0 %272
    %276 = vset.pattern.permute.xlu0 0
    %277 = vperm.xlu0 %276, %v163
    %v278 = vpop.permute.xlu0 %277
    %281 = vset.pattern.permute.xlu0 0
    %282 = vperm.xlu0 %281, %v164
    %v283 = vpop.permute.xlu0 %282
    %286 = vset.pattern.permute.xlu0 0
    %287 = vperm.xlu0 %286, %v165
    %v288 = vpop.permute.xlu0 %287
    %291 = vset.pattern.permute.xlu0 0
    %292 = vperm.xlu0 %291, %v166
    %v293 = vpop.permute.xlu0 %292
    %296 = vset.pattern.permute.xlu0 0
    %297 = vperm.xlu0 %296, %v167
    %v298 = vpop.permute.xlu0 %297
    %301 = vset.pattern.permute.xlu0 0
    %302 = vperm.xlu0 %301, %v168
    %v303 = vpop.permute.xlu0 %302
    %306 = vset.pattern.permute.xlu0 0
    %307 = vperm.xlu0 %306, %v169
    %v308 = vpop.permute.xlu0 %307
    %311 = vset.pattern.permute.xlu0 0
    %312 = vperm.xlu0 %311, %v170
    %v313 = vpop.permute.xlu0 %312
    %v315 = vmul.f32 %v174, %v238
    %v316 = vmul.f32 %v174, %v243
    %v317 = vmul.f32 %v174, %v248
    %v318 = vmul.f32 %v174, %v253
    %v319 = vmul.f32 %v174, %v258
    %v320 = vmul.f32 %v174, %v263
    %v321 = vmul.f32 %v174, %v268
    %v322 = vmul.f32 %v174, %v273
    %v323 = vmul.f32 %v174, %v278
    %v324 = vmul.f32 %v174, %v283
    %v325 = vmul.f32 %v174, %v288
    %v326 = vmul.f32 %v174, %v293
    %v327 = vmul.f32 %v174, %v298
    %v328 = vmul.f32 %v174, %v303
    %v329 = vmul.f32 %v174, %v308
    %v330 = vmul.f32 %v174, %v313
    %v331 = vmul.f32 %v178, %v238
    %v332 = vmul.f32 %v178, %v243
    %v333 = vmul.f32 %v178, %v248
    %v334 = vmul.f32 %v178, %v253
    %v335 = vmul.f32 %v178, %v258
    %v336 = vmul.f32 %v178, %v263
    %v337 = vmul.f32 %v178, %v268
    %v338 = vmul.f32 %v178, %v273
    %v339 = vmul.f32 %v178, %v278
    %v340 = vmul.f32 %v178, %v283
    %v341 = vmul.f32 %v178, %v288
    %v342 = vmul.f32 %v178, %v293
    %v343 = vmul.f32 %v178, %v298
    %v344 = vmul.f32 %v178, %v303
    %v345 = vmul.f32 %v178, %v308
    %v346 = vmul.f32 %v178, %v313
    %v347 = vmul.f32 %v182, %v238
    %v348 = vmul.f32 %v182, %v243
    %v349 = vmul.f32 %v182, %v248
    %v350 = vmul.f32 %v182, %v253
    %v351 = vmul.f32 %v182, %v258
    %v352 = vmul.f32 %v182, %v263
    %v353 = vmul.f32 %v182, %v268
    %v354 = vmul.f32 %v182, %v273
    %v355 = vmul.f32 %v182, %v278
    %v356 = vmul.f32 %v182, %v283
    %v357 = vmul.f32 %v182, %v288
    %v358 = vmul.f32 %v182, %v293
    %v359 = vmul.f32 %v182, %v298
    %v360 = vmul.f32 %v182, %v303
    %v361 = vmul.f32 %v182, %v308
    %v362 = vmul.f32 %v182, %v313
    %v363 = vmul.f32 %v186, %v238
    %v364 = vmul.f32 %v186, %v243
    %v365 = vmul.f32 %v186, %v248
    %v366 = vmul.f32 %v186, %v253
    %v367 = vmul.f32 %v186, %v258
    %v368 = vmul.f32 %v186, %v263
    %v369 = vmul.f32 %v186, %v268
    %v370 = vmul.f32 %v186, %v273
    %v371 = vmul.f32 %v186, %v278
    %v372 = vmul.f32 %v186, %v283
    %v373 = vmul.f32 %v186, %v288
    %v374 = vmul.f32 %v186, %v293
    %v375 = vmul.f32 %v186, %v298
    %v376 = vmul.f32 %v186, %v303
    %v377 = vmul.f32 %v186, %v308
    %v378 = vmul.f32 %v186, %v313
    %v379 = vmul.f32 %v190, %v238
    %v380 = vmul.f32 %v190, %v243
    %v381 = vmul.f32 %v190, %v248
    %v382 = vmul.f32 %v190, %v253
    %v383 = vmul.f32 %v190, %v258
    %v384 = vmul.f32 %v190, %v263
    %v385 = vmul.f32 %v190, %v268
    %v386 = vmul.f32 %v190, %v273
    %v387 = vmul.f32 %v190, %v278
    %v388 = vmul.f32 %v190, %v283
    %v389 = vmul.f32 %v190, %v288
    %v390 = vmul.f32 %v190, %v293
    %v391 = vmul.f32 %v190, %v298
    %v392 = vmul.f32 %v190, %v303
    %v393 = vmul.f32 %v190, %v308
    %v394 = vmul.f32 %v190, %v313
    %v395 = vmul.f32 %v194, %v238
    %v396 = vmul.f32 %v194, %v243
    %v397 = vmul.f32 %v194, %v248
    %v398 = vmul.f32 %v194, %v253
    %v399 = vmul.f32 %v194, %v258
    %v400 = vmul.f32 %v194, %v263
    %v401 = vmul.f32 %v194, %v268
    %v402 = vmul.f32 %v194, %v273
    %v403 = vmul.f32 %v194, %v278
    %v404 = vmul.f32 %v194, %v283
    %v405 = vmul.f32 %v194, %v288
    %v406 = vmul.f32 %v194, %v293
    %v407 = vmul.f32 %v194, %v298
    %v408 = vmul.f32 %v194, %v303
    %v409 = vmul.f32 %v194, %v308
    %v410 = vmul.f32 %v194, %v313
    %v411 = vmul.f32 %v198, %v238
    %v412 = vmul.f32 %v198, %v243
    %v413 = vmul.f32 %v198, %v248
    %v414 = vmul.f32 %v198, %v253
    %v415 = vmul.f32 %v198, %v258
    %v416 = vmul.f32 %v198, %v263
    %v417 = vmul.f32 %v198, %v268
    %v418 = vmul.f32 %v198, %v273
    %v419 = vmul.f32 %v198, %v278
    %v420 = vmul.f32 %v198, %v283
    %v421 = vmul.f32 %v198, %v288
    %v422 = vmul.f32 %v198, %v293
    %v423 = vmul.f32 %v198, %v298
    %v424 = vmul.f32 %v198, %v303
    %v425 = vmul.f32 %v198, %v308
    %v426 = vmul.f32 %v198, %v313
    %v427 = vmul.f32 %v202, %v238
    %v428 = vmul.f32 %v202, %v243
    %v429 = vmul.f32 %v202, %v248
    %v430 = vmul.f32 %v202, %v253
    %v431 = vmul.f32 %v202, %v258
    %v432 = vmul.f32 %v202, %v263
    %v433 = vmul.f32 %v202, %v268
    %v434 = vmul.f32 %v202, %v273
    %v435 = vmul.f32 %v202, %v278
    %v436 = vmul.f32 %v202, %v283
    %v437 = vmul.f32 %v202, %v288
    %v438 = vmul.f32 %v202, %v293
    %v439 = vmul.f32 %v202, %v298
    %v440 = vmul.f32 %v202, %v303
    %v441 = vmul.f32 %v202, %v308
    %v442 = vmul.f32 %v202, %v313
    %v443 = vmul.f32 %v206, %v238
    %v444 = vmul.f32 %v206, %v243
    %v445 = vmul.f32 %v206, %v248
    %v446 = vmul.f32 %v206, %v253
    %v447 = vmul.f32 %v206, %v258
    %v448 = vmul.f32 %v206, %v263
    %v449 = vmul.f32 %v206, %v268
    %v450 = vmul.f32 %v206, %v273
    %v451 = vmul.f32 %v206, %v278
    %v452 = vmul.f32 %v206, %v283
    %v453 = vmul.f32 %v206, %v288
    %v454 = vmul.f32 %v206, %v293
    %v455 = vmul.f32 %v206, %v298
    %v456 = vmul.f32 %v206, %v303
    %v457 = vmul.f32 %v206, %v308
    %v458 = vmul.f32 %v206, %v313
    %v459 = vmul.f32 %v210, %v238
    %v460 = vmul.f32 %v210, %v243
    %v461 = vmul.f32 %v210, %v248
    %v462 = vmul.f32 %v210, %v253
    %v463 = vmul.f32 %v210, %v258
    %v464 = vmul.f32 %v210, %v263
    %v465 = vmul.f32 %v210, %v268
    %v466 = vmul.f32 %v210, %v273
    %v467 = vmul.f32 %v210, %v278
    %v468 = vmul.f32 %v210, %v283
    %v469 = vmul.f32 %v210, %v288
    %v470 = vmul.f32 %v210, %v293
    %v471 = vmul.f32 %v210, %v298
    %v472 = vmul.f32 %v210, %v303
    %v473 = vmul.f32 %v210, %v308
    %v474 = vmul.f32 %v210, %v313
    %v475 = vmul.f32 %v214, %v238
    %v476 = vmul.f32 %v214, %v243
    %v477 = vmul.f32 %v214, %v248
    %v478 = vmul.f32 %v214, %v253
    %v479 = vmul.f32 %v214, %v258
    %v480 = vmul.f32 %v214, %v263
    %v481 = vmul.f32 %v214, %v268
    %v482 = vmul.f32 %v214, %v273
    %v483 = vmul.f32 %v214, %v278
    %v484 = vmul.f32 %v214, %v283
    %v485 = vmul.f32 %v214, %v288
    %v486 = vmul.f32 %v214, %v293
    %v487 = vmul.f32 %v214, %v298
    %v488 = vmul.f32 %v214, %v303
    %v489 = vmul.f32 %v214, %v308
    %v490 = vmul.f32 %v214, %v313
    %v491 = vmul.f32 %v218, %v238
    %v492 = vmul.f32 %v218, %v243
    %v493 = vmul.f32 %v218, %v248
    %v494 = vmul.f32 %v218, %v253
    %v495 = vmul.f32 %v218, %v258
    %v496 = vmul.f32 %v218, %v263
    %v497 = vmul.f32 %v218, %v268
    %v498 = vmul.f32 %v218, %v273
    %v499 = vmul.f32 %v218, %v278
    %v500 = vmul.f32 %v218, %v283
    %v501 = vmul.f32 %v218, %v288
    %v502 = vmul.f32 %v218, %v293
    %v503 = vmul.f32 %v218, %v298
    %v504 = vmul.f32 %v218, %v303
    %v505 = vmul.f32 %v218, %v308
    %v506 = vmul.f32 %v218, %v313
    %v507 = vmul.f32 %v222, %v238
    %v508 = vmul.f32 %v222, %v243
    %v509 = vmul.f32 %v222, %v248
    %v510 = vmul.f32 %v222, %v253
    %v511 = vmul.f32 %v222, %v258
    %v512 = vmul.f32 %v222, %v263
    %v513 = vmul.f32 %v222, %v268
    %v514 = vmul.f32 %v222, %v273
    %v515 = vmul.f32 %v222, %v278
    %v516 = vmul.f32 %v222, %v283
    %v517 = vmul.f32 %v222, %v288
    %v518 = vmul.f32 %v222, %v293
    %v519 = vmul.f32 %v222, %v298
    %v520 = vmul.f32 %v222, %v303
    %v521 = vmul.f32 %v222, %v308
    %v522 = vmul.f32 %v222, %v313
    %v523 = vmul.f32 %v226, %v238
    %v524 = vmul.f32 %v226, %v243
    %v525 = vmul.f32 %v226, %v248
    %v526 = vmul.f32 %v226, %v253
    %v527 = vmul.f32 %v226, %v258
    %v528 = vmul.f32 %v226, %v263
    %v529 = vmul.f32 %v226, %v268
    %v530 = vmul.f32 %v226, %v273
    %v531 = vmul.f32 %v226, %v278
    %v532 = vmul.f32 %v226, %v283
    %v533 = vmul.f32 %v226, %v288
    %v534 = vmul.f32 %v226, %v293
    %v535 = vmul.f32 %v226, %v298
    %v536 = vmul.f32 %v226, %v303
    %v537 = vmul.f32 %v226, %v308
    %v538 = vmul.f32 %v226, %v313
    %v539 = vmul.f32 %v230, %v238
    %v540 = vmul.f32 %v230, %v243
    %v541 = vmul.f32 %v230, %v248
    %v542 = vmul.f32 %v230, %v253
    %v543 = vmul.f32 %v230, %v258
    %v544 = vmul.f32 %v230, %v263
    %v545 = vmul.f32 %v230, %v268
    %v546 = vmul.f32 %v230, %v273
    %v547 = vmul.f32 %v230, %v278
    %v548 = vmul.f32 %v230, %v283
    %v549 = vmul.f32 %v230, %v288
    %v550 = vmul.f32 %v230, %v293
    %v551 = vmul.f32 %v230, %v298
    %v552 = vmul.f32 %v230, %v303
    %v553 = vmul.f32 %v230, %v308
    %v554 = vmul.f32 %v230, %v313
    %v555 = vmul.f32 %v234, %v238
    %v556 = vmul.f32 %v234, %v243
    %v557 = vmul.f32 %v234, %v248
    %v558 = vmul.f32 %v234, %v253
    %v559 = vmul.f32 %v234, %v258
    %v560 = vmul.f32 %v234, %v263
    %v561 = vmul.f32 %v234, %v268
    %v562 = vmul.f32 %v234, %v273
    %v563 = vmul.f32 %v234, %v278
    %v564 = vmul.f32 %v234, %v283
    %v565 = vmul.f32 %v234, %v288
    %v566 = vmul.f32 %v234, %v293
    %v567 = vmul.f32 %v234, %v298
    %v568 = vmul.f32 %v234, %v303
    %v569 = vmul.f32 %v234, %v308
    %v570 = vmul.f32 %v234, %v313
    %v571 = vlaneseq
    %v572 = vshrl.u32 %v571, 7
    %v573 = vsub.s32 1, %v572
    %v574 = vrot.slane %v139, %v573
    %v575 = vlaneseq
    %v576 = vshrl.u32 %v575, 7
    %v577 = vsub.s32 1, %v576
    %v578 = vrot.slane %v140, %v577
    %v579 = vlaneseq
    %v580 = vshrl.u32 %v579, 7
    %v581 = vsub.s32 1, %v580
    %v582 = vrot.slane %v141, %v581
    %v583 = vlaneseq
    %v584 = vshrl.u32 %v583, 7
    %v585 = vsub.s32 1, %v584
    %v586 = vrot.slane %v142, %v585
    %v587 = vlaneseq
    %v588 = vshrl.u32 %v587, 7
    %v589 = vsub.s32 1, %v588
    %v590 = vrot.slane %v143, %v589
    %v591 = vlaneseq
    %v592 = vshrl.u32 %v591, 7
    %v593 = vsub.s32 1, %v592
    %v594 = vrot.slane %v144, %v593
    %v595 = vlaneseq
    %v596 = vshrl.u32 %v595, 7
    %v597 = vsub.s32 1, %v596
    %v598 = vrot.slane %v145, %v597
    %v599 = vlaneseq
    %v600 = vshrl.u32 %v599, 7
    %v601 = vsub.s32 1, %v600
    %v602 = vrot.slane %v146, %v601
    %v603 = vlaneseq
    %v604 = vshrl.u32 %v603, 7
    %v605 = vsub.s32 1, %v604
    %v606 = vrot.slane %v147, %v605
    %v607 = vlaneseq
    %v608 = vshrl.u32 %v607, 7
    %v609 = vsub.s32 1, %v608
    %v610 = vrot.slane %v148, %v609
    %v611 = vlaneseq
    %v612 = vshrl.u32 %v611, 7
    %v613 = vsub.s32 1, %v612
    %v614 = vrot.slane %v149, %v613
    %v615 = vlaneseq
    %v616 = vshrl.u32 %v615, 7
    %v617 = vsub.s32 1, %v616
    %v618 = vrot.slane %v150, %v617
    %v619 = vlaneseq
    %v620 = vshrl.u32 %v619, 7
    %v621 = vsub.s32 1, %v620
    %v622 = vrot.slane %v151, %v621
    %v623 = vlaneseq
    %v624 = vshrl.u32 %v623, 7
    %v625 = vsub.s32 1, %v624
    %v626 = vrot.slane %v152, %v625
    %v627 = vlaneseq
    %v628 = vshrl.u32 %v627, 7
    %v629 = vsub.s32 1, %v628
    %v630 = vrot.slane %v153, %v629
    %v631 = vlaneseq
    %v632 = vshrl.u32 %v631, 7
    %v633 = vsub.s32 1, %v632
    %v634 = vrot.slane %v154, %v633
    %635 = vset.pattern.permute.xlu0 1
    %636 = vperm.xlu0 %635, %v155
    %v637 = vpop.permute.xlu0 %636
    %639 = vset.pattern.permute.xlu0 1
    %640 = vperm.xlu0 %639, %v156
    %v641 = vpop.permute.xlu0 %640
    %643 = vset.pattern.permute.xlu0 1
    %644 = vperm.xlu0 %643, %v157
    %v645 = vpop.permute.xlu0 %644
    %647 = vset.pattern.permute.xlu0 1
    %648 = vperm.xlu0 %647, %v158
    %v649 = vpop.permute.xlu0 %648
    %651 = vset.pattern.permute.xlu0 1
    %652 = vperm.xlu0 %651, %v159
    %v653 = vpop.permute.xlu0 %652
    %655 = vset.pattern.permute.xlu0 1
    %656 = vperm.xlu0 %655, %v160
    %v657 = vpop.permute.xlu0 %656
    %659 = vset.pattern.permute.xlu0 1
    %660 = vperm.xlu0 %659, %v161
    %v661 = vpop.permute.xlu0 %660
    %663 = vset.pattern.permute.xlu0 1
    %664 = vperm.xlu0 %663, %v162
    %v665 = vpop.permute.xlu0 %664
    %667 = vset.pattern.permute.xlu0 1
    %668 = vperm.xlu0 %667, %v163
    %v669 = vpop.permute.xlu0 %668
    %671 = vset.pattern.permute.xlu0 1
    %672 = vperm.xlu0 %671, %v164
    %v673 = vpop.permute.xlu0 %672
    %675 = vset.pattern.permute.xlu0 1
    %676 = vperm.xlu0 %675, %v165
    %v677 = vpop.permute.xlu0 %676
    %679 = vset.pattern.permute.xlu0 1
    %680 = vperm.xlu0 %679, %v166
    %v681 = vpop.permute.xlu0 %680
    %683 = vset.pattern.permute.xlu0 1
    %684 = vperm.xlu0 %683, %v167
    %v685 = vpop.permute.xlu0 %684
    %687 = vset.pattern.permute.xlu0 1
    %688 = vperm.xlu0 %687, %v168
    %v689 = vpop.permute.xlu0 %688
    %691 = vset.pattern.permute.xlu0 1
    %692 = vperm.xlu0 %691, %v169
    %v693 = vpop.permute.xlu0 %692
    %695 = vset.pattern.permute.xlu0 1
    %696 = vperm.xlu0 %695, %v170
    %v697 = vpop.permute.xlu0 %696
    %v699 = vmul.f32 %v574, %v637
    %v700 = vmul.f32 %v574, %v641
    %v701 = vmul.f32 %v574, %v645
    %v702 = vmul.f32 %v574, %v649
    %v703 = vmul.f32 %v574, %v653
    %v704 = vmul.f32 %v574, %v657
    %v705 = vmul.f32 %v574, %v661
    %v706 = vmul.f32 %v574, %v665
    %v707 = vmul.f32 %v574, %v669
    %v708 = vmul.f32 %v574, %v673
    %v709 = vmul.f32 %v574, %v677
    %v710 = vmul.f32 %v574, %v681
    %v711 = vmul.f32 %v574, %v685
    %v712 = vmul.f32 %v574, %v689
    %v713 = vmul.f32 %v574, %v693
    %v714 = vmul.f32 %v574, %v697
    %v715 = vmul.f32 %v578, %v637
    %v716 = vmul.f32 %v578, %v641
    %v717 = vmul.f32 %v578, %v645
    %v718 = vmul.f32 %v578, %v649
    %v719 = vmul.f32 %v578, %v653
    %v720 = vmul.f32 %v578, %v657
    %v721 = vmul.f32 %v578, %v661
    %v722 = vmul.f32 %v578, %v665
    %v723 = vmul.f32 %v578, %v669
    %v724 = vmul.f32 %v578, %v673
    %v725 = vmul.f32 %v578, %v677
    %v726 = vmul.f32 %v578, %v681
    %v727 = vmul.f32 %v578, %v685
    %v728 = vmul.f32 %v578, %v689
    %v729 = vmul.f32 %v578, %v693
    %v730 = vmul.f32 %v578, %v697
    %v731 = vmul.f32 %v582, %v637
    %v732 = vmul.f32 %v582, %v641
    %v733 = vmul.f32 %v582, %v645
    %v734 = vmul.f32 %v582, %v649
    %v735 = vmul.f32 %v582, %v653
    %v736 = vmul.f32 %v582, %v657
    %v737 = vmul.f32 %v582, %v661
    %v738 = vmul.f32 %v582, %v665
    %v739 = vmul.f32 %v582, %v669
    %v740 = vmul.f32 %v582, %v673
    %v741 = vmul.f32 %v582, %v677
    %v742 = vmul.f32 %v582, %v681
    %v743 = vmul.f32 %v582, %v685
    %v744 = vmul.f32 %v582, %v689
    %v745 = vmul.f32 %v582, %v693
    %v746 = vmul.f32 %v582, %v697
    %v747 = vmul.f32 %v586, %v637
    %v748 = vmul.f32 %v586, %v641
    %v749 = vmul.f32 %v586, %v645
    %v750 = vmul.f32 %v586, %v649
    %v751 = vmul.f32 %v586, %v653
    %v752 = vmul.f32 %v586, %v657
    %v753 = vmul.f32 %v586, %v661
    %v754 = vmul.f32 %v586, %v665
    %v755 = vmul.f32 %v586, %v669
    %v756 = vmul.f32 %v586, %v673
    %v757 = vmul.f32 %v586, %v677
    %v758 = vmul.f32 %v586, %v681
    %v759 = vmul.f32 %v586, %v685
    %v760 = vmul.f32 %v586, %v689
    %v761 = vmul.f32 %v586, %v693
    %v762 = vmul.f32 %v586, %v697
    %v763 = vmul.f32 %v590, %v637
    %v764 = vmul.f32 %v590, %v641
    %v765 = vmul.f32 %v590, %v645
    %v766 = vmul.f32 %v590, %v649
    %v767 = vmul.f32 %v590, %v653
    %v768 = vmul.f32 %v590, %v657
    %v769 = vmul.f32 %v590, %v661
    %v770 = vmul.f32 %v590, %v665
    %v771 = vmul.f32 %v590, %v669
    %v772 = vmul.f32 %v590, %v673
    %v773 = vmul.f32 %v590, %v677
    %v774 = vmul.f32 %v590, %v681
    %v775 = vmul.f32 %v590, %v685
    %v776 = vmul.f32 %v590, %v689
    %v777 = vmul.f32 %v590, %v693
    %v778 = vmul.f32 %v590, %v697
    %v779 = vmul.f32 %v594, %v637
    %v780 = vmul.f32 %v594, %v641
    %v781 = vmul.f32 %v594, %v645
    %v782 = vmul.f32 %v594, %v649
    %v783 = vmul.f32 %v594, %v653
    %v784 = vmul.f32 %v594, %v657
    %v785 = vmul.f32 %v594, %v661
    %v786 = vmul.f32 %v594, %v665
    %v787 = vmul.f32 %v594, %v669
    %v788 = vmul.f32 %v594, %v673
    %v789 = vmul.f32 %v594, %v677
    %v790 = vmul.f32 %v594, %v681
    %v791 = vmul.f32 %v594, %v685
    %v792 = vmul.f32 %v594, %v689
    %v793 = vmul.f32 %v594, %v693
    %v794 = vmul.f32 %v594, %v697
    %v795 = vmul.f32 %v598, %v637
    %v796 = vmul.f32 %v598, %v641
    %v797 = vmul.f32 %v598, %v645
    %v798 = vmul.f32 %v598, %v649
    %v799 = vmul.f32 %v598, %v653
    %v800 = vmul.f32 %v598, %v657
    %v801 = vmul.f32 %v598, %v661
    %v802 = vmul.f32 %v598, %v665
    %v803 = vmul.f32 %v598, %v669
    %v804 = vmul.f32 %v598, %v673
    %v805 = vmul.f32 %v598, %v677
    %v806 = vmul.f32 %v598, %v681
    %v807 = vmul.f32 %v598, %v685
    %v808 = vmul.f32 %v598, %v689
    %v809 = vmul.f32 %v598, %v693
    %v810 = vmul.f32 %v598, %v697
    %v811 = vmul.f32 %v602, %v637
    %v812 = vmul.f32 %v602, %v641
    %v813 = vmul.f32 %v602, %v645
    %v814 = vmul.f32 %v602, %v649
    %v815 = vmul.f32 %v602, %v653
    %v816 = vmul.f32 %v602, %v657
    %v817 = vmul.f32 %v602, %v661
    %v818 = vmul.f32 %v602, %v665
    %v819 = vmul.f32 %v602, %v669
    %v820 = vmul.f32 %v602, %v673
    %v821 = vmul.f32 %v602, %v677
    %v822 = vmul.f32 %v602, %v681
    %v823 = vmul.f32 %v602, %v685
    %v824 = vmul.f32 %v602, %v689
    %v825 = vmul.f32 %v602, %v693
    %v826 = vmul.f32 %v602, %v697
    %v827 = vmul.f32 %v606, %v637
    %v828 = vmul.f32 %v606, %v641
    %v829 = vmul.f32 %v606, %v645
    %v830 = vmul.f32 %v606, %v649
    %v831 = vmul.f32 %v606, %v653
    %v832 = vmul.f32 %v606, %v657
    %v833 = vmul.f32 %v606, %v661
    %v834 = vmul.f32 %v606, %v665
    %v835 = vmul.f32 %v606, %v669
    %v836 = vmul.f32 %v606, %v673
    %v837 = vmul.f32 %v606, %v677
    %v838 = vmul.f32 %v606, %v681
    %v839 = vmul.f32 %v606, %v685
    %v840 = vmul.f32 %v606, %v689
    %v841 = vmul.f32 %v606, %v693
    %v842 = vmul.f32 %v606, %v697
    %v843 = vmul.f32 %v610, %v637
    %v844 = vmul.f32 %v610, %v641
    %v845 = vmul.f32 %v610, %v645
    %v846 = vmul.f32 %v610, %v649
    %v847 = vmul.f32 %v610, %v653
    %v848 = vmul.f32 %v610, %v657
    %v849 = vmul.f32 %v610, %v661
    %v850 = vmul.f32 %v610, %v665
    %v851 = vmul.f32 %v610, %v669
    %v852 = vmul.f32 %v610, %v673
    %v853 = vmul.f32 %v610, %v677
    %v854 = vmul.f32 %v610, %v681
    %v855 = vmul.f32 %v610, %v685
    %v856 = vmul.f32 %v610, %v689
    %v857 = vmul.f32 %v610, %v693
    %v858 = vmul.f32 %v610, %v697
    %v859 = vmul.f32 %v614, %v637
    %v860 = vmul.f32 %v614, %v641
    %v861 = vmul.f32 %v614, %v645
    %v862 = vmul.f32 %v614, %v649
    %v863 = vmul.f32 %v614, %v653
    %v864 = vmul.f32 %v614, %v657
    %v865 = vmul.f32 %v614, %v661
    %v866 = vmul.f32 %v614, %v665
    %v867 = vmul.f32 %v614, %v669
    %v868 = vmul.f32 %v614, %v673
    %v869 = vmul.f32 %v614, %v677
    %v870 = vmul.f32 %v614, %v681
    %v871 = vmul.f32 %v614, %v685
    %v872 = vmul.f32 %v614, %v689
    %v873 = vmul.f32 %v614, %v693
    %v874 = vmul.f32 %v614, %v697
    %v875 = vmul.f32 %v618, %v637
    %v876 = vmul.f32 %v618, %v641
    %v877 = vmul.f32 %v618, %v645
    %v878 = vmul.f32 %v618, %v649
    %v879 = vmul.f32 %v618, %v653
    %v880 = vmul.f32 %v618, %v657
    %v881 = vmul.f32 %v618, %v661
    %v882 = vmul.f32 %v618, %v665
    %v883 = vmul.f32 %v618, %v669
    %v884 = vmul.f32 %v618, %v673
    %v885 = vmul.f32 %v618, %v677
    %v886 = vmul.f32 %v618, %v681
    %v887 = vmul.f32 %v618, %v685
    %v888 = vmul.f32 %v618, %v689
    %v889 = vmul.f32 %v618, %v693
    %v890 = vmul.f32 %v618, %v697
    %v891 = vmul.f32 %v622, %v637
    %v892 = vmul.f32 %v622, %v641
    %v893 = vmul.f32 %v622, %v645
    %v894 = vmul.f32 %v622, %v649
    %v895 = vmul.f32 %v622, %v653
    %v896 = vmul.f32 %v622, %v657
    %v897 = vmul.f32 %v622, %v661
    %v898 = vmul.f32 %v622, %v665
    %v899 = vmul.f32 %v622, %v669
    %v900 = vmul.f32 %v622, %v673
    %v901 = vmul.f32 %v622, %v677
    %v902 = vmul.f32 %v622, %v681
    %v903 = vmul.f32 %v622, %v685
    %v904 = vmul.f32 %v622, %v689
    %v905 = vmul.f32 %v622, %v693
    %v906 = vmul.f32 %v622, %v697
    %v907 = vmul.f32 %v626, %v637
    %v908 = vmul.f32 %v626, %v641
    %v909 = vmul.f32 %v626, %v645
    %v910 = vmul.f32 %v626, %v649
    %v911 = vmul.f32 %v626, %v653
    %v912 = vmul.f32 %v626, %v657
    %v913 = vmul.f32 %v626, %v661
    %v914 = vmul.f32 %v626, %v665
    %v915 = vmul.f32 %v626, %v669
    %v916 = vmul.f32 %v626, %v673
    %v917 = vmul.f32 %v626, %v677
    %v918 = vmul.f32 %v626, %v681
    %v919 = vmul.f32 %v626, %v685
    %v920 = vmul.f32 %v626, %v689
    %v921 = vmul.f32 %v626, %v693
    %v922 = vmul.f32 %v626, %v697
    %v923 = vmul.f32 %v630, %v637
    %v924 = vmul.f32 %v630, %v641
    %v925 = vmul.f32 %v630, %v645
    %v926 = vmul.f32 %v630, %v649
    %v927 = vmul.f32 %v630, %v653
    %v928 = vmul.f32 %v630, %v657
    %v929 = vmul.f32 %v630, %v661
    %v930 = vmul.f32 %v630, %v665
    %v931 = vmul.f32 %v630, %v669
    %v932 = vmul.f32 %v630, %v673
    %v933 = vmul.f32 %v630, %v677
    %v934 = vmul.f32 %v630, %v681
    %v935 = vmul.f32 %v630, %v685
    %v936 = vmul.f32 %v630, %v689
    %v937 = vmul.f32 %v630, %v693
    %v938 = vmul.f32 %v630, %v697
    %v939 = vmul.f32 %v634, %v637
    %v940 = vmul.f32 %v634, %v641
    %v941 = vmul.f32 %v634, %v645
    %v942 = vmul.f32 %v634, %v649
    %v943 = vmul.f32 %v634, %v653
    %v944 = vmul.f32 %v634, %v657
    %v945 = vmul.f32 %v634, %v661
    %v946 = vmul.f32 %v634, %v665
    %v947 = vmul.f32 %v634, %v669
    %v948 = vmul.f32 %v634, %v673
    %v949 = vmul.f32 %v634, %v677
    %v950 = vmul.f32 %v634, %v681
    %v951 = vmul.f32 %v634, %v685
    %v952 = vmul.f32 %v634, %v689
    %v953 = vmul.f32 %v634, %v693
    %v954 = vmul.f32 %v634, %v697
    %v955 = vadd.f32 %v315, %v699
    %v956 = vadd.f32 %v316, %v700
    %v957 = vadd.f32 %v317, %v701
    %v958 = vadd.f32 %v318, %v702
    %v959 = vadd.f32 %v319, %v703
    %v960 = vadd.f32 %v320, %v704
    %v961 = vadd.f32 %v321, %v705
    %v962 = vadd.f32 %v322, %v706
    %v963 = vadd.f32 %v323, %v707
    %v964 = vadd.f32 %v324, %v708
    %v965 = vadd.f32 %v325, %v709
    %v966 = vadd.f32 %v326, %v710
    %v967 = vadd.f32 %v327, %v711
    %v968 = vadd.f32 %v328, %v712
    %v969 = vadd.f32 %v329, %v713
    %v970 = vadd.f32 %v330, %v714
    %v971 = vadd.f32 %v331, %v715
    %v972 = vadd.f32 %v332, %v716
    %v973 = vadd.f32 %v333, %v717
    %v974 = vadd.f32 %v334, %v718
    %v975 = vadd.f32 %v335, %v719
    %v976 = vadd.f32 %v336, %v720
    %v977 = vadd.f32 %v337, %v721
    %v978 = vadd.f32 %v338, %v722
    %v979 = vadd.f32 %v339, %v723
    %v980 = vadd.f32 %v340, %v724
    %v981 = vadd.f32 %v341, %v725
    %v982 = vadd.f32 %v342, %v726
    %v983 = vadd.f32 %v343, %v727
    %v984 = vadd.f32 %v344, %v728
    %v985 = vadd.f32 %v345, %v729
    %v986 = vadd.f32 %v346, %v730
    %v987 = vadd.f32 %v347, %v731
    %v988 = vadd.f32 %v348, %v732
    %v989 = vadd.f32 %v349, %v733
    %v990 = vadd.f32 %v350, %v734
    %v991 = vadd.f32 %v351, %v735
    %v992 = vadd.f32 %v352, %v736
    %v993 = vadd.f32 %v353, %v737
    %v994 = vadd.f32 %v354, %v738
    %v995 = vadd.f32 %v355, %v739
    %v996 = vadd.f32 %v356, %v740
    %v997 = vadd.f32 %v357, %v741
    %v998 = vadd.f32 %v358, %v742
    %v999 = vadd.f32 %v359, %v743
    %v1000 = vadd.f32 %v360, %v744
    %v1001 = vadd.f32 %v361, %v745
    %v1002 = vadd.f32 %v362, %v746
    %v1003 = vadd.f32 %v363, %v747
    %v1004 = vadd.f32 %v364, %v748
    %v1005 = vadd.f32 %v365, %v749
    %v1006 = vadd.f32 %v366, %v750
    %v1007 = vadd.f32 %v367, %v751
    %v1008 = vadd.f32 %v368, %v752
    %v1009 = vadd.f32 %v369, %v753
    %v1010 = vadd.f32 %v370, %v754
    %v1011 = vadd.f32 %v371, %v755
    %v1012 = vadd.f32 %v372, %v756
    %v1013 = vadd.f32 %v373, %v757
    %v1014 = vadd.f32 %v374, %v758
    %v1015 = vadd.f32 %v375, %v759
    %v1016 = vadd.f32 %v376, %v760
    %v1017 = vadd.f32 %v377, %v761
    %v1018 = vadd.f32 %v378, %v762
    %v1019 = vadd.f32 %v379, %v763
    %v1020 = vadd.f32 %v380, %v764
    %v1021 = vadd.f32 %v381, %v765
    %v1022 = vadd.f32 %v382, %v766
    %v1023 = vadd.f32 %v383, %v767
    %v1024 = vadd.f32 %v384, %v768
    %v1025 = vadd.f32 %v385, %v769
    %v1026 = vadd.f32 %v386, %v770
    %v1027 = vadd.f32 %v387, %v771
    %v1028 = vadd.f32 %v388, %v772
    %v1029 = vadd.f32 %v389, %v773
    %v1030 = vadd.f32 %v390, %v774
    %v1031 = vadd.f32 %v391, %v775
    %v1032 = vadd.f32 %v392, %v776
    %v1033 = vadd.f32 %v393, %v777
    %v1034 = vadd.f32 %v394, %v778
    %v1035 = vadd.f32 %v395, %v779
    %v1036 = vadd.f32 %v396, %v780
    %v1037 = vadd.f32 %v397, %v781
    %v1038 = vadd.f32 %v398, %v782
    %v1039 = vadd.f32 %v399, %v783
    %v1040 = vadd.f32 %v400, %v784
    %v1041 = vadd.f32 %v401, %v785
    %v1042 = vadd.f32 %v402, %v786
    %v1043 = vadd.f32 %v403, %v787
    %v1044 = vadd.f32 %v404, %v788
    %v1045 = vadd.f32 %v405, %v789
    %v1046 = vadd.f32 %v406, %v790
    %v1047 = vadd.f32 %v407, %v791
    %v1048 = vadd.f32 %v408, %v792
    %v1049 = vadd.f32 %v409, %v793
    %v1050 = vadd.f32 %v410, %v794
    %v1051 = vadd.f32 %v411, %v795
    %v1052 = vadd.f32 %v412, %v796
    %v1053 = vadd.f32 %v413, %v797
    %v1054 = vadd.f32 %v414, %v798
    %v1055 = vadd.f32 %v415, %v799
    %v1056 = vadd.f32 %v416, %v800
    %v1057 = vadd.f32 %v417, %v801
    %v1058 = vadd.f32 %v418, %v802
    %v1059 = vadd.f32 %v419, %v803
    %v1060 = vadd.f32 %v420, %v804
    %v1061 = vadd.f32 %v421, %v805
    %v1062 = vadd.f32 %v422, %v806
    %v1063 = vadd.f32 %v423, %v807
    %v1064 = vadd.f32 %v424, %v808
    %v1065 = vadd.f32 %v425, %v809
    %v1066 = vadd.f32 %v426, %v810
    %v1067 = vadd.f32 %v427, %v811
    %v1068 = vadd.f32 %v428, %v812
    %v1069 = vadd.f32 %v429, %v813
    %v1070 = vadd.f32 %v430, %v814
    %v1071 = vadd.f32 %v431, %v815
    %v1072 = vadd.f32 %v432, %v816
    %v1073 = vadd.f32 %v433, %v817
    %v1074 = vadd.f32 %v434, %v818
    %v1075 = vadd.f32 %v435, %v819
    %v1076 = vadd.f32 %v436, %v820
    %v1077 = vadd.f32 %v437, %v821
    %v1078 = vadd.f32 %v438, %v822
    %v1079 = vadd.f32 %v439, %v823
    %v1080 = vadd.f32 %v440, %v824
    %v1081 = vadd.f32 %v441, %v825
    %v1082 = vadd.f32 %v442, %v826
    %v1083 = vadd.f32 %v443, %v827
    %v1084 = vadd.f32 %v444, %v828
    %v1085 = vadd.f32 %v445, %v829
    %v1086 = vadd.f32 %v446, %v830
    %v1087 = vadd.f32 %v447, %v831
    %v1088 = vadd.f32 %v448, %v832
    %v1089 = vadd.f32 %v449, %v833
    %v1090 = vadd.f32 %v450, %v834
    %v1091 = vadd.f32 %v451, %v835
    %v1092 = vadd.f32 %v452, %v836
    %v1093 = vadd.f32 %v453, %v837
    %v1094 = vadd.f32 %v454, %v838
    %v1095 = vadd.f32 %v455, %v839
    %v1096 = vadd.f32 %v456, %v840
    %v1097 = vadd.f32 %v457, %v841
    %v1098 = vadd.f32 %v458, %v842
    %v1099 = vadd.f32 %v459, %v843
    %v1100 = vadd.f32 %v460, %v844
    %v1101 = vadd.f32 %v461, %v845
    %v1102 = vadd.f32 %v462, %v846
    %v1103 = vadd.f32 %v463, %v847
    %v1104 = vadd.f32 %v464, %v848
    %v1105 = vadd.f32 %v465, %v849
    %v1106 = vadd.f32 %v466, %v850
    %v1107 = vadd.f32 %v467, %v851
    %v1108 = vadd.f32 %v468, %v852
    %v1109 = vadd.f32 %v469, %v853
    %v1110 = vadd.f32 %v470, %v854
    %v1111 = vadd.f32 %v471, %v855
    %v1112 = vadd.f32 %v472, %v856
    %v1113 = vadd.f32 %v473, %v857
    %v1114 = vadd.f32 %v474, %v858
    %v1115 = vadd.f32 %v475, %v859
    %v1116 = vadd.f32 %v476, %v860
    %v1117 = vadd.f32 %v477, %v861
    %v1118 = vadd.f32 %v478, %v862
    %v1119 = vadd.f32 %v479, %v863
    %v1120 = vadd.f32 %v480, %v864
    %v1121 = vadd.f32 %v481, %v865
    %v1122 = vadd.f32 %v482, %v866
    %v1123 = vadd.f32 %v483, %v867
    %v1124 = vadd.f32 %v484, %v868
    %v1125 = vadd.f32 %v485, %v869
    %v1126 = vadd.f32 %v486, %v870
    %v1127 = vadd.f32 %v487, %v871
    %v1128 = vadd.f32 %v488, %v872
    %v1129 = vadd.f32 %v489, %v873
    %v1130 = vadd.f32 %v490, %v874
    %v1131 = vadd.f32 %v491, %v875
    %v1132 = vadd.f32 %v492, %v876
    %v1133 = vadd.f32 %v493, %v877
    %v1134 = vadd.f32 %v494, %v878
    %v1135 = vadd.f32 %v495, %v879
    %v1136 = vadd.f32 %v496, %v880
    %v1137 = vadd.f32 %v497, %v881
    %v1138 = vadd.f32 %v498, %v882
    %v1139 = vadd.f32 %v499, %v883
    %v1140 = vadd.f32 %v500, %v884
    %v1141 = vadd.f32 %v501, %v885
    %v1142 = vadd.f32 %v502, %v886
    %v1143 = vadd.f32 %v503, %v887
    %v1144 = vadd.f32 %v504, %v888
    %v1145 = vadd.f32 %v505, %v889
    %v1146 = vadd.f32 %v506, %v890
    %v1147 = vadd.f32 %v507, %v891
    %v1148 = vadd.f32 %v508, %v892
    %v1149 = vadd.f32 %v509, %v893
    %v1150 = vadd.f32 %v510, %v894
    %v1151 = vadd.f32 %v511, %v895
    %v1152 = vadd.f32 %v512, %v896
    %v1153 = vadd.f32 %v513, %v897
    %v1154 = vadd.f32 %v514, %v898
    %v1155 = vadd.f32 %v515, %v899
    %v1156 = vadd.f32 %v516, %v900
    %v1157 = vadd.f32 %v517, %v901
    %v1158 = vadd.f32 %v518, %v902
    %v1159 = vadd.f32 %v519, %v903
    %v1160 = vadd.f32 %v520, %v904
    %v1161 = vadd.f32 %v521, %v905
    %v1162 = vadd.f32 %v522, %v906
    %v1163 = vadd.f32 %v523, %v907
    %v1164 = vadd.f32 %v524, %v908
    %v1165 = vadd.f32 %v525, %v909
    %v1166 = vadd.f32 %v526, %v910
    %v1167 = vadd.f32 %v527, %v911
    %v1168 = vadd.f32 %v528, %v912
    %v1169 = vadd.f32 %v529, %v913
    %v1170 = vadd.f32 %v530, %v914
    %v1171 = vadd.f32 %v531, %v915
    %v1172 = vadd.f32 %v532, %v916
    %v1173 = vadd.f32 %v533, %v917
    %v1174 = vadd.f32 %v534, %v918
    %v1175 = vadd.f32 %v535, %v919
    %v1176 = vadd.f32 %v536, %v920
    %v1177 = vadd.f32 %v537, %v921
    %v1178 = vadd.f32 %v538, %v922
    %v1179 = vadd.f32 %v539, %v923
    %v1180 = vadd.f32 %v540, %v924
    %v1181 = vadd.f32 %v541, %v925
    %v1182 = vadd.f32 %v542, %v926
    %v1183 = vadd.f32 %v543, %v927
    %v1184 = vadd.f32 %v544, %v928
    %v1185 = vadd.f32 %v545, %v929
    %v1186 = vadd.f32 %v546, %v930
    %v1187 = vadd.f32 %v547, %v931
    %v1188 = vadd.f32 %v548, %v932
    %v1189 = vadd.f32 %v549, %v933
    %v1190 = vadd.f32 %v550, %v934
    %v1191 = vadd.f32 %v551, %v935
    %v1192 = vadd.f32 %v552, %v936
    %v1193 = vadd.f32 %v553, %v937
    %v1194 = vadd.f32 %v554, %v938
    %v1195 = vadd.f32 %v555, %v939
    %v1196 = vadd.f32 %v556, %v940
    %v1197 = vadd.f32 %v557, %v941
    %v1198 = vadd.f32 %v558, %v942
    %v1199 = vadd.f32 %v559, %v943
    %v1200 = vadd.f32 %v560, %v944
    %v1201 = vadd.f32 %v561, %v945
    %v1202 = vadd.f32 %v562, %v946
    %v1203 = vadd.f32 %v563, %v947
    %v1204 = vadd.f32 %v564, %v948
    %v1205 = vadd.f32 %v565, %v949
    %v1206 = vadd.f32 %v566, %v950
    %v1207 = vadd.f32 %v567, %v951
    %v1208 = vadd.f32 %v568, %v952
    %v1209 = vadd.f32 %v569, %v953
    %v1210 = vadd.f32 %v570, %v954
    %v1211 = vlaneseq
    %v1212 = vshrl.u32 %v1211, 7
    %v1213 = vsub.s32 2, %v1212
    %v1214 = vrot.slane %v139, %v1213
    %v1215 = vlaneseq
    %v1216 = vshrl.u32 %v1215, 7
    %v1217 = vsub.s32 2, %v1216
    %v1218 = vrot.slane %v140, %v1217
    %v1219 = vlaneseq
    %v1220 = vshrl.u32 %v1219, 7
    %v1221 = vsub.s32 2, %v1220
    %v1222 = vrot.slane %v141, %v1221
    %v1223 = vlaneseq
    %v1224 = vshrl.u32 %v1223, 7
    %v1225 = vsub.s32 2, %v1224
    %v1226 = vrot.slane %v142, %v1225
    %v1227 = vlaneseq
    %v1228 = vshrl.u32 %v1227, 7
    %v1229 = vsub.s32 2, %v1228
    %v1230 = vrot.slane %v143, %v1229
    %v1231 = vlaneseq
    %v1232 = vshrl.u32 %v1231, 7
    %v1233 = vsub.s32 2, %v1232
    %v1234 = vrot.slane %v144, %v1233
    %v1235 = vlaneseq
    %v1236 = vshrl.u32 %v1235, 7
    %v1237 = vsub.s32 2, %v1236
    %v1238 = vrot.slane %v145, %v1237
    %v1239 = vlaneseq
    %v1240 = vshrl.u32 %v1239, 7
    %v1241 = vsub.s32 2, %v1240
    %v1242 = vrot.slane %v146, %v1241
    %v1243 = vlaneseq
    %v1244 = vshrl.u32 %v1243, 7
    %v1245 = vsub.s32 2, %v1244
    %v1246 = vrot.slane %v147, %v1245
    %v1247 = vlaneseq
    %v1248 = vshrl.u32 %v1247, 7
    %v1249 = vsub.s32 2, %v1248
    %v1250 = vrot.slane %v148, %v1249
    %v1251 = vlaneseq
    %v1252 = vshrl.u32 %v1251, 7
    %v1253 = vsub.s32 2, %v1252
    %v1254 = vrot.slane %v149, %v1253
    %v1255 = vlaneseq
    %v1256 = vshrl.u32 %v1255, 7
    %v1257 = vsub.s32 2, %v1256
    %v1258 = vrot.slane %v150, %v1257
    %v1259 = vlaneseq
    %v1260 = vshrl.u32 %v1259, 7
    %v1261 = vsub.s32 2, %v1260
    %v1262 = vrot.slane %v151, %v1261
    %v1263 = vlaneseq
    %v1264 = vshrl.u32 %v1263, 7
    %v1265 = vsub.s32 2, %v1264
    %v1266 = vrot.slane %v152, %v1265
    %v1267 = vlaneseq
    %v1268 = vshrl.u32 %v1267, 7
    %v1269 = vsub.s32 2, %v1268
    %v1270 = vrot.slane %v153, %v1269
    %v1271 = vlaneseq
    %v1272 = vshrl.u32 %v1271, 7
    %v1273 = vsub.s32 2, %v1272
    %v1274 = vrot.slane %v154, %v1273
    %1275 = vset.pattern.permute.xlu0 2
    %1276 = vperm.xlu0 %1275, %v155
    %v1277 = vpop.permute.xlu0 %1276
    %1279 = vset.pattern.permute.xlu0 2
    %1280 = vperm.xlu0 %1279, %v156
    %v1281 = vpop.permute.xlu0 %1280
    %1283 = vset.pattern.permute.xlu0 2
    %1284 = vperm.xlu0 %1283, %v157
    %v1285 = vpop.permute.xlu0 %1284
    %1287 = vset.pattern.permute.xlu0 2
    %1288 = vperm.xlu0 %1287, %v158
    %v1289 = vpop.permute.xlu0 %1288
    %1291 = vset.pattern.permute.xlu0 2
    %1292 = vperm.xlu0 %1291, %v159
    %v1293 = vpop.permute.xlu0 %1292
    %1295 = vset.pattern.permute.xlu0 2
    %1296 = vperm.xlu0 %1295, %v160
    %v1297 = vpop.permute.xlu0 %1296
    %1299 = vset.pattern.permute.xlu0 2
    %1300 = vperm.xlu0 %1299, %v161
    %v1301 = vpop.permute.xlu0 %1300
    %1303 = vset.pattern.permute.xlu0 2
    %1304 = vperm.xlu0 %1303, %v162
    %v1305 = vpop.permute.xlu0 %1304
    %1307 = vset.pattern.permute.xlu0 2
    %1308 = vperm.xlu0 %1307, %v163
    %v1309 = vpop.permute.xlu0 %1308
    %1311 = vset.pattern.permute.xlu0 2
    %1312 = vperm.xlu0 %1311, %v164
    %v1313 = vpop.permute.xlu0 %1312
    %1315 = vset.pattern.permute.xlu0 2
    %1316 = vperm.xlu0 %1315, %v165
    %v1317 = vpop.permute.xlu0 %1316
    %1319 = vset.pattern.permute.xlu0 2
    %1320 = vperm.xlu0 %1319, %v166
    %v1321 = vpop.permute.xlu0 %1320
    %1323 = vset.pattern.permute.xlu0 2
    %1324 = vperm.xlu0 %1323, %v167
    %v1325 = vpop.permute.xlu0 %1324
    %1327 = vset.pattern.permute.xlu0 2
    %1328 = vperm.xlu0 %1327, %v168
    %v1329 = vpop.permute.xlu0 %1328
    %1331 = vset.pattern.permute.xlu0 2
    %1332 = vperm.xlu0 %1331, %v169
    %v1333 = vpop.permute.xlu0 %1332
    %1335 = vset.pattern.permute.xlu0 2
    %1336 = vperm.xlu0 %1335, %v170
    %v1337 = vpop.permute.xlu0 %1336
    %v1339 = vmul.f32 %v1214, %v1277
    %v1340 = vmul.f32 %v1214, %v1281
    %v1341 = vmul.f32 %v1214, %v1285
    %v1342 = vmul.f32 %v1214, %v1289
    %v1343 = vmul.f32 %v1214, %v1293
    %v1344 = vmul.f32 %v1214, %v1297
    %v1345 = vmul.f32 %v1214, %v1301
    %v1346 = vmul.f32 %v1214, %v1305
    %v1347 = vmul.f32 %v1214, %v1309
    %v1348 = vmul.f32 %v1214, %v1313
    %v1349 = vmul.f32 %v1214, %v1317
    %v1350 = vmul.f32 %v1214, %v1321
    %v1351 = vmul.f32 %v1214, %v1325
    %v1352 = vmul.f32 %v1214, %v1329
    %v1353 = vmul.f32 %v1214, %v1333
    %v1354 = vmul.f32 %v1214, %v1337
    %v1355 = vmul.f32 %v1218, %v1277
    %v1356 = vmul.f32 %v1218, %v1281
    %v1357 = vmul.f32 %v1218, %v1285
    %v1358 = vmul.f32 %v1218, %v1289
    %v1359 = vmul.f32 %v1218, %v1293
    %v1360 = vmul.f32 %v1218, %v1297
    %v1361 = vmul.f32 %v1218, %v1301
    %v1362 = vmul.f32 %v1218, %v1305
    %v1363 = vmul.f32 %v1218, %v1309
    %v1364 = vmul.f32 %v1218, %v1313
    %v1365 = vmul.f32 %v1218, %v1317
    %v1366 = vmul.f32 %v1218, %v1321
    %v1367 = vmul.f32 %v1218, %v1325
    %v1368 = vmul.f32 %v1218, %v1329
    %v1369 = vmul.f32 %v1218, %v1333
    %v1370 = vmul.f32 %v1218, %v1337
    %v1371 = vmul.f32 %v1222, %v1277
    %v1372 = vmul.f32 %v1222, %v1281
    %v1373 = vmul.f32 %v1222, %v1285
    %v1374 = vmul.f32 %v1222, %v1289
    %v1375 = vmul.f32 %v1222, %v1293
    %v1376 = vmul.f32 %v1222, %v1297
    %v1377 = vmul.f32 %v1222, %v1301
    %v1378 = vmul.f32 %v1222, %v1305
    %v1379 = vmul.f32 %v1222, %v1309
    %v1380 = vmul.f32 %v1222, %v1313
    %v1381 = vmul.f32 %v1222, %v1317
    %v1382 = vmul.f32 %v1222, %v1321
    %v1383 = vmul.f32 %v1222, %v1325
    %v1384 = vmul.f32 %v1222, %v1329
    %v1385 = vmul.f32 %v1222, %v1333
    %v1386 = vmul.f32 %v1222, %v1337
    %v1387 = vmul.f32 %v1226, %v1277
    %v1388 = vmul.f32 %v1226, %v1281
    %v1389 = vmul.f32 %v1226, %v1285
    %v1390 = vmul.f32 %v1226, %v1289
    %v1391 = vmul.f32 %v1226, %v1293
    %v1392 = vmul.f32 %v1226, %v1297
    %v1393 = vmul.f32 %v1226, %v1301
    %v1394 = vmul.f32 %v1226, %v1305
    %v1395 = vmul.f32 %v1226, %v1309
    %v1396 = vmul.f32 %v1226, %v1313
    %v1397 = vmul.f32 %v1226, %v1317
    %v1398 = vmul.f32 %v1226, %v1321
    %v1399 = vmul.f32 %v1226, %v1325
    %v1400 = vmul.f32 %v1226, %v1329
    %v1401 = vmul.f32 %v1226, %v1333
    %v1402 = vmul.f32 %v1226, %v1337
    %v1403 = vmul.f32 %v1230, %v1277
    %v1404 = vmul.f32 %v1230, %v1281
    %v1405 = vmul.f32 %v1230, %v1285
    %v1406 = vmul.f32 %v1230, %v1289
    %v1407 = vmul.f32 %v1230, %v1293
    %v1408 = vmul.f32 %v1230, %v1297
    %v1409 = vmul.f32 %v1230, %v1301
    %v1410 = vmul.f32 %v1230, %v1305
    %v1411 = vmul.f32 %v1230, %v1309
    %v1412 = vmul.f32 %v1230, %v1313
    %v1413 = vmul.f32 %v1230, %v1317
    %v1414 = vmul.f32 %v1230, %v1321
    %v1415 = vmul.f32 %v1230, %v1325
    %v1416 = vmul.f32 %v1230, %v1329
    %v1417 = vmul.f32 %v1230, %v1333
    %v1418 = vmul.f32 %v1230, %v1337
    %v1419 = vmul.f32 %v1234, %v1277
    %v1420 = vmul.f32 %v1234, %v1281
    %v1421 = vmul.f32 %v1234, %v1285
    %v1422 = vmul.f32 %v1234, %v1289
    %v1423 = vmul.f32 %v1234, %v1293
    %v1424 = vmul.f32 %v1234, %v1297
    %v1425 = vmul.f32 %v1234, %v1301
    %v1426 = vmul.f32 %v1234, %v1305
    %v1427 = vmul.f32 %v1234, %v1309
    %v1428 = vmul.f32 %v1234, %v1313
    %v1429 = vmul.f32 %v1234, %v1317
    %v1430 = vmul.f32 %v1234, %v1321
    %v1431 = vmul.f32 %v1234, %v1325
    %v1432 = vmul.f32 %v1234, %v1329
    %v1433 = vmul.f32 %v1234, %v1333
    %v1434 = vmul.f32 %v1234, %v1337
    %v1435 = vmul.f32 %v1238, %v1277
    %v1436 = vmul.f32 %v1238, %v1281
    %v1437 = vmul.f32 %v1238, %v1285
    %v1438 = vmul.f32 %v1238, %v1289
    %v1439 = vmul.f32 %v1238, %v1293
    %v1440 = vmul.f32 %v1238, %v1297
    %v1441 = vmul.f32 %v1238, %v1301
    %v1442 = vmul.f32 %v1238, %v1305
    %v1443 = vmul.f32 %v1238, %v1309
    %v1444 = vmul.f32 %v1238, %v1313
    %v1445 = vmul.f32 %v1238, %v1317
    %v1446 = vmul.f32 %v1238, %v1321
    %v1447 = vmul.f32 %v1238, %v1325
    %v1448 = vmul.f32 %v1238, %v1329
    %v1449 = vmul.f32 %v1238, %v1333
    %v1450 = vmul.f32 %v1238, %v1337
    %v1451 = vmul.f32 %v1242, %v1277
    %v1452 = vmul.f32 %v1242, %v1281
    %v1453 = vmul.f32 %v1242, %v1285
    %v1454 = vmul.f32 %v1242, %v1289
    %v1455 = vmul.f32 %v1242, %v1293
    %v1456 = vmul.f32 %v1242, %v1297
    %v1457 = vmul.f32 %v1242, %v1301
    %v1458 = vmul.f32 %v1242, %v1305
    %v1459 = vmul.f32 %v1242, %v1309
    %v1460 = vmul.f32 %v1242, %v1313
    %v1461 = vmul.f32 %v1242, %v1317
    %v1462 = vmul.f32 %v1242, %v1321
    %v1463 = vmul.f32 %v1242, %v1325
    %v1464 = vmul.f32 %v1242, %v1329
    %v1465 = vmul.f32 %v1242, %v1333
    %v1466 = vmul.f32 %v1242, %v1337
    %v1467 = vmul.f32 %v1246, %v1277
    %v1468 = vmul.f32 %v1246, %v1281
    %v1469 = vmul.f32 %v1246, %v1285
    %v1470 = vmul.f32 %v1246, %v1289
    %v1471 = vmul.f32 %v1246, %v1293
    %v1472 = vmul.f32 %v1246, %v1297
    %v1473 = vmul.f32 %v1246, %v1301
    %v1474 = vmul.f32 %v1246, %v1305
    %v1475 = vmul.f32 %v1246, %v1309
    %v1476 = vmul.f32 %v1246, %v1313
    %v1477 = vmul.f32 %v1246, %v1317
    %v1478 = vmul.f32 %v1246, %v1321
    %v1479 = vmul.f32 %v1246, %v1325
    %v1480 = vmul.f32 %v1246, %v1329
    %v1481 = vmul.f32 %v1246, %v1333
    %v1482 = vmul.f32 %v1246, %v1337
    %v1483 = vmul.f32 %v1250, %v1277
    %v1484 = vmul.f32 %v1250, %v1281
    %v1485 = vmul.f32 %v1250, %v1285
    %v1486 = vmul.f32 %v1250, %v1289
    %v1487 = vmul.f32 %v1250, %v1293
    %v1488 = vmul.f32 %v1250, %v1297
    %v1489 = vmul.f32 %v1250, %v1301
    %v1490 = vmul.f32 %v1250, %v1305
    %v1491 = vmul.f32 %v1250, %v1309
    %v1492 = vmul.f32 %v1250, %v1313
    %v1493 = vmul.f32 %v1250, %v1317
    %v1494 = vmul.f32 %v1250, %v1321
    %v1495 = vmul.f32 %v1250, %v1325
    %v1496 = vmul.f32 %v1250, %v1329
    %v1497 = vmul.f32 %v1250, %v1333
    %v1498 = vmul.f32 %v1250, %v1337
    %v1499 = vmul.f32 %v1254, %v1277
    %v1500 = vmul.f32 %v1254, %v1281
    %v1501 = vmul.f32 %v1254, %v1285
    %v1502 = vmul.f32 %v1254, %v1289
    %v1503 = vmul.f32 %v1254, %v1293
    %v1504 = vmul.f32 %v1254, %v1297
    %v1505 = vmul.f32 %v1254, %v1301
    %v1506 = vmul.f32 %v1254, %v1305
    %v1507 = vmul.f32 %v1254, %v1309
    %v1508 = vmul.f32 %v1254, %v1313
    %v1509 = vmul.f32 %v1254, %v1317
    %v1510 = vmul.f32 %v1254, %v1321
    %v1511 = vmul.f32 %v1254, %v1325
    %v1512 = vmul.f32 %v1254, %v1329
    %v1513 = vmul.f32 %v1254, %v1333
    %v1514 = vmul.f32 %v1254, %v1337
    %v1515 = vmul.f32 %v1258, %v1277
    %v1516 = vmul.f32 %v1258, %v1281
    %v1517 = vmul.f32 %v1258, %v1285
    %v1518 = vmul.f32 %v1258, %v1289
    %v1519 = vmul.f32 %v1258, %v1293
    %v1520 = vmul.f32 %v1258, %v1297
    %v1521 = vmul.f32 %v1258, %v1301
    %v1522 = vmul.f32 %v1258, %v1305
    %v1523 = vmul.f32 %v1258, %v1309
    %v1524 = vmul.f32 %v1258, %v1313
    %v1525 = vmul.f32 %v1258, %v1317
    %v1526 = vmul.f32 %v1258, %v1321
    %v1527 = vmul.f32 %v1258, %v1325
    %v1528 = vmul.f32 %v1258, %v1329
    %v1529 = vmul.f32 %v1258, %v1333
    %v1530 = vmul.f32 %v1258, %v1337
    %v1531 = vmul.f32 %v1262, %v1277
    %v1532 = vmul.f32 %v1262, %v1281
    %v1533 = vmul.f32 %v1262, %v1285
    %v1534 = vmul.f32 %v1262, %v1289
    %v1535 = vmul.f32 %v1262, %v1293
    %v1536 = vmul.f32 %v1262, %v1297
    %v1537 = vmul.f32 %v1262, %v1301
    %v1538 = vmul.f32 %v1262, %v1305
    %v1539 = vmul.f32 %v1262, %v1309
    %v1540 = vmul.f32 %v1262, %v1313
    %v1541 = vmul.f32 %v1262, %v1317
    %v1542 = vmul.f32 %v1262, %v1321
    %v1543 = vmul.f32 %v1262, %v1325
    %v1544 = vmul.f32 %v1262, %v1329
    %v1545 = vmul.f32 %v1262, %v1333
    %v1546 = vmul.f32 %v1262, %v1337
    %v1547 = vmul.f32 %v1266, %v1277
    %v1548 = vmul.f32 %v1266, %v1281
    %v1549 = vmul.f32 %v1266, %v1285
    %v1550 = vmul.f32 %v1266, %v1289
    %v1551 = vmul.f32 %v1266, %v1293
    %v1552 = vmul.f32 %v1266, %v1297
    %v1553 = vmul.f32 %v1266, %v1301
    %v1554 = vmul.f32 %v1266, %v1305
    %v1555 = vmul.f32 %v1266, %v1309
    %v1556 = vmul.f32 %v1266, %v1313
    %v1557 = vmul.f32 %v1266, %v1317
    %v1558 = vmul.f32 %v1266, %v1321
    %v1559 = vmul.f32 %v1266, %v1325
    %v1560 = vmul.f32 %v1266, %v1329
    %v1561 = vmul.f32 %v1266, %v1333
    %v1562 = vmul.f32 %v1266, %v1337
    %v1563 = vmul.f32 %v1270, %v1277
    %v1564 = vmul.f32 %v1270, %v1281
    %v1565 = vmul.f32 %v1270, %v1285
    %v1566 = vmul.f32 %v1270, %v1289
    %v1567 = vmul.f32 %v1270, %v1293
    %v1568 = vmul.f32 %v1270, %v1297
    %v1569 = vmul.f32 %v1270, %v1301
    %v1570 = vmul.f32 %v1270, %v1305
    %v1571 = vmul.f32 %v1270, %v1309
    %v1572 = vmul.f32 %v1270, %v1313
    %v1573 = vmul.f32 %v1270, %v1317
    %v1574 = vmul.f32 %v1270, %v1321
    %v1575 = vmul.f32 %v1270, %v1325
    %v1576 = vmul.f32 %v1270, %v1329
    %v1577 = vmul.f32 %v1270, %v1333
    %v1578 = vmul.f32 %v1270, %v1337
    %v1579 = vmul.f32 %v1274, %v1277
    %v1580 = vmul.f32 %v1274, %v1281
    %v1581 = vmul.f32 %v1274, %v1285
    %v1582 = vmul.f32 %v1274, %v1289
    %v1583 = vmul.f32 %v1274, %v1293
    %v1584 = vmul.f32 %v1274, %v1297
    %v1585 = vmul.f32 %v1274, %v1301
    %v1586 = vmul.f32 %v1274, %v1305
    %v1587 = vmul.f32 %v1274, %v1309
    %v1588 = vmul.f32 %v1274, %v1313
    %v1589 = vmul.f32 %v1274, %v1317
    %v1590 = vmul.f32 %v1274, %v1321
    %v1591 = vmul.f32 %v1274, %v1325
    %v1592 = vmul.f32 %v1274, %v1329
    %v1593 = vmul.f32 %v1274, %v1333
    %v1594 = vmul.f32 %v1274, %v1337
    %v1595 = vadd.f32 %v955, %v1339
    %v1596 = vadd.f32 %v956, %v1340
    %v1597 = vadd.f32 %v957, %v1341
    %v1598 = vadd.f32 %v958, %v1342
    %v1599 = vadd.f32 %v959, %v1343
    %v1600 = vadd.f32 %v960, %v1344
    %v1601 = vadd.f32 %v961, %v1345
    %v1602 = vadd.f32 %v962, %v1346
    %v1603 = vadd.f32 %v963, %v1347
    %v1604 = vadd.f32 %v964, %v1348
    %v1605 = vadd.f32 %v965, %v1349
    %v1606 = vadd.f32 %v966, %v1350
    %v1607 = vadd.f32 %v967, %v1351
    %v1608 = vadd.f32 %v968, %v1352
    %v1609 = vadd.f32 %v969, %v1353
    %v1610 = vadd.f32 %v970, %v1354
    %v1611 = vadd.f32 %v971, %v1355
    %v1612 = vadd.f32 %v972, %v1356
    %v1613 = vadd.f32 %v973, %v1357
    %v1614 = vadd.f32 %v974, %v1358
    %v1615 = vadd.f32 %v975, %v1359
    %v1616 = vadd.f32 %v976, %v1360
    %v1617 = vadd.f32 %v977, %v1361
    %v1618 = vadd.f32 %v978, %v1362
    %v1619 = vadd.f32 %v979, %v1363
    %v1620 = vadd.f32 %v980, %v1364
    %v1621 = vadd.f32 %v981, %v1365
    %v1622 = vadd.f32 %v982, %v1366
    %v1623 = vadd.f32 %v983, %v1367
    %v1624 = vadd.f32 %v984, %v1368
    %v1625 = vadd.f32 %v985, %v1369
    %v1626 = vadd.f32 %v986, %v1370
    %v1627 = vadd.f32 %v987, %v1371
    %v1628 = vadd.f32 %v988, %v1372
    %v1629 = vadd.f32 %v989, %v1373
    %v1630 = vadd.f32 %v990, %v1374
    %v1631 = vadd.f32 %v991, %v1375
    %v1632 = vadd.f32 %v992, %v1376
    %v1633 = vadd.f32 %v993, %v1377
    %v1634 = vadd.f32 %v994, %v1378
    %v1635 = vadd.f32 %v995, %v1379
    %v1636 = vadd.f32 %v996, %v1380
    %v1637 = vadd.f32 %v997, %v1381
    %v1638 = vadd.f32 %v998, %v1382
    %v1639 = vadd.f32 %v999, %v1383
    %v1640 = vadd.f32 %v1000, %v1384
    %v1641 = vadd.f32 %v1001, %v1385
    %v1642 = vadd.f32 %v1002, %v1386
    %v1643 = vadd.f32 %v1003, %v1387
    %v1644 = vadd.f32 %v1004, %v1388
    %v1645 = vadd.f32 %v1005, %v1389
    %v1646 = vadd.f32 %v1006, %v1390
    %v1647 = vadd.f32 %v1007, %v1391
    %v1648 = vadd.f32 %v1008, %v1392
    %v1649 = vadd.f32 %v1009, %v1393
    %v1650 = vadd.f32 %v1010, %v1394
    %v1651 = vadd.f32 %v1011, %v1395
    %v1652 = vadd.f32 %v1012, %v1396
    %v1653 = vadd.f32 %v1013, %v1397
    %v1654 = vadd.f32 %v1014, %v1398
    %v1655 = vadd.f32 %v1015, %v1399
    %v1656 = vadd.f32 %v1016, %v1400
    %v1657 = vadd.f32 %v1017, %v1401
    %v1658 = vadd.f32 %v1018, %v1402
    %v1659 = vadd.f32 %v1019, %v1403
    %v1660 = vadd.f32 %v1020, %v1404
    %v1661 = vadd.f32 %v1021, %v1405
    %v1662 = vadd.f32 %v1022, %v1406
    %v1663 = vadd.f32 %v1023, %v1407
    %v1664 = vadd.f32 %v1024, %v1408
    %v1665 = vadd.f32 %v1025, %v1409
    %v1666 = vadd.f32 %v1026, %v1410
    %v1667 = vadd.f32 %v1027, %v1411
    %v1668 = vadd.f32 %v1028, %v1412
    %v1669 = vadd.f32 %v1029, %v1413
    %v1670 = vadd.f32 %v1030, %v1414
    %v1671 = vadd.f32 %v1031, %v1415
    %v1672 = vadd.f32 %v1032, %v1416
    %v1673 = vadd.f32 %v1033, %v1417
    %v1674 = vadd.f32 %v1034, %v1418
    %v1675 = vadd.f32 %v1035, %v1419
    %v1676 = vadd.f32 %v1036, %v1420
    %v1677 = vadd.f32 %v1037, %v1421
    %v1678 = vadd.f32 %v1038, %v1422
    %v1679 = vadd.f32 %v1039, %v1423
    %v1680 = vadd.f32 %v1040, %v1424
    %v1681 = vadd.f32 %v1041, %v1425
    %v1682 = vadd.f32 %v1042, %v1426
    %v1683 = vadd.f32 %v1043, %v1427
    %v1684 = vadd.f32 %v1044, %v1428
    %v1685 = vadd.f32 %v1045, %v1429
    %v1686 = vadd.f32 %v1046, %v1430
    %v1687 = vadd.f32 %v1047, %v1431
    %v1688 = vadd.f32 %v1048, %v1432
    %v1689 = vadd.f32 %v1049, %v1433
    %v1690 = vadd.f32 %v1050, %v1434
    %v1691 = vadd.f32 %v1051, %v1435
    %v1692 = vadd.f32 %v1052, %v1436
    %v1693 = vadd.f32 %v1053, %v1437
    %v1694 = vadd.f32 %v1054, %v1438
    %v1695 = vadd.f32 %v1055, %v1439
    %v1696 = vadd.f32 %v1056, %v1440
    %v1697 = vadd.f32 %v1057, %v1441
    %v1698 = vadd.f32 %v1058, %v1442
    %v1699 = vadd.f32 %v1059, %v1443
    %v1700 = vadd.f32 %v1060, %v1444
    %v1701 = vadd.f32 %v1061, %v1445
    %v1702 = vadd.f32 %v1062, %v1446
    %v1703 = vadd.f32 %v1063, %v1447
    %v1704 = vadd.f32 %v1064, %v1448
    %v1705 = vadd.f32 %v1065, %v1449
    %v1706 = vadd.f32 %v1066, %v1450
    %v1707 = vadd.f32 %v1067, %v1451
    %v1708 = vadd.f32 %v1068, %v1452
    %v1709 = vadd.f32 %v1069, %v1453
    %v1710 = vadd.f32 %v1070, %v1454
    %v1711 = vadd.f32 %v1071, %v1455
    %v1712 = vadd.f32 %v1072, %v1456
    %v1713 = vadd.f32 %v1073, %v1457
    %v1714 = vadd.f32 %v1074, %v1458
    %v1715 = vadd.f32 %v1075, %v1459
    %v1716 = vadd.f32 %v1076, %v1460
    %v1717 = vadd.f32 %v1077, %v1461
    %v1718 = vadd.f32 %v1078, %v1462
    %v1719 = vadd.f32 %v1079, %v1463
    %v1720 = vadd.f32 %v1080, %v1464
    %v1721 = vadd.f32 %v1081, %v1465
    %v1722 = vadd.f32 %v1082, %v1466
    %v1723 = vadd.f32 %v1083, %v1467
    %v1724 = vadd.f32 %v1084, %v1468
    %v1725 = vadd.f32 %v1085, %v1469
    %v1726 = vadd.f32 %v1086, %v1470
    %v1727 = vadd.f32 %v1087, %v1471
    %v1728 = vadd.f32 %v1088, %v1472
    %v1729 = vadd.f32 %v1089, %v1473
    %v1730 = vadd.f32 %v1090, %v1474
    %v1731 = vadd.f32 %v1091, %v1475
    %v1732 = vadd.f32 %v1092, %v1476
    %v1733 = vadd.f32 %v1093, %v1477
    %v1734 = vadd.f32 %v1094, %v1478
    %v1735 = vadd.f32 %v1095, %v1479
    %v1736 = vadd.f32 %v1096, %v1480
    %v1737 = vadd.f32 %v1097, %v1481
    %v1738 = vadd.f32 %v1098, %v1482
    %v1739 = vadd.f32 %v1099, %v1483
    %v1740 = vadd.f32 %v1100, %v1484
    %v1741 = vadd.f32 %v1101, %v1485
    %v1742 = vadd.f32 %v1102, %v1486
    %v1743 = vadd.f32 %v1103, %v1487
    %v1744 = vadd.f32 %v1104, %v1488
    %v1745 = vadd.f32 %v1105, %v1489
    %v1746 = vadd.f32 %v1106, %v1490
    %v1747 = vadd.f32 %v1107, %v1491
    %v1748 = vadd.f32 %v1108, %v1492
    %v1749 = vadd.f32 %v1109, %v1493
    %v1750 = vadd.f32 %v1110, %v1494
    %v1751 = vadd.f32 %v1111, %v1495
    %v1752 = vadd.f32 %v1112, %v1496
    %v1753 = vadd.f32 %v1113, %v1497
    %v1754 = vadd.f32 %v1114, %v1498
    %v1755 = vadd.f32 %v1115, %v1499
    %v1756 = vadd.f32 %v1116, %v1500
    %v1757 = vadd.f32 %v1117, %v1501
    %v1758 = vadd.f32 %v1118, %v1502
    %v1759 = vadd.f32 %v1119, %v1503
    %v1760 = vadd.f32 %v1120, %v1504
    %v1761 = vadd.f32 %v1121, %v1505
    %v1762 = vadd.f32 %v1122, %v1506
    %v1763 = vadd.f32 %v1123, %v1507
    %v1764 = vadd.f32 %v1124, %v1508
    %v1765 = vadd.f32 %v1125, %v1509
    %v1766 = vadd.f32 %v1126, %v1510
    %v1767 = vadd.f32 %v1127, %v1511
    %v1768 = vadd.f32 %v1128, %v1512
    %v1769 = vadd.f32 %v1129, %v1513
    %v1770 = vadd.f32 %v1130, %v1514
    %v1771 = vadd.f32 %v1131, %v1515
    %v1772 = vadd.f32 %v1132, %v1516
    %v1773 = vadd.f32 %v1133, %v1517
    %v1774 = vadd.f32 %v1134, %v1518
    %v1775 = vadd.f32 %v1135, %v1519
    %v1776 = vadd.f32 %v1136, %v1520
    %v1777 = vadd.f32 %v1137, %v1521
    %v1778 = vadd.f32 %v1138, %v1522
    %v1779 = vadd.f32 %v1139, %v1523
    %v1780 = vadd.f32 %v1140, %v1524
    %v1781 = vadd.f32 %v1141, %v1525
    %v1782 = vadd.f32 %v1142, %v1526
    %v1783 = vadd.f32 %v1143, %v1527
    %v1784 = vadd.f32 %v1144, %v1528
    %v1785 = vadd.f32 %v1145, %v1529
    %v1786 = vadd.f32 %v1146, %v1530
    %v1787 = vadd.f32 %v1147, %v1531
    %v1788 = vadd.f32 %v1148, %v1532
    %v1789 = vadd.f32 %v1149, %v1533
    %v1790 = vadd.f32 %v1150, %v1534
    %v1791 = vadd.f32 %v1151, %v1535
    %v1792 = vadd.f32 %v1152, %v1536
    %v1793 = vadd.f32 %v1153, %v1537
    %v1794 = vadd.f32 %v1154, %v1538
    %v1795 = vadd.f32 %v1155, %v1539
    %v1796 = vadd.f32 %v1156, %v1540
    %v1797 = vadd.f32 %v1157, %v1541
    %v1798 = vadd.f32 %v1158, %v1542
    %v1799 = vadd.f32 %v1159, %v1543
    %v1800 = vadd.f32 %v1160, %v1544
    %v1801 = vadd.f32 %v1161, %v1545
    %v1802 = vadd.f32 %v1162, %v1546
    %v1803 = vadd.f32 %v1163, %v1547
    %v1804 = vadd.f32 %v1164, %v1548
    %v1805 = vadd.f32 %v1165, %v1549
    %v1806 = vadd.f32 %v1166, %v1550
    %v1807 = vadd.f32 %v1167, %v1551
    %v1808 = vadd.f32 %v1168, %v1552
    %v1809 = vadd.f32 %v1169, %v1553
    %v1810 = vadd.f32 %v1170, %v1554
    %v1811 = vadd.f32 %v1171, %v1555
    %v1812 = vadd.f32 %v1172, %v1556
    %v1813 = vadd.f32 %v1173, %v1557
    %v1814 = vadd.f32 %v1174, %v1558
    %v1815 = vadd.f32 %v1175, %v1559
    %v1816 = vadd.f32 %v1176, %v1560
    %v1817 = vadd.f32 %v1177, %v1561
    %v1818 = vadd.f32 %v1178, %v1562
    %v1819 = vadd.f32 %v1179, %v1563
    %v1820 = vadd.f32 %v1180, %v1564
    %v1821 = vadd.f32 %v1181, %v1565
    %v1822 = vadd.f32 %v1182, %v1566
    %v1823 = vadd.f32 %v1183, %v1567
    %v1824 = vadd.f32 %v1184, %v1568
    %v1825 = vadd.f32 %v1185, %v1569
    %v1826 = vadd.f32 %v1186, %v1570
    %v1827 = vadd.f32 %v1187, %v1571
    %v1828 = vadd.f32 %v1188, %v1572
    %v1829 = vadd.f32 %v1189, %v1573
    %v1830 = vadd.f32 %v1190, %v1574
    %v1831 = vadd.f32 %v1191, %v1575
    %v1832 = vadd.f32 %v1192, %v1576
    %v1833 = vadd.f32 %v1193, %v1577
    %v1834 = vadd.f32 %v1194, %v1578
    %v1835 = vadd.f32 %v1195, %v1579
    %v1836 = vadd.f32 %v1196, %v1580
    %v1837 = vadd.f32 %v1197, %v1581
    %v1838 = vadd.f32 %v1198, %v1582
    %v1839 = vadd.f32 %v1199, %v1583
    %v1840 = vadd.f32 %v1200, %v1584
    %v1841 = vadd.f32 %v1201, %v1585
    %v1842 = vadd.f32 %v1202, %v1586
    %v1843 = vadd.f32 %v1203, %v1587
    %v1844 = vadd.f32 %v1204, %v1588
    %v1845 = vadd.f32 %v1205, %v1589
    %v1846 = vadd.f32 %v1206, %v1590
    %v1847 = vadd.f32 %v1207, %v1591
    %v1848 = vadd.f32 %v1208, %v1592
    %v1849 = vadd.f32 %v1209, %v1593
    %v1850 = vadd.f32 %v1210, %v1594
    %1851 = vxpose.xlu0.b32.start [1/16] %v1595, 128
    %1852 = vxpose.xlu0.b32.cont [2/16] %v1596, 128
    %1853 = vxpose.xlu0.b32.cont [3/16] %v1597, 128
    %1854 = vxpose.xlu0.b32.cont [4/16] %v1598, 128
    %1855 = vxpose.xlu0.b32.cont [5/16] %v1599, 128
    %1856 = vxpose.xlu0.b32.cont [6/16] %v1600, 128
    %1857 = vxpose.xlu0.b32.cont [7/16] %v1601, 128
    %1858 = vxpose.xlu0.b32.cont [8/16] %v1602, 128
    %1859 = vxpose.xlu0.b32.cont [9/16] %v1603, 128
    %1860 = vxpose.xlu0.b32.cont [10/16] %v1604, 128
    %1861 = vxpose.xlu0.b32.cont [11/16] %v1605, 128
    %1862 = vxpose.xlu0.b32.cont [12/16] %v1606, 128
    %1863 = vxpose.xlu0.b32.cont [13/16] %v1607, 128
    %1864 = vxpose.xlu0.b32.cont [14/16] %v1608, 128
    %1865 = vxpose.xlu0.b32.cont [15/16] %v1609, 128
    %1866 = vxpose.xlu0.b32.end [16/16] %v1610, 128
    %v1867 = vpop.trf.xlu0
    %v1868 = vpop.trf.xlu0
    %v1869 = vpop.trf.xlu0
    %v1870 = vpop.trf.xlu0
    %v1871 = vpop.trf.xlu0
    %v1872 = vpop.trf.xlu0
    %v1873 = vpop.trf.xlu0
    %v1874 = vpop.trf.xlu0
    %v1875 = vpop.trf.xlu0
    %v1876 = vpop.trf.xlu0
    %v1877 = vpop.trf.xlu0
    %v1878 = vpop.trf.xlu0
    %v1879 = vpop.trf.xlu0
    %v1880 = vpop.trf.xlu0
    %v1881 = vpop.trf.xlu0
    %v1882 = vpop.trf.xlu0
    %1883 = vxpose.xlu0.b32.start [1/16] %v1611, 128
    %1884 = vxpose.xlu0.b32.cont [2/16] %v1612, 128
    %1885 = vxpose.xlu0.b32.cont [3/16] %v1613, 128
    %1886 = vxpose.xlu0.b32.cont [4/16] %v1614, 128
    %1887 = vxpose.xlu0.b32.cont [5/16] %v1615, 128
    %1888 = vxpose.xlu0.b32.cont [6/16] %v1616, 128
    %1889 = vxpose.xlu0.b32.cont [7/16] %v1617, 128
    %1890 = vxpose.xlu0.b32.cont [8/16] %v1618, 128
    %1891 = vxpose.xlu0.b32.cont [9/16] %v1619, 128
    %1892 = vxpose.xlu0.b32.cont [10/16] %v1620, 128
    %1893 = vxpose.xlu0.b32.cont [11/16] %v1621, 128
    %1894 = vxpose.xlu0.b32.cont [12/16] %v1622, 128
    %1895 = vxpose.xlu0.b32.cont [13/16] %v1623, 128
    %1896 = vxpose.xlu0.b32.cont [14/16] %v1624, 128
    %1897 = vxpose.xlu0.b32.cont [15/16] %v1625, 128
    %1898 = vxpose.xlu0.b32.end [16/16] %v1626, 128
    %v1899 = vpop.trf.xlu0
    %v1900 = vpop.trf.xlu0
    %v1901 = vpop.trf.xlu0
    %v1902 = vpop.trf.xlu0
    %v1903 = vpop.trf.xlu0
    %v1904 = vpop.trf.xlu0
    %v1905 = vpop.trf.xlu0
    %v1906 = vpop.trf.xlu0
    %v1907 = vpop.trf.xlu0
    %v1908 = vpop.trf.xlu0
    %v1909 = vpop.trf.xlu0
    %v1910 = vpop.trf.xlu0
    %v1911 = vpop.trf.xlu0
    %v1912 = vpop.trf.xlu0
    %v1913 = vpop.trf.xlu0
    %v1914 = vpop.trf.xlu0
    %1915 = vxpose.xlu0.b32.start [1/16] %v1627, 128
    %1916 = vxpose.xlu0.b32.cont [2/16] %v1628, 128
    %1917 = vxpose.xlu0.b32.cont [3/16] %v1629, 128
    %1918 = vxpose.xlu0.b32.cont [4/16] %v1630, 128
    %1919 = vxpose.xlu0.b32.cont [5/16] %v1631, 128
    %1920 = vxpose.xlu0.b32.cont [6/16] %v1632, 128
    %1921 = vxpose.xlu0.b32.cont [7/16] %v1633, 128
    %1922 = vxpose.xlu0.b32.cont [8/16] %v1634, 128
    %1923 = vxpose.xlu0.b32.cont [9/16] %v1635, 128
    %1924 = vxpose.xlu0.b32.cont [10/16] %v1636, 128
    %1925 = vxpose.xlu0.b32.cont [11/16] %v1637, 128
    %1926 = vxpose.xlu0.b32.cont [12/16] %v1638, 128
    %1927 = vxpose.xlu0.b32.cont [13/16] %v1639, 128
    %1928 = vxpose.xlu0.b32.cont [14/16] %v1640, 128
    %1929 = vxpose.xlu0.b32.cont [15/16] %v1641, 128
    %1930 = vxpose.xlu0.b32.end [16/16] %v1642, 128
    %v1931 = vpop.trf.xlu0
    %v1932 = vpop.trf.xlu0
    %v1933 = vpop.trf.xlu0
    %v1934 = vpop.trf.xlu0
    %v1935 = vpop.trf.xlu0
    %v1936 = vpop.trf.xlu0
    %v1937 = vpop.trf.xlu0
    %v1938 = vpop.trf.xlu0
    %v1939 = vpop.trf.xlu0
    %v1940 = vpop.trf.xlu0
    %v1941 = vpop.trf.xlu0
    %v1942 = vpop.trf.xlu0
    %v1943 = vpop.trf.xlu0
    %v1944 = vpop.trf.xlu0
    %v1945 = vpop.trf.xlu0
    %v1946 = vpop.trf.xlu0
    %1947 = vxpose.xlu0.b32.start [1/16] %v1643, 128
    %1948 = vxpose.xlu0.b32.cont [2/16] %v1644, 128
    %1949 = vxpose.xlu0.b32.cont [3/16] %v1645, 128
    %1950 = vxpose.xlu0.b32.cont [4/16] %v1646, 128
    %1951 = vxpose.xlu0.b32.cont [5/16] %v1647, 128
    %1952 = vxpose.xlu0.b32.cont [6/16] %v1648, 128
    %1953 = vxpose.xlu0.b32.cont [7/16] %v1649, 128
    %1954 = vxpose.xlu0.b32.cont [8/16] %v1650, 128
    %1955 = vxpose.xlu0.b32.cont [9/16] %v1651, 128
    %1956 = vxpose.xlu0.b32.cont [10/16] %v1652, 128
    %1957 = vxpose.xlu0.b32.cont [11/16] %v1653, 128
    %1958 = vxpose.xlu0.b32.cont [12/16] %v1654, 128
    %1959 = vxpose.xlu0.b32.cont [13/16] %v1655, 128
    %1960 = vxpose.xlu0.b32.cont [14/16] %v1656, 128
    %1961 = vxpose.xlu0.b32.cont [15/16] %v1657, 128
    %1962 = vxpose.xlu0.b32.end [16/16] %v1658, 128
    %v1963 = vpop.trf.xlu0
    %v1964 = vpop.trf.xlu0
    %v1965 = vpop.trf.xlu0
    %v1966 = vpop.trf.xlu0
    %v1967 = vpop.trf.xlu0
    %v1968 = vpop.trf.xlu0
    %v1969 = vpop.trf.xlu0
    %v1970 = vpop.trf.xlu0
    %v1971 = vpop.trf.xlu0
    %v1972 = vpop.trf.xlu0
    %v1973 = vpop.trf.xlu0
    %v1974 = vpop.trf.xlu0
    %v1975 = vpop.trf.xlu0
    %v1976 = vpop.trf.xlu0
    %v1977 = vpop.trf.xlu0
    %v1978 = vpop.trf.xlu0
    %1979 = vxpose.xlu0.b32.start [1/16] %v1659, 128
    %1980 = vxpose.xlu0.b32.cont [2/16] %v1660, 128
    %1981 = vxpose.xlu0.b32.cont [3/16] %v1661, 128
    %1982 = vxpose.xlu0.b32.cont [4/16] %v1662, 128
    %1983 = vxpose.xlu0.b32.cont [5/16] %v1663, 128
    %1984 = vxpose.xlu0.b32.cont [6/16] %v1664, 128
    %1985 = vxpose.xlu0.b32.cont [7/16] %v1665, 128
    %1986 = vxpose.xlu0.b32.cont [8/16] %v1666, 128
    %1987 = vxpose.xlu0.b32.cont [9/16] %v1667, 128
    %1988 = vxpose.xlu0.b32.cont [10/16] %v1668, 128
    %1989 = vxpose.xlu0.b32.cont [11/16] %v1669, 128
    %1990 = vxpose.xlu0.b32.cont [12/16] %v1670, 128
    %1991 = vxpose.xlu0.b32.cont [13/16] %v1671, 128
    %1992 = vxpose.xlu0.b32.cont [14/16] %v1672, 128
    %1993 = vxpose.xlu0.b32.cont [15/16] %v1673, 128
    %1994 = vxpose.xlu0.b32.end [16/16] %v1674, 128
    %v1995 = vpop.trf.xlu0
    %v1996 = vpop.trf.xlu0
    %v1997 = vpop.trf.xlu0
    %v1998 = vpop.trf.xlu0
    %v1999 = vpop.trf.xlu0
    %v2000 = vpop.trf.xlu0
    %v2001 = vpop.trf.xlu0
    %v2002 = vpop.trf.xlu0
    %v2003 = vpop.trf.xlu0
    %v2004 = vpop.trf.xlu0
    %v2005 = vpop.trf.xlu0
    %v2006 = vpop.trf.xlu0
    %v2007 = vpop.trf.xlu0
    %v2008 = vpop.trf.xlu0
    %v2009 = vpop.trf.xlu0
    %v2010 = vpop.trf.xlu0
    %2011 = vxpose.xlu0.b32.start [1/16] %v1675, 128
    %2012 = vxpose.xlu0.b32.cont [2/16] %v1676, 128
    %2013 = vxpose.xlu0.b32.cont [3/16] %v1677, 128
    %2014 = vxpose.xlu0.b32.cont [4/16] %v1678, 128
    %2015 = vxpose.xlu0.b32.cont [5/16] %v1679, 128
    %2016 = vxpose.xlu0.b32.cont [6/16] %v1680, 128
    %2017 = vxpose.xlu0.b32.cont [7/16] %v1681, 128
    %2018 = vxpose.xlu0.b32.cont [8/16] %v1682, 128
    %2019 = vxpose.xlu0.b32.cont [9/16] %v1683, 128
    %2020 = vxpose.xlu0.b32.cont [10/16] %v1684, 128
    %2021 = vxpose.xlu0.b32.cont [11/16] %v1685, 128
    %2022 = vxpose.xlu0.b32.cont [12/16] %v1686, 128
    %2023 = vxpose.xlu0.b32.cont [13/16] %v1687, 128
    %2024 = vxpose.xlu0.b32.cont [14/16] %v1688, 128
    %2025 = vxpose.xlu0.b32.cont [15/16] %v1689, 128
    %2026 = vxpose.xlu0.b32.end [16/16] %v1690, 128
    %v2027 = vpop.trf.xlu0
    %v2028 = vpop.trf.xlu0
    %v2029 = vpop.trf.xlu0
    %v2030 = vpop.trf.xlu0
    %v2031 = vpop.trf.xlu0
    %v2032 = vpop.trf.xlu0
    %v2033 = vpop.trf.xlu0
    %v2034 = vpop.trf.xlu0
    %v2035 = vpop.trf.xlu0
    %v2036 = vpop.trf.xlu0
    %v2037 = vpop.trf.xlu0
    %v2038 = vpop.trf.xlu0
    %v2039 = vpop.trf.xlu0
    %v2040 = vpop.trf.xlu0
    %v2041 = vpop.trf.xlu0
    %v2042 = vpop.trf.xlu0
    %2043 = vxpose.xlu0.b32.start [1/16] %v1691, 128
    %2044 = vxpose.xlu0.b32.cont [2/16] %v1692, 128
    %2045 = vxpose.xlu0.b32.cont [3/16] %v1693, 128
    %2046 = vxpose.xlu0.b32.cont [4/16] %v1694, 128
    %2047 = vxpose.xlu0.b32.cont [5/16] %v1695, 128
    %2048 = vxpose.xlu0.b32.cont [6/16] %v1696, 128
    %2049 = vxpose.xlu0.b32.cont [7/16] %v1697, 128
    %2050 = vxpose.xlu0.b32.cont [8/16] %v1698, 128
    %2051 = vxpose.xlu0.b32.cont [9/16] %v1699, 128
    %2052 = vxpose.xlu0.b32.cont [10/16] %v1700, 128
    %2053 = vxpose.xlu0.b32.cont [11/16] %v1701, 128
    %2054 = vxpose.xlu0.b32.cont [12/16] %v1702, 128
    %2055 = vxpose.xlu0.b32.cont [13/16] %v1703, 128
    %2056 = vxpose.xlu0.b32.cont [14/16] %v1704, 128
    %2057 = vxpose.xlu0.b32.cont [15/16] %v1705, 128
    %2058 = vxpose.xlu0.b32.end [16/16] %v1706, 128
    %v2059 = vpop.trf.xlu0
    %v2060 = vpop.trf.xlu0
    %v2061 = vpop.trf.xlu0
    %v2062 = vpop.trf.xlu0
    %v2063 = vpop.trf.xlu0
    %v2064 = vpop.trf.xlu0
    %v2065 = vpop.trf.xlu0
    %v2066 = vpop.trf.xlu0
    %v2067 = vpop.trf.xlu0
    %v2068 = vpop.trf.xlu0
    %v2069 = vpop.trf.xlu0
    %v2070 = vpop.trf.xlu0
    %v2071 = vpop.trf.xlu0
    %v2072 = vpop.trf.xlu0
    %v2073 = vpop.trf.xlu0
    %v2074 = vpop.trf.xlu0
    %2075 = vxpose.xlu0.b32.start [1/16] %v1707, 128
    %2076 = vxpose.xlu0.b32.cont [2/16] %v1708, 128
    %2077 = vxpose.xlu0.b32.cont [3/16] %v1709, 128
    %2078 = vxpose.xlu0.b32.cont [4/16] %v1710, 128
    %2079 = vxpose.xlu0.b32.cont [5/16] %v1711, 128
    %2080 = vxpose.xlu0.b32.cont [6/16] %v1712, 128
    %2081 = vxpose.xlu0.b32.cont [7/16] %v1713, 128
    %2082 = vxpose.xlu0.b32.cont [8/16] %v1714, 128
    %2083 = vxpose.xlu0.b32.cont [9/16] %v1715, 128
    %2084 = vxpose.xlu0.b32.cont [10/16] %v1716, 128
    %2085 = vxpose.xlu0.b32.cont [11/16] %v1717, 128
    %2086 = vxpose.xlu0.b32.cont [12/16] %v1718, 128
    %2087 = vxpose.xlu0.b32.cont [13/16] %v1719, 128
    %2088 = vxpose.xlu0.b32.cont [14/16] %v1720, 128
    %2089 = vxpose.xlu0.b32.cont [15/16] %v1721, 128
    %2090 = vxpose.xlu0.b32.end [16/16] %v1722, 128
    %v2091 = vpop.trf.xlu0
    %v2092 = vpop.trf.xlu0
    %v2093 = vpop.trf.xlu0
    %v2094 = vpop.trf.xlu0
    %v2095 = vpop.trf.xlu0
    %v2096 = vpop.trf.xlu0
    %v2097 = vpop.trf.xlu0
    %v2098 = vpop.trf.xlu0
    %v2099 = vpop.trf.xlu0
    %v2100 = vpop.trf.xlu0
    %v2101 = vpop.trf.xlu0
    %v2102 = vpop.trf.xlu0
    %v2103 = vpop.trf.xlu0
    %v2104 = vpop.trf.xlu0
    %v2105 = vpop.trf.xlu0
    %v2106 = vpop.trf.xlu0
    %2107 = vxpose.xlu0.b32.start [1/16] %v1723, 128
    %2108 = vxpose.xlu0.b32.cont [2/16] %v1724, 128
    %2109 = vxpose.xlu0.b32.cont [3/16] %v1725, 128
    %2110 = vxpose.xlu0.b32.cont [4/16] %v1726, 128
    %2111 = vxpose.xlu0.b32.cont [5/16] %v1727, 128
    %2112 = vxpose.xlu0.b32.cont [6/16] %v1728, 128
    %2113 = vxpose.xlu0.b32.cont [7/16] %v1729, 128
    %2114 = vxpose.xlu0.b32.cont [8/16] %v1730, 128
    %2115 = vxpose.xlu0.b32.cont [9/16] %v1731, 128
    %2116 = vxpose.xlu0.b32.cont [10/16] %v1732, 128
    %2117 = vxpose.xlu0.b32.cont [11/16] %v1733, 128
    %2118 = vxpose.xlu0.b32.cont [12/16] %v1734, 128
    %2119 = vxpose.xlu0.b32.cont [13/16] %v1735, 128
    %2120 = vxpose.xlu0.b32.cont [14/16] %v1736, 128
    %2121 = vxpose.xlu0.b32.cont [15/16] %v1737, 128
    %2122 = vxpose.xlu0.b32.end [16/16] %v1738, 128
    %v2123 = vpop.trf.xlu0
    %v2124 = vpop.trf.xlu0
    %v2125 = vpop.trf.xlu0
    %v2126 = vpop.trf.xlu0
    %v2127 = vpop.trf.xlu0
    %v2128 = vpop.trf.xlu0
    %v2129 = vpop.trf.xlu0
    %v2130 = vpop.trf.xlu0
    %v2131 = vpop.trf.xlu0
    %v2132 = vpop.trf.xlu0
    %v2133 = vpop.trf.xlu0
    %v2134 = vpop.trf.xlu0
    %v2135 = vpop.trf.xlu0
    %v2136 = vpop.trf.xlu0
    %v2137 = vpop.trf.xlu0
    %v2138 = vpop.trf.xlu0
    %2139 = vxpose.xlu0.b32.start [1/16] %v1739, 128
    %2140 = vxpose.xlu0.b32.cont [2/16] %v1740, 128
    %2141 = vxpose.xlu0.b32.cont [3/16] %v1741, 128
    %2142 = vxpose.xlu0.b32.cont [4/16] %v1742, 128
    %2143 = vxpose.xlu0.b32.cont [5/16] %v1743, 128
    %2144 = vxpose.xlu0.b32.cont [6/16] %v1744, 128
    %2145 = vxpose.xlu0.b32.cont [7/16] %v1745, 128
    %2146 = vxpose.xlu0.b32.cont [8/16] %v1746, 128
    %2147 = vxpose.xlu0.b32.cont [9/16] %v1747, 128
    %2148 = vxpose.xlu0.b32.cont [10/16] %v1748, 128
    %2149 = vxpose.xlu0.b32.cont [11/16] %v1749, 128
    %2150 = vxpose.xlu0.b32.cont [12/16] %v1750, 128
    %2151 = vxpose.xlu0.b32.cont [13/16] %v1751, 128
    %2152 = vxpose.xlu0.b32.cont [14/16] %v1752, 128
    %2153 = vxpose.xlu0.b32.cont [15/16] %v1753, 128
    %2154 = vxpose.xlu0.b32.end [16/16] %v1754, 128
    %v2155 = vpop.trf.xlu0
    %v2156 = vpop.trf.xlu0
    %v2157 = vpop.trf.xlu0
    %v2158 = vpop.trf.xlu0
    %v2159 = vpop.trf.xlu0
    %v2160 = vpop.trf.xlu0
    %v2161 = vpop.trf.xlu0
    %v2162 = vpop.trf.xlu0
    %v2163 = vpop.trf.xlu0
    %v2164 = vpop.trf.xlu0
    %v2165 = vpop.trf.xlu0
    %v2166 = vpop.trf.xlu0
    %v2167 = vpop.trf.xlu0
    %v2168 = vpop.trf.xlu0
    %v2169 = vpop.trf.xlu0
    %v2170 = vpop.trf.xlu0
    %2171 = vxpose.xlu0.b32.start [1/16] %v1755, 128
    %2172 = vxpose.xlu0.b32.cont [2/16] %v1756, 128
    %2173 = vxpose.xlu0.b32.cont [3/16] %v1757, 128
    %2174 = vxpose.xlu0.b32.cont [4/16] %v1758, 128
    %2175 = vxpose.xlu0.b32.cont [5/16] %v1759, 128
    %2176 = vxpose.xlu0.b32.cont [6/16] %v1760, 128
    %2177 = vxpose.xlu0.b32.cont [7/16] %v1761, 128
    %2178 = vxpose.xlu0.b32.cont [8/16] %v1762, 128
    %2179 = vxpose.xlu0.b32.cont [9/16] %v1763, 128
    %2180 = vxpose.xlu0.b32.cont [10/16] %v1764, 128
    %2181 = vxpose.xlu0.b32.cont [11/16] %v1765, 128
    %2182 = vxpose.xlu0.b32.cont [12/16] %v1766, 128
    %2183 = vxpose.xlu0.b32.cont [13/16] %v1767, 128
    %2184 = vxpose.xlu0.b32.cont [14/16] %v1768, 128
    %2185 = vxpose.xlu0.b32.cont [15/16] %v1769, 128
    %2186 = vxpose.xlu0.b32.end [16/16] %v1770, 128
    %v2187 = vpop.trf.xlu0
    %v2188 = vpop.trf.xlu0
    %v2189 = vpop.trf.xlu0
    %v2190 = vpop.trf.xlu0
    %v2191 = vpop.trf.xlu0
    %v2192 = vpop.trf.xlu0
    %v2193 = vpop.trf.xlu0
    %v2194 = vpop.trf.xlu0
    %v2195 = vpop.trf.xlu0
    %v2196 = vpop.trf.xlu0
    %v2197 = vpop.trf.xlu0
    %v2198 = vpop.trf.xlu0
    %v2199 = vpop.trf.xlu0
    %v2200 = vpop.trf.xlu0
    %v2201 = vpop.trf.xlu0
    %v2202 = vpop.trf.xlu0
    %2203 = vxpose.xlu0.b32.start [1/16] %v1771, 128
    %2204 = vxpose.xlu0.b32.cont [2/16] %v1772, 128
    %2205 = vxpose.xlu0.b32.cont [3/16] %v1773, 128
    %2206 = vxpose.xlu0.b32.cont [4/16] %v1774, 128
    %2207 = vxpose.xlu0.b32.cont [5/16] %v1775, 128
    %2208 = vxpose.xlu0.b32.cont [6/16] %v1776, 128
    %2209 = vxpose.xlu0.b32.cont [7/16] %v1777, 128
    %2210 = vxpose.xlu0.b32.cont [8/16] %v1778, 128
    %2211 = vxpose.xlu0.b32.cont [9/16] %v1779, 128
    %2212 = vxpose.xlu0.b32.cont [10/16] %v1780, 128
    %2213 = vxpose.xlu0.b32.cont [11/16] %v1781, 128
    %2214 = vxpose.xlu0.b32.cont [12/16] %v1782, 128
    %2215 = vxpose.xlu0.b32.cont [13/16] %v1783, 128
    %2216 = vxpose.xlu0.b32.cont [14/16] %v1784, 128
    %2217 = vxpose.xlu0.b32.cont [15/16] %v1785, 128
    %2218 = vxpose.xlu0.b32.end [16/16] %v1786, 128
    %v2219 = vpop.trf.xlu0
    %v2220 = vpop.trf.xlu0
    %v2221 = vpop.trf.xlu0
    %v2222 = vpop.trf.xlu0
    %v2223 = vpop.trf.xlu0
    %v2224 = vpop.trf.xlu0
    %v2225 = vpop.trf.xlu0
    %v2226 = vpop.trf.xlu0
    %v2227 = vpop.trf.xlu0
    %v2228 = vpop.trf.xlu0
    %v2229 = vpop.trf.xlu0
    %v2230 = vpop.trf.xlu0
    %v2231 = vpop.trf.xlu0
    %v2232 = vpop.trf.xlu0
    %v2233 = vpop.trf.xlu0
    %v2234 = vpop.trf.xlu0
    %2235 = vxpose.xlu0.b32.start [1/16] %v1787, 128
    %2236 = vxpose.xlu0.b32.cont [2/16] %v1788, 128
    %2237 = vxpose.xlu0.b32.cont [3/16] %v1789, 128
    %2238 = vxpose.xlu0.b32.cont [4/16] %v1790, 128
    %2239 = vxpose.xlu0.b32.cont [5/16] %v1791, 128
    %2240 = vxpose.xlu0.b32.cont [6/16] %v1792, 128
    %2241 = vxpose.xlu0.b32.cont [7/16] %v1793, 128
    %2242 = vxpose.xlu0.b32.cont [8/16] %v1794, 128
    %2243 = vxpose.xlu0.b32.cont [9/16] %v1795, 128
    %2244 = vxpose.xlu0.b32.cont [10/16] %v1796, 128
    %2245 = vxpose.xlu0.b32.cont [11/16] %v1797, 128
    %2246 = vxpose.xlu0.b32.cont [12/16] %v1798, 128
    %2247 = vxpose.xlu0.b32.cont [13/16] %v1799, 128
    %2248 = vxpose.xlu0.b32.cont [14/16] %v1800, 128
    %2249 = vxpose.xlu0.b32.cont [15/16] %v1801, 128
    %2250 = vxpose.xlu0.b32.end [16/16] %v1802, 128
    %v2251 = vpop.trf.xlu0
    %v2252 = vpop.trf.xlu0
    %v2253 = vpop.trf.xlu0
    %v2254 = vpop.trf.xlu0
    %v2255 = vpop.trf.xlu0
    %v2256 = vpop.trf.xlu0
    %v2257 = vpop.trf.xlu0
    %v2258 = vpop.trf.xlu0
    %v2259 = vpop.trf.xlu0
    %v2260 = vpop.trf.xlu0
    %v2261 = vpop.trf.xlu0
    %v2262 = vpop.trf.xlu0
    %v2263 = vpop.trf.xlu0
    %v2264 = vpop.trf.xlu0
    %v2265 = vpop.trf.xlu0
    %v2266 = vpop.trf.xlu0
    %2267 = vxpose.xlu0.b32.start [1/16] %v1803, 128
    %2268 = vxpose.xlu0.b32.cont [2/16] %v1804, 128
    %2269 = vxpose.xlu0.b32.cont [3/16] %v1805, 128
    %2270 = vxpose.xlu0.b32.cont [4/16] %v1806, 128
    %2271 = vxpose.xlu0.b32.cont [5/16] %v1807, 128
    %2272 = vxpose.xlu0.b32.cont [6/16] %v1808, 128
    %2273 = vxpose.xlu0.b32.cont [7/16] %v1809, 128
    %2274 = vxpose.xlu0.b32.cont [8/16] %v1810, 128
    %2275 = vxpose.xlu0.b32.cont [9/16] %v1811, 128
    %2276 = vxpose.xlu0.b32.cont [10/16] %v1812, 128
    %2277 = vxpose.xlu0.b32.cont [11/16] %v1813, 128
    %2278 = vxpose.xlu0.b32.cont [12/16] %v1814, 128
    %2279 = vxpose.xlu0.b32.cont [13/16] %v1815, 128
    %2280 = vxpose.xlu0.b32.cont [14/16] %v1816, 128
    %2281 = vxpose.xlu0.b32.cont [15/16] %v1817, 128
    %2282 = vxpose.xlu0.b32.end [16/16] %v1818, 128
    %v2283 = vpop.trf.xlu0
    %v2284 = vpop.trf.xlu0
    %v2285 = vpop.trf.xlu0
    %v2286 = vpop.trf.xlu0
    %v2287 = vpop.trf.xlu0
    %v2288 = vpop.trf.xlu0
    %v2289 = vpop.trf.xlu0
    %v2290 = vpop.trf.xlu0
    %v2291 = vpop.trf.xlu0
    %v2292 = vpop.trf.xlu0
    %v2293 = vpop.trf.xlu0
    %v2294 = vpop.trf.xlu0
    %v2295 = vpop.trf.xlu0
    %v2296 = vpop.trf.xlu0
    %v2297 = vpop.trf.xlu0
    %v2298 = vpop.trf.xlu0
    %2299 = vxpose.xlu0.b32.start [1/16] %v1819, 128
    %2300 = vxpose.xlu0.b32.cont [2/16] %v1820, 128
    %2301 = vxpose.xlu0.b32.cont [3/16] %v1821, 128
    %2302 = vxpose.xlu0.b32.cont [4/16] %v1822, 128
    %2303 = vxpose.xlu0.b32.cont [5/16] %v1823, 128
    %2304 = vxpose.xlu0.b32.cont [6/16] %v1824, 128
    %2305 = vxpose.xlu0.b32.cont [7/16] %v1825, 128
    %2306 = vxpose.xlu0.b32.cont [8/16] %v1826, 128
    %2307 = vxpose.xlu0.b32.cont [9/16] %v1827, 128
    %2308 = vxpose.xlu0.b32.cont [10/16] %v1828, 128
    %2309 = vxpose.xlu0.b32.cont [11/16] %v1829, 128
    %2310 = vxpose.xlu0.b32.cont [12/16] %v1830, 128
    %2311 = vxpose.xlu0.b32.cont [13/16] %v1831, 128
    %2312 = vxpose.xlu0.b32.cont [14/16] %v1832, 128
    %2313 = vxpose.xlu0.b32.cont [15/16] %v1833, 128
    %2314 = vxpose.xlu0.b32.end [16/16] %v1834, 128
    %v2315 = vpop.trf.xlu0
    %v2316 = vpop.trf.xlu0
    %v2317 = vpop.trf.xlu0
    %v2318 = vpop.trf.xlu0
    %v2319 = vpop.trf.xlu0
    %v2320 = vpop.trf.xlu0
    %v2321 = vpop.trf.xlu0
    %v2322 = vpop.trf.xlu0
    %v2323 = vpop.trf.xlu0
    %v2324 = vpop.trf.xlu0
    %v2325 = vpop.trf.xlu0
    %v2326 = vpop.trf.xlu0
    %v2327 = vpop.trf.xlu0
    %v2328 = vpop.trf.xlu0
    %v2329 = vpop.trf.xlu0
    %v2330 = vpop.trf.xlu0
    %2331 = vxpose.xlu0.b32.start [1/16] %v1835, 128
    %2332 = vxpose.xlu0.b32.cont [2/16] %v1836, 128
    %2333 = vxpose.xlu0.b32.cont [3/16] %v1837, 128
    %2334 = vxpose.xlu0.b32.cont [4/16] %v1838, 128
    %2335 = vxpose.xlu0.b32.cont [5/16] %v1839, 128
    %2336 = vxpose.xlu0.b32.cont [6/16] %v1840, 128
    %2337 = vxpose.xlu0.b32.cont [7/16] %v1841, 128
    %2338 = vxpose.xlu0.b32.cont [8/16] %v1842, 128
    %2339 = vxpose.xlu0.b32.cont [9/16] %v1843, 128
    %2340 = vxpose.xlu0.b32.cont [10/16] %v1844, 128
    %2341 = vxpose.xlu0.b32.cont [11/16] %v1845, 128
    %2342 = vxpose.xlu0.b32.cont [12/16] %v1846, 128
    %2343 = vxpose.xlu0.b32.cont [13/16] %v1847, 128
    %2344 = vxpose.xlu0.b32.cont [14/16] %v1848, 128
    %2345 = vxpose.xlu0.b32.cont [15/16] %v1849, 128
    %2346 = vxpose.xlu0.b32.end [16/16] %v1850, 128
    %v2347 = vpop.trf.xlu0
    %v2348 = vpop.trf.xlu0
    %v2349 = vpop.trf.xlu0
    %v2350 = vpop.trf.xlu0
    %v2351 = vpop.trf.xlu0
    %v2352 = vpop.trf.xlu0
    %v2353 = vpop.trf.xlu0
    %v2354 = vpop.trf.xlu0
    %v2355 = vpop.trf.xlu0
    %v2356 = vpop.trf.xlu0
    %v2357 = vpop.trf.xlu0
    %v2358 = vpop.trf.xlu0
    %v2359 = vpop.trf.xlu0
    %v2360 = vpop.trf.xlu0
    %v2361 = vpop.trf.xlu0
    %v2362 = vpop.trf.xlu0
    %v2363 = vld [vmem:[#allocation3] sm:$0xff]
    %v2364 = vld [vmem:[#allocation3 + $0x10] sm:$0xff]
    %v2367 = vcombine.high %v2363, %v2363
    %v2369 = vunpack.c.l.s4 1966171168
    %v2370 = vunpack.c.0.s8 %v2369
    %v2371 = vlaneseq
    %v2372 = vshrl.u32 %v2371, 7
    %v2373 = vsub.s32 %v2370, %v2372
    %v2374 = vrot.slane %v2363, %v2373
    %v2376 = vunpack.c.l.s4 1966171168
    %v2377 = vunpack.c.0.s8 %v2376
    %v2378 = vlaneseq
    %v2379 = vshrl.u32 %v2378, 7
    %v2380 = vsub.s32 %v2377, %v2379
    %v2381 = vrot.slane %v2367, %v2380
    %v2382 = vcombine.high %v2374, %v2374
    %v2383 = vcombine.high %v2381, %v2381
    %v2385 = vunpack.c.l.s4 1966171168
    %v2386 = vunpack.c.0.s8 %v2385
    %v2387 = vlaneseq
    %v2388 = vshrl.u32 %v2387, 7
    %v2389 = vsub.s32 %v2386, %v2388
    %v2390 = vrot.slane %v2374, %v2389
    %v2392 = vunpack.c.l.s4 1966171168
    %v2393 = vunpack.c.0.s8 %v2392
    %v2394 = vlaneseq
    %v2395 = vshrl.u32 %v2394, 7
    %v2396 = vsub.s32 %v2393, %v2395
    %v2397 = vrot.slane %v2381, %v2396
    %v2399 = vunpack.c.l.s4 1966171168
    %v2400 = vunpack.c.0.s8 %v2399
    %v2401 = vlaneseq
    %v2402 = vshrl.u32 %v2401, 7
    %v2403 = vsub.s32 %v2400, %v2402
    %v2404 = vrot.slane %v2382, %v2403
    %v2406 = vunpack.c.l.s4 1966171168
    %v2407 = vunpack.c.0.s8 %v2406
    %v2408 = vlaneseq
    %v2409 = vshrl.u32 %v2408, 7
    %v2410 = vsub.s32 %v2407, %v2409
    %v2411 = vrot.slane %v2383, %v2410
    %v2412 = vcombine.high %v2390, %v2390
    %v2413 = vcombine.high %v2397, %v2397
    %v2414 = vcombine.high %v2404, %v2404
    %v2415 = vcombine.high %v2411, %v2411
    %v2416 = vcombine.high %v2364, %v2364
    %v2418 = vunpack.c.l.s4 1966171168
    %v2419 = vunpack.c.0.s8 %v2418
    %v2420 = vlaneseq
    %v2421 = vshrl.u32 %v2420, 7
    %v2422 = vsub.s32 %v2419, %v2421
    %v2423 = vrot.slane %v2364, %v2422
    %v2425 = vunpack.c.l.s4 1966171168
    %v2426 = vunpack.c.0.s8 %v2425
    %v2427 = vlaneseq
    %v2428 = vshrl.u32 %v2427, 7
    %v2429 = vsub.s32 %v2426, %v2428
    %v2430 = vrot.slane %v2416, %v2429
    %v2431 = vcombine.high %v2423, %v2423
    %v2432 = vcombine.high %v2430, %v2430
    %v2434 = vunpack.c.l.s4 1966171168
    %v2435 = vunpack.c.0.s8 %v2434
    %v2436 = vlaneseq
    %v2437 = vshrl.u32 %v2436, 7
    %v2438 = vsub.s32 %v2435, %v2437
    %v2439 = vrot.slane %v2423, %v2438
    %v2441 = vunpack.c.l.s4 1966171168
    %v2442 = vunpack.c.0.s8 %v2441
    %v2443 = vlaneseq
    %v2444 = vshrl.u32 %v2443, 7
    %v2445 = vsub.s32 %v2442, %v2444
    %v2446 = vrot.slane %v2430, %v2445
    %v2448 = vunpack.c.l.s4 1966171168
    %v2449 = vunpack.c.0.s8 %v2448
    %v2450 = vlaneseq
    %v2451 = vshrl.u32 %v2450, 7
    %v2452 = vsub.s32 %v2449, %v2451
    %v2453 = vrot.slane %v2431, %v2452
    %v2455 = vunpack.c.l.s4 1966171168
    %v2456 = vunpack.c.0.s8 %v2455
    %v2457 = vlaneseq
    %v2458 = vshrl.u32 %v2457, 7
    %v2459 = vsub.s32 %v2456, %v2458
    %v2460 = vrot.slane %v2432, %v2459
    %v2461 = vcombine.high %v2439, %v2439
    %v2462 = vcombine.high %v2446, %v2446
    %v2463 = vcombine.high %v2453, %v2453
    %v2464 = vcombine.high %v2460, %v2460
    %v2465 = vlaneseq
    %v2466 = vshrl.u32 %v2465, 7
    %v2467 = vsub.s32 0, %v2466
    %v2468 = vrot.slane %v2390, %v2467
    %v2469 = vlaneseq
    %v2470 = vshrl.u32 %v2469, 7
    %v2471 = vsub.s32 0, %v2470
    %v2472 = vrot.slane %v2404, %v2471
    %v2473 = vlaneseq
    %v2474 = vshrl.u32 %v2473, 7
    %v2475 = vsub.s32 0, %v2474
    %v2476 = vrot.slane %v2412, %v2475
    %v2477 = vlaneseq
    %v2478 = vshrl.u32 %v2477, 7
    %v2479 = vsub.s32 0, %v2478
    %v2480 = vrot.slane %v2414, %v2479
    %v2481 = vlaneseq
    %v2482 = vshrl.u32 %v2481, 7
    %v2483 = vsub.s32 0, %v2482
    %v2484 = vrot.slane %v2397, %v2483
    %v2485 = vlaneseq
    %v2486 = vshrl.u32 %v2485, 7
    %v2487 = vsub.s32 0, %v2486
    %v2488 = vrot.slane %v2411, %v2487
    %v2489 = vlaneseq
    %v2490 = vshrl.u32 %v2489, 7
    %v2491 = vsub.s32 0, %v2490
    %v2492 = vrot.slane %v2413, %v2491
    %v2493 = vlaneseq
    %v2494 = vshrl.u32 %v2493, 7
    %v2495 = vsub.s32 0, %v2494
    %v2496 = vrot.slane %v2415, %v2495
    %v2497 = vlaneseq
    %v2498 = vshrl.u32 %v2497, 7
    %v2499 = vsub.s32 0, %v2498
    %v2500 = vrot.slane %v2439, %v2499
    %v2501 = vlaneseq
    %v2502 = vshrl.u32 %v2501, 7
    %v2503 = vsub.s32 0, %v2502
    %v2504 = vrot.slane %v2453, %v2503
    %v2505 = vlaneseq
    %v2506 = vshrl.u32 %v2505, 7
    %v2507 = vsub.s32 0, %v2506
    %v2508 = vrot.slane %v2461, %v2507
    %v2509 = vlaneseq
    %v2510 = vshrl.u32 %v2509, 7
    %v2511 = vsub.s32 0, %v2510
    %v2512 = vrot.slane %v2463, %v2511
    %v2513 = vlaneseq
    %v2514 = vshrl.u32 %v2513, 7
    %v2515 = vsub.s32 0, %v2514
    %v2516 = vrot.slane %v2446, %v2515
    %v2517 = vlaneseq
    %v2518 = vshrl.u32 %v2517, 7
    %v2519 = vsub.s32 0, %v2518
    %v2520 = vrot.slane %v2460, %v2519
    %v2521 = vlaneseq
    %v2522 = vshrl.u32 %v2521, 7
    %v2523 = vsub.s32 0, %v2522
    %v2524 = vrot.slane %v2462, %v2523
    %v2525 = vlaneseq
    %v2526 = vshrl.u32 %v2525, 7
    %v2527 = vsub.s32 0, %v2526
    %v2528 = vrot.slane %v2464, %v2527
    %v2545 = vadd.f32 %v1867, %v2468
    %v2546 = vadd.f32 %v1868, %v2468
    %v2547 = vadd.f32 %v1869, %v2468
    %v2548 = vadd.f32 %v1870, %v2468
    %v2549 = vadd.f32 %v1871, %v2468
    %v2550 = vadd.f32 %v1872, %v2468
    %v2551 = vadd.f32 %v1873, %v2468
    %v2552 = vadd.f32 %v1874, %v2468
    %v2553 = vadd.f32 %v1875, %v2468
    %v2554 = vadd.f32 %v1876, %v2468
    %v2555 = vadd.f32 %v1877, %v2468
    %v2556 = vadd.f32 %v1878, %v2468
    %v2557 = vadd.f32 %v1879, %v2468
    %v2558 = vadd.f32 %v1880, %v2468
    %v2559 = vadd.f32 %v1881, %v2468
    %v2560 = vadd.f32 %v1882, %v2468
    %v2561 = vadd.f32 %v1899, %v2472
    %v2562 = vadd.f32 %v1900, %v2472
    %v2563 = vadd.f32 %v1901, %v2472
    %v2564 = vadd.f32 %v1902, %v2472
    %v2565 = vadd.f32 %v1903, %v2472
    %v2566 = vadd.f32 %v1904, %v2472
    %v2567 = vadd.f32 %v1905, %v2472
    %v2568 = vadd.f32 %v1906, %v2472
    %v2569 = vadd.f32 %v1907, %v2472
    %v2570 = vadd.f32 %v1908, %v2472
    %v2571 = vadd.f32 %v1909, %v2472
    %v2572 = vadd.f32 %v1910, %v2472
    %v2573 = vadd.f32 %v1911, %v2472
    %v2574 = vadd.f32 %v1912, %v2472
    %v2575 = vadd.f32 %v1913, %v2472
    %v2576 = vadd.f32 %v1914, %v2472
    %v2577 = vadd.f32 %v1931, %v2476
    %v2578 = vadd.f32 %v1932, %v2476
    %v2579 = vadd.f32 %v1933, %v2476
    %v2580 = vadd.f32 %v1934, %v2476
    %v2581 = vadd.f32 %v1935, %v2476
    %v2582 = vadd.f32 %v1936, %v2476
    %v2583 = vadd.f32 %v1937, %v2476
    %v2584 = vadd.f32 %v1938, %v2476
    %v2585 = vadd.f32 %v1939, %v2476
    %v2586 = vadd.f32 %v1940, %v2476
    %v2587 = vadd.f32 %v1941, %v2476
    %v2588 = vadd.f32 %v1942, %v2476
    %v2589 = vadd.f32 %v1943, %v2476
    %v2590 = vadd.f32 %v1944, %v2476
    %v2591 = vadd.f32 %v1945, %v2476
    %v2592 = vadd.f32 %v1946, %v2476
    %v2593 = vadd.f32 %v1963, %v2480
    %v2594 = vadd.f32 %v1964, %v2480
    %v2595 = vadd.f32 %v1965, %v2480
    %v2596 = vadd.f32 %v1966, %v2480
    %v2597 = vadd.f32 %v1967, %v2480
    %v2598 = vadd.f32 %v1968, %v2480
    %v2599 = vadd.f32 %v1969, %v2480
    %v2600 = vadd.f32 %v1970, %v2480
    %v2601 = vadd.f32 %v1971, %v2480
    %v2602 = vadd.f32 %v1972, %v2480
    %v2603 = vadd.f32 %v1973, %v2480
    %v2604 = vadd.f32 %v1974, %v2480
    %v2605 = vadd.f32 %v1975, %v2480
    %v2606 = vadd.f32 %v1976, %v2480
    %v2607 = vadd.f32 %v1977, %v2480
    %v2608 = vadd.f32 %v1978, %v2480
    %v2609 = vadd.f32 %v1995, %v2484
    %v2610 = vadd.f32 %v1996, %v2484
    %v2611 = vadd.f32 %v1997, %v2484
    %v2612 = vadd.f32 %v1998, %v2484
    %v2613 = vadd.f32 %v1999, %v2484
    %v2614 = vadd.f32 %v2000, %v2484
    %v2615 = vadd.f32 %v2001, %v2484
    %v2616 = vadd.f32 %v2002, %v2484
    %v2617 = vadd.f32 %v2003, %v2484
    %v2618 = vadd.f32 %v2004, %v2484
    %v2619 = vadd.f32 %v2005, %v2484
    %v2620 = vadd.f32 %v2006, %v2484
    %v2621 = vadd.f32 %v2007, %v2484
    %v2622 = vadd.f32 %v2008, %v2484
    %v2623 = vadd.f32 %v2009, %v2484
    %v2624 = vadd.f32 %v2010, %v2484
    %v2625 = vadd.f32 %v2027, %v2488
    %v2626 = vadd.f32 %v2028, %v2488
    %v2627 = vadd.f32 %v2029, %v2488
    %v2628 = vadd.f32 %v2030, %v2488
    %v2629 = vadd.f32 %v2031, %v2488
    %v2630 = vadd.f32 %v2032, %v2488
    %v2631 = vadd.f32 %v2033, %v2488
    %v2632 = vadd.f32 %v2034, %v2488
    %v2633 = vadd.f32 %v2035, %v2488
    %v2634 = vadd.f32 %v2036, %v2488
    %v2635 = vadd.f32 %v2037, %v2488
    %v2636 = vadd.f32 %v2038, %v2488
    %v2637 = vadd.f32 %v2039, %v2488
    %v2638 = vadd.f32 %v2040, %v2488
    %v2639 = vadd.f32 %v2041, %v2488
    %v2640 = vadd.f32 %v2042, %v2488
    %v2641 = vadd.f32 %v2059, %v2492
    %v2642 = vadd.f32 %v2060, %v2492
    %v2643 = vadd.f32 %v2061, %v2492
    %v2644 = vadd.f32 %v2062, %v2492
    %v2645 = vadd.f32 %v2063, %v2492
    %v2646 = vadd.f32 %v2064, %v2492
    %v2647 = vadd.f32 %v2065, %v2492
    %v2648 = vadd.f32 %v2066, %v2492
    %v2649 = vadd.f32 %v2067, %v2492
    %v2650 = vadd.f32 %v2068, %v2492
    %v2651 = vadd.f32 %v2069, %v2492
    %v2652 = vadd.f32 %v2070, %v2492
    %v2653 = vadd.f32 %v2071, %v2492
    %v2654 = vadd.f32 %v2072, %v2492
    %v2655 = vadd.f32 %v2073, %v2492
    %v2656 = vadd.f32 %v2074, %v2492
    %v2657 = vadd.f32 %v2091, %v2496
    %v2658 = vadd.f32 %v2092, %v2496
    %v2659 = vadd.f32 %v2093, %v2496
    %v2660 = vadd.f32 %v2094, %v2496
    %v2661 = vadd.f32 %v2095, %v2496
    %v2662 = vadd.f32 %v2096, %v2496
    %v2663 = vadd.f32 %v2097, %v2496
    %v2664 = vadd.f32 %v2098, %v2496
    %v2665 = vadd.f32 %v2099, %v2496
    %v2666 = vadd.f32 %v2100, %v2496
    %v2667 = vadd.f32 %v2101, %v2496
    %v2668 = vadd.f32 %v2102, %v2496
    %v2669 = vadd.f32 %v2103, %v2496
    %v2670 = vadd.f32 %v2104, %v2496
    %v2671 = vadd.f32 %v2105, %v2496
    %v2672 = vadd.f32 %v2106, %v2496
    %v2673 = vadd.f32 %v2123, %v2500
    %v2674 = vadd.f32 %v2124, %v2500
    %v2675 = vadd.f32 %v2125, %v2500
    %v2676 = vadd.f32 %v2126, %v2500
    %v2677 = vadd.f32 %v2127, %v2500
    %v2678 = vadd.f32 %v2128, %v2500
    %v2679 = vadd.f32 %v2129, %v2500
    %v2680 = vadd.f32 %v2130, %v2500
    %v2681 = vadd.f32 %v2131, %v2500
    %v2682 = vadd.f32 %v2132, %v2500
    %v2683 = vadd.f32 %v2133, %v2500
    %v2684 = vadd.f32 %v2134, %v2500
    %v2685 = vadd.f32 %v2135, %v2500
    %v2686 = vadd.f32 %v2136, %v2500
    %v2687 = vadd.f32 %v2137, %v2500
    %v2688 = vadd.f32 %v2138, %v2500
    %v2689 = vadd.f32 %v2155, %v2504
    %v2690 = vadd.f32 %v2156, %v2504
    %v2691 = vadd.f32 %v2157, %v2504
    %v2692 = vadd.f32 %v2158, %v2504
    %v2693 = vadd.f32 %v2159, %v2504
    %v2694 = vadd.f32 %v2160, %v2504
    %v2695 = vadd.f32 %v2161, %v2504
    %v2696 = vadd.f32 %v2162, %v2504
    %v2697 = vadd.f32 %v2163, %v2504
    %v2698 = vadd.f32 %v2164, %v2504
    %v2699 = vadd.f32 %v2165, %v2504
    %v2700 = vadd.f32 %v2166, %v2504
    %v2701 = vadd.f32 %v2167, %v2504
    %v2702 = vadd.f32 %v2168, %v2504
    %v2703 = vadd.f32 %v2169, %v2504
    %v2704 = vadd.f32 %v2170, %v2504
    %v2705 = vadd.f32 %v2187, %v2508
    %v2706 = vadd.f32 %v2188, %v2508
    %v2707 = vadd.f32 %v2189, %v2508
    %v2708 = vadd.f32 %v2190, %v2508
    %v2709 = vadd.f32 %v2191, %v2508
    %v2710 = vadd.f32 %v2192, %v2508
    %v2711 = vadd.f32 %v2193, %v2508
    %v2712 = vadd.f32 %v2194, %v2508
    %v2713 = vadd.f32 %v2195, %v2508
    %v2714 = vadd.f32 %v2196, %v2508
    %v2715 = vadd.f32 %v2197, %v2508
    %v2716 = vadd.f32 %v2198, %v2508
    %v2717 = vadd.f32 %v2199, %v2508
    %v2718 = vadd.f32 %v2200, %v2508
    %v2719 = vadd.f32 %v2201, %v2508
    %v2720 = vadd.f32 %v2202, %v2508
    %v2721 = vadd.f32 %v2219, %v2512
    %v2722 = vadd.f32 %v2220, %v2512
    %v2723 = vadd.f32 %v2221, %v2512
    %v2724 = vadd.f32 %v2222, %v2512
    %v2725 = vadd.f32 %v2223, %v2512
    %v2726 = vadd.f32 %v2224, %v2512
    %v2727 = vadd.f32 %v2225, %v2512
    %v2728 = vadd.f32 %v2226, %v2512
    %v2729 = vadd.f32 %v2227, %v2512
    %v2730 = vadd.f32 %v2228, %v2512
    %v2731 = vadd.f32 %v2229, %v2512
    %v2732 = vadd.f32 %v2230, %v2512
    %v2733 = vadd.f32 %v2231, %v2512
    %v2734 = vadd.f32 %v2232, %v2512
    %v2735 = vadd.f32 %v2233, %v2512
    %v2736 = vadd.f32 %v2234, %v2512
    %v2737 = vadd.f32 %v2251, %v2516
    %v2738 = vadd.f32 %v2252, %v2516
    %v2739 = vadd.f32 %v2253, %v2516
    %v2740 = vadd.f32 %v2254, %v2516
    %v2741 = vadd.f32 %v2255, %v2516
    %v2742 = vadd.f32 %v2256, %v2516
    %v2743 = vadd.f32 %v2257, %v2516
    %v2744 = vadd.f32 %v2258, %v2516
    %v2745 = vadd.f32 %v2259, %v2516
    %v2746 = vadd.f32 %v2260, %v2516
    %v2747 = vadd.f32 %v2261, %v2516
    %v2748 = vadd.f32 %v2262, %v2516
    %v2749 = vadd.f32 %v2263, %v2516
    %v2750 = vadd.f32 %v2264, %v2516
    %v2751 = vadd.f32 %v2265, %v2516
    %v2752 = vadd.f32 %v2266, %v2516
    %v2753 = vadd.f32 %v2283, %v2520
    %v2754 = vadd.f32 %v2284, %v2520
    %v2755 = vadd.f32 %v2285, %v2520
    %v2756 = vadd.f32 %v2286, %v2520
    %v2757 = vadd.f32 %v2287, %v2520
    %v2758 = vadd.f32 %v2288, %v2520
    %v2759 = vadd.f32 %v2289, %v2520
    %v2760 = vadd.f32 %v2290, %v2520
    %v2761 = vadd.f32 %v2291, %v2520
    %v2762 = vadd.f32 %v2292, %v2520
    %v2763 = vadd.f32 %v2293, %v2520
    %v2764 = vadd.f32 %v2294, %v2520
    %v2765 = vadd.f32 %v2295, %v2520
    %v2766 = vadd.f32 %v2296, %v2520
    %v2767 = vadd.f32 %v2297, %v2520
    %v2768 = vadd.f32 %v2298, %v2520
    %v2769 = vadd.f32 %v2315, %v2524
    %v2770 = vadd.f32 %v2316, %v2524
    %v2771 = vadd.f32 %v2317, %v2524
    %v2772 = vadd.f32 %v2318, %v2524
    %v2773 = vadd.f32 %v2319, %v2524
    %v2774 = vadd.f32 %v2320, %v2524
    %v2775 = vadd.f32 %v2321, %v2524
    %v2776 = vadd.f32 %v2322, %v2524
    %v2777 = vadd.f32 %v2323, %v2524
    %v2778 = vadd.f32 %v2324, %v2524
    %v2779 = vadd.f32 %v2325, %v2524
    %v2780 = vadd.f32 %v2326, %v2524
    %v2781 = vadd.f32 %v2327, %v2524
    %v2782 = vadd.f32 %v2328, %v2524
    %v2783 = vadd.f32 %v2329, %v2524
    %v2784 = vadd.f32 %v2330, %v2524
    %v2785 = vadd.f32 %v2347, %v2528
    %v2786 = vadd.f32 %v2348, %v2528
    %v2787 = vadd.f32 %v2349, %v2528
    %v2788 = vadd.f32 %v2350, %v2528
    %v2789 = vadd.f32 %v2351, %v2528
    %v2790 = vadd.f32 %v2352, %v2528
    %v2791 = vadd.f32 %v2353, %v2528
    %v2792 = vadd.f32 %v2354, %v2528
    %v2793 = vadd.f32 %v2355, %v2528
    %v2794 = vadd.f32 %v2356, %v2528
    %v2795 = vadd.f32 %v2357, %v2528
    %v2796 = vadd.f32 %v2358, %v2528
    %v2797 = vadd.f32 %v2359, %v2528
    %v2798 = vadd.f32 %v2360, %v2528
    %v2799 = vadd.f32 %v2361, %v2528
    %v2800 = vadd.f32 %v2362, %v2528
    %v2801 = vmax.f32 %v2545, 0.0
    %v2802 = vmax.f32 %v2546, 0.0
    %v2803 = vmax.f32 %v2547, 0.0
    %v2804 = vmax.f32 %v2548, 0.0
    %v2805 = vmax.f32 %v2549, 0.0
    %v2806 = vmax.f32 %v2550, 0.0
    %v2807 = vmax.f32 %v2551, 0.0
    %v2808 = vmax.f32 %v2552, 0.0
    %v2809 = vmax.f32 %v2553, 0.0
    %v2810 = vmax.f32 %v2554, 0.0
    %v2811 = vmax.f32 %v2555, 0.0
    %v2812 = vmax.f32 %v2556, 0.0
    %v2813 = vmax.f32 %v2557, 0.0
    %v2814 = vmax.f32 %v2558, 0.0
    %v2815 = vmax.f32 %v2559, 0.0
    %v2816 = vmax.f32 %v2560, 0.0
    %v2817 = vmax.f32 %v2561, 0.0
    %v2818 = vmax.f32 %v2562, 0.0
    %v2819 = vmax.f32 %v2563, 0.0
    %v2820 = vmax.f32 %v2564, 0.0
    %v2821 = vmax.f32 %v2565, 0.0
    %v2822 = vmax.f32 %v2566, 0.0
    %v2823 = vmax.f32 %v2567, 0.0
    %v2824 = vmax.f32 %v2568, 0.0
    %v2825 = vmax.f32 %v2569, 0.0
    %v2826 = vmax.f32 %v2570, 0.0
    %v2827 = vmax.f32 %v2571, 0.0
    %v2828 = vmax.f32 %v2572, 0.0
    %v2829 = vmax.f32 %v2573, 0.0
    %v2830 = vmax.f32 %v2574, 0.0
    %v2831 = vmax.f32 %v2575, 0.0
    %v2832 = vmax.f32 %v2576, 0.0
    %v2833 = vmax.f32 %v2577, 0.0
    %v2834 = vmax.f32 %v2578, 0.0
    %v2835 = vmax.f32 %v2579, 0.0
    %v2836 = vmax.f32 %v2580, 0.0
    %v2837 = vmax.f32 %v2581, 0.0
    %v2838 = vmax.f32 %v2582, 0.0
    %v2839 = vmax.f32 %v2583, 0.0
    %v2840 = vmax.f32 %v2584, 0.0
    %v2841 = vmax.f32 %v2585, 0.0
    %v2842 = vmax.f32 %v2586, 0.0
    %v2843 = vmax.f32 %v2587, 0.0
    %v2844 = vmax.f32 %v2588, 0.0
    %v2845 = vmax.f32 %v2589, 0.0
    %v2846 = vmax.f32 %v2590, 0.0
    %v2847 = vmax.f32 %v2591, 0.0
    %v2848 = vmax.f32 %v2592, 0.0
    %v2849 = vmax.f32 %v2593, 0.0
    %v2850 = vmax.f32 %v2594, 0.0
    %v2851 = vmax.f32 %v2595, 0.0
    %v2852 = vmax.f32 %v2596, 0.0
    %v2853 = vmax.f32 %v2597, 0.0
    %v2854 = vmax.f32 %v2598, 0.0
    %v2855 = vmax.f32 %v2599, 0.0
    %v2856 = vmax.f32 %v2600, 0.0
    %v2857 = vmax.f32 %v2601, 0.0
    %v2858 = vmax.f32 %v2602, 0.0
    %v2859 = vmax.f32 %v2603, 0.0
    %v2860 = vmax.f32 %v2604, 0.0
    %v2861 = vmax.f32 %v2605, 0.0
    %v2862 = vmax.f32 %v2606, 0.0
    %v2863 = vmax.f32 %v2607, 0.0
    %v2864 = vmax.f32 %v2608, 0.0
    %v2865 = vmax.f32 %v2609, 0.0
    %v2866 = vmax.f32 %v2610, 0.0
    %v2867 = vmax.f32 %v2611, 0.0
    %v2868 = vmax.f32 %v2612, 0.0
    %v2869 = vmax.f32 %v2613, 0.0
    %v2870 = vmax.f32 %v2614, 0.0
    %v2871 = vmax.f32 %v2615, 0.0
    %v2872 = vmax.f32 %v2616, 0.0
    %v2873 = vmax.f32 %v2617, 0.0
    %v2874 = vmax.f32 %v2618, 0.0
    %v2875 = vmax.f32 %v2619, 0.0
    %v2876 = vmax.f32 %v2620, 0.0
    %v2877 = vmax.f32 %v2621, 0.0
    %v2878 = vmax.f32 %v2622, 0.0
    %v2879 = vmax.f32 %v2623, 0.0
    %v2880 = vmax.f32 %v2624, 0.0
    %v2881 = vmax.f32 %v2625, 0.0
    %v2882 = vmax.f32 %v2626, 0.0
    %v2883 = vmax.f32 %v2627, 0.0
    %v2884 = vmax.f32 %v2628, 0.0
    %v2885 = vmax.f32 %v2629, 0.0
    %v2886 = vmax.f32 %v2630, 0.0
    %v2887 = vmax.f32 %v2631, 0.0
    %v2888 = vmax.f32 %v2632, 0.0
    %v2889 = vmax.f32 %v2633, 0.0
    %v2890 = vmax.f32 %v2634, 0.0
    %v2891 = vmax.f32 %v2635, 0.0
    %v2892 = vmax.f32 %v2636, 0.0
    %v2893 = vmax.f32 %v2637, 0.0
    %v2894 = vmax.f32 %v2638, 0.0
    %v2895 = vmax.f32 %v2639, 0.0
    %v2896 = vmax.f32 %v2640, 0.0
    %v2897 = vmax.f32 %v2641, 0.0
    %v2898 = vmax.f32 %v2642, 0.0
    %v2899 = vmax.f32 %v2643, 0.0
    %v2900 = vmax.f32 %v2644, 0.0
    %v2901 = vmax.f32 %v2645, 0.0
    %v2902 = vmax.f32 %v2646, 0.0
    %v2903 = vmax.f32 %v2647, 0.0
    %v2904 = vmax.f32 %v2648, 0.0
    %v2905 = vmax.f32 %v2649, 0.0
    %v2906 = vmax.f32 %v2650, 0.0
    %v2907 = vmax.f32 %v2651, 0.0
    %v2908 = vmax.f32 %v2652, 0.0
    %v2909 = vmax.f32 %v2653, 0.0
    %v2910 = vmax.f32 %v2654, 0.0
    %v2911 = vmax.f32 %v2655, 0.0
    %v2912 = vmax.f32 %v2656, 0.0
    %v2913 = vmax.f32 %v2657, 0.0
    %v2914 = vmax.f32 %v2658, 0.0
    %v2915 = vmax.f32 %v2659, 0.0
    %v2916 = vmax.f32 %v2660, 0.0
    %v2917 = vmax.f32 %v2661, 0.0
    %v2918 = vmax.f32 %v2662, 0.0
    %v2919 = vmax.f32 %v2663, 0.0
    %v2920 = vmax.f32 %v2664, 0.0
    %v2921 = vmax.f32 %v2665, 0.0
    %v2922 = vmax.f32 %v2666, 0.0
    %v2923 = vmax.f32 %v2667, 0.0
    %v2924 = vmax.f32 %v2668, 0.0
    %v2925 = vmax.f32 %v2669, 0.0
    %v2926 = vmax.f32 %v2670, 0.0
    %v2927 = vmax.f32 %v2671, 0.0
    %v2928 = vmax.f32 %v2672, 0.0
    %v2929 = vmax.f32 %v2673, 0.0
    %v2930 = vmax.f32 %v2674, 0.0
    %v2931 = vmax.f32 %v2675, 0.0
    %v2932 = vmax.f32 %v2676, 0.0
    %v2933 = vmax.f32 %v2677, 0.0
    %v2934 = vmax.f32 %v2678, 0.0
    %v2935 = vmax.f32 %v2679, 0.0
    %v2936 = vmax.f32 %v2680, 0.0
    %v2937 = vmax.f32 %v2681, 0.0
    %v2938 = vmax.f32 %v2682, 0.0
    %v2939 = vmax.f32 %v2683, 0.0
    %v2940 = vmax.f32 %v2684, 0.0
    %v2941 = vmax.f32 %v2685, 0.0
    %v2942 = vmax.f32 %v2686, 0.0
    %v2943 = vmax.f32 %v2687, 0.0
    %v2944 = vmax.f32 %v2688, 0.0
    %v2945 = vmax.f32 %v2689, 0.0
    %v2946 = vmax.f32 %v2690, 0.0
    %v2947 = vmax.f32 %v2691, 0.0
    %v2948 = vmax.f32 %v2692, 0.0
    %v2949 = vmax.f32 %v2693, 0.0
    %v2950 = vmax.f32 %v2694, 0.0
    %v2951 = vmax.f32 %v2695, 0.0
    %v2952 = vmax.f32 %v2696, 0.0
    %v2953 = vmax.f32 %v2697, 0.0
    %v2954 = vmax.f32 %v2698, 0.0
    %v2955 = vmax.f32 %v2699, 0.0
    %v2956 = vmax.f32 %v2700, 0.0
    %v2957 = vmax.f32 %v2701, 0.0
    %v2958 = vmax.f32 %v2702, 0.0
    %v2959 = vmax.f32 %v2703, 0.0
    %v2960 = vmax.f32 %v2704, 0.0
    %v2961 = vmax.f32 %v2705, 0.0
    %v2962 = vmax.f32 %v2706, 0.0
    %v2963 = vmax.f32 %v2707, 0.0
    %v2964 = vmax.f32 %v2708, 0.0
    %v2965 = vmax.f32 %v2709, 0.0
    %v2966 = vmax.f32 %v2710, 0.0
    %v2967 = vmax.f32 %v2711, 0.0
    %v2968 = vmax.f32 %v2712, 0.0
    %v2969 = vmax.f32 %v2713, 0.0
    %v2970 = vmax.f32 %v2714, 0.0
    %v2971 = vmax.f32 %v2715, 0.0
    %v2972 = vmax.f32 %v2716, 0.0
    %v2973 = vmax.f32 %v2717, 0.0
    %v2974 = vmax.f32 %v2718, 0.0
    %v2975 = vmax.f32 %v2719, 0.0
    %v2976 = vmax.f32 %v2720, 0.0
    %v2977 = vmax.f32 %v2721, 0.0
    %v2978 = vmax.f32 %v2722, 0.0
    %v2979 = vmax.f32 %v2723, 0.0
    %v2980 = vmax.f32 %v2724, 0.0
    %v2981 = vmax.f32 %v2725, 0.0
    %v2982 = vmax.f32 %v2726, 0.0
    %v2983 = vmax.f32 %v2727, 0.0
    %v2984 = vmax.f32 %v2728, 0.0
    %v2985 = vmax.f32 %v2729, 0.0
    %v2986 = vmax.f32 %v2730, 0.0
    %v2987 = vmax.f32 %v2731, 0.0
    %v2988 = vmax.f32 %v2732, 0.0
    %v2989 = vmax.f32 %v2733, 0.0
    %v2990 = vmax.f32 %v2734, 0.0
    %v2991 = vmax.f32 %v2735, 0.0
    %v2992 = vmax.f32 %v2736, 0.0
    %v2993 = vmax.f32 %v2737, 0.0
    %v2994 = vmax.f32 %v2738, 0.0
    %v2995 = vmax.f32 %v2739, 0.0
    %v2996 = vmax.f32 %v2740, 0.0
    %v2997 = vmax.f32 %v2741, 0.0
    %v2998 = vmax.f32 %v2742, 0.0
    %v2999 = vmax.f32 %v2743, 0.0
    %v3000 = vmax.f32 %v2744, 0.0
    %v3001 = vmax.f32 %v2745, 0.0
    %v3002 = vmax.f32 %v2746, 0.0
    %v3003 = vmax.f32 %v2747, 0.0
    %v3004 = vmax.f32 %v2748, 0.0
    %v3005 = vmax.f32 %v2749, 0.0
    %v3006 = vmax.f32 %v2750, 0.0
    %v3007 = vmax.f32 %v2751, 0.0
    %v3008 = vmax.f32 %v2752, 0.0
    %v3009 = vmax.f32 %v2753, 0.0
    %v3010 = vmax.f32 %v2754, 0.0
    %v3011 = vmax.f32 %v2755, 0.0
    %v3012 = vmax.f32 %v2756, 0.0
    %v3013 = vmax.f32 %v2757, 0.0
    %v3014 = vmax.f32 %v2758, 0.0
    %v3015 = vmax.f32 %v2759, 0.0
    %v3016 = vmax.f32 %v2760, 0.0
    %v3017 = vmax.f32 %v2761, 0.0
    %v3018 = vmax.f32 %v2762, 0.0
    %v3019 = vmax.f32 %v2763, 0.0
    %v3020 = vmax.f32 %v2764, 0.0
    %v3021 = vmax.f32 %v2765, 0.0
    %v3022 = vmax.f32 %v2766, 0.0
    %v3023 = vmax.f32 %v2767, 0.0
    %v3024 = vmax.f32 %v2768, 0.0
    %v3025 = vmax.f32 %v2769, 0.0
    %v3026 = vmax.f32 %v2770, 0.0
    %v3027 = vmax.f32 %v2771, 0.0
    %v3028 = vmax.f32 %v2772, 0.0
    %v3029 = vmax.f32 %v2773, 0.0
    %v3030 = vmax.f32 %v2774, 0.0
    %v3031 = vmax.f32 %v2775, 0.0
    %v3032 = vmax.f32 %v2776, 0.0
    %v3033 = vmax.f32 %v2777, 0.0
    %v3034 = vmax.f32 %v2778, 0.0
    %v3035 = vmax.f32 %v2779, 0.0
    %v3036 = vmax.f32 %v2780, 0.0
    %v3037 = vmax.f32 %v2781, 0.0
    %v3038 = vmax.f32 %v2782, 0.0
    %v3039 = vmax.f32 %v2783, 0.0
    %v3040 = vmax.f32 %v2784, 0.0
    %v3041 = vmax.f32 %v2785, 0.0
    %v3042 = vmax.f32 %v2786, 0.0
    %v3043 = vmax.f32 %v2787, 0.0
    %v3044 = vmax.f32 %v2788, 0.0
    %v3045 = vmax.f32 %v2789, 0.0
    %v3046 = vmax.f32 %v2790, 0.0
    %v3047 = vmax.f32 %v2791, 0.0
    %v3048 = vmax.f32 %v2792, 0.0
    %v3049 = vmax.f32 %v2793, 0.0
    %v3050 = vmax.f32 %v2794, 0.0
    %v3051 = vmax.f32 %v2795, 0.0
    %v3052 = vmax.f32 %v2796, 0.0
    %v3053 = vmax.f32 %v2797, 0.0
    %v3054 = vmax.f32 %v2798, 0.0
    %v3055 = vmax.f32 %v2799, 0.0
    %v3056 = vmax.f32 %v2800, 0.0
    %v3057 = vpack.c.bf16 %v2802, %v2801
    %v3058 = vpack.c.bf16 %v2804, %v2803
    %v3059 = vpack.c.bf16 %v2806, %v2805
    %v3060 = vpack.c.bf16 %v2808, %v2807
    %v3061 = vpack.c.bf16 %v2810, %v2809
    %v3062 = vpack.c.bf16 %v2812, %v2811
    %v3063 = vpack.c.bf16 %v2814, %v2813
    %v3064 = vpack.c.bf16 %v2816, %v2815
    %v3065 = vpack.c.bf16 %v2818, %v2817
    %v3066 = vpack.c.bf16 %v2820, %v2819
    %v3067 = vpack.c.bf16 %v2822, %v2821
    %v3068 = vpack.c.bf16 %v2824, %v2823
    %v3069 = vpack.c.bf16 %v2826, %v2825
    %v3070 = vpack.c.bf16 %v2828, %v2827
    %v3071 = vpack.c.bf16 %v2830, %v2829
    %v3072 = vpack.c.bf16 %v2832, %v2831
    %v3073 = vpack.c.bf16 %v2834, %v2833
    %v3074 = vpack.c.bf16 %v2836, %v2835
    %v3075 = vpack.c.bf16 %v2838, %v2837
    %v3076 = vpack.c.bf16 %v2840, %v2839
    %v3077 = vpack.c.bf16 %v2842, %v2841
    %v3078 = vpack.c.bf16 %v2844, %v2843
    %v3079 = vpack.c.bf16 %v2846, %v2845
    %v3080 = vpack.c.bf16 %v2848, %v2847
    %v3081 = vpack.c.bf16 %v2850, %v2849
    %v3082 = vpack.c.bf16 %v2852, %v2851
    %v3083 = vpack.c.bf16 %v2854, %v2853
    %v3084 = vpack.c.bf16 %v2856, %v2855
    %v3085 = vpack.c.bf16 %v2858, %v2857
    %v3086 = vpack.c.bf16 %v2860, %v2859
    %v3087 = vpack.c.bf16 %v2862, %v2861
    %v3088 = vpack.c.bf16 %v2864, %v2863
    %v3089 = vpack.c.bf16 %v2866, %v2865
    %v3090 = vpack.c.bf16 %v2868, %v2867
    %v3091 = vpack.c.bf16 %v2870, %v2869
    %v3092 = vpack.c.bf16 %v2872, %v2871
    %v3093 = vpack.c.bf16 %v2874, %v2873
    %v3094 = vpack.c.bf16 %v2876, %v2875
    %v3095 = vpack.c.bf16 %v2878, %v2877
    %v3096 = vpack.c.bf16 %v2880, %v2879
    %v3097 = vpack.c.bf16 %v2882, %v2881
    %v3098 = vpack.c.bf16 %v2884, %v2883
    %v3099 = vpack.c.bf16 %v2886, %v2885
    %v3100 = vpack.c.bf16 %v2888, %v2887
    %v3101 = vpack.c.bf16 %v2890, %v2889
    %v3102 = vpack.c.bf16 %v2892, %v2891
    %v3103 = vpack.c.bf16 %v2894, %v2893
    %v3104 = vpack.c.bf16 %v2896, %v2895
    %v3105 = vpack.c.bf16 %v2898, %v2897
    %v3106 = vpack.c.bf16 %v2900, %v2899
    %v3107 = vpack.c.bf16 %v2902, %v2901
    %v3108 = vpack.c.bf16 %v2904, %v2903
    %v3109 = vpack.c.bf16 %v2906, %v2905
    %v3110 = vpack.c.bf16 %v2908, %v2907
    %v3111 = vpack.c.bf16 %v2910, %v2909
    %v3112 = vpack.c.bf16 %v2912, %v2911
    %v3113 = vpack.c.bf16 %v2914, %v2913
    %v3114 = vpack.c.bf16 %v2916, %v2915
    %v3115 = vpack.c.bf16 %v2918, %v2917
    %v3116 = vpack.c.bf16 %v2920, %v2919
    %v3117 = vpack.c.bf16 %v2922, %v2921
    %v3118 = vpack.c.bf16 %v2924, %v2923
    %v3119 = vpack.c.bf16 %v2926, %v2925
    %v3120 = vpack.c.bf16 %v2928, %v2927
    %v3121 = vpack.c.bf16 %v2930, %v2929
    %v3122 = vpack.c.bf16 %v2932, %v2931
    %v3123 = vpack.c.bf16 %v2934, %v2933
    %v3124 = vpack.c.bf16 %v2936, %v2935
    %v3125 = vpack.c.bf16 %v2938, %v2937
    %v3126 = vpack.c.bf16 %v2940, %v2939
    %v3127 = vpack.c.bf16 %v2942, %v2941
    %v3128 = vpack.c.bf16 %v2944, %v2943
    %v3129 = vpack.c.bf16 %v2946, %v2945
    %v3130 = vpack.c.bf16 %v2948, %v2947
    %v3131 = vpack.c.bf16 %v2950, %v2949
    %v3132 = vpack.c.bf16 %v2952, %v2951
    %v3133 = vpack.c.bf16 %v2954, %v2953
    %v3134 = vpack.c.bf16 %v2956, %v2955
    %v3135 = vpack.c.bf16 %v2958, %v2957
    %v3136 = vpack.c.bf16 %v2960, %v2959
    %v3137 = vpack.c.bf16 %v2962, %v2961
    %v3138 = vpack.c.bf16 %v2964, %v2963
    %v3139 = vpack.c.bf16 %v2966, %v2965
    %v3140 = vpack.c.bf16 %v2968, %v2967
    %v3141 = vpack.c.bf16 %v2970, %v2969
    %v3142 = vpack.c.bf16 %v2972, %v2971
    %v3143 = vpack.c.bf16 %v2974, %v2973
    %v3144 = vpack.c.bf16 %v2976, %v2975
    %v3145 = vpack.c.bf16 %v2978, %v2977
    %v3146 = vpack.c.bf16 %v2980, %v2979
    %v3147 = vpack.c.bf16 %v2982, %v2981
    %v3148 = vpack.c.bf16 %v2984, %v2983
    %v3149 = vpack.c.bf16 %v2986, %v2985
    %v3150 = vpack.c.bf16 %v2988, %v2987
    %v3151 = vpack.c.bf16 %v2990, %v2989
    %v3152 = vpack.c.bf16 %v2992, %v2991
    %v3153 = vpack.c.bf16 %v2994, %v2993
    %v3154 = vpack.c.bf16 %v2996, %v2995
    %v3155 = vpack.c.bf16 %v2998, %v2997
    %v3156 = vpack.c.bf16 %v3000, %v2999
    %v3157 = vpack.c.bf16 %v3002, %v3001
    %v3158 = vpack.c.bf16 %v3004, %v3003
    %v3159 = vpack.c.bf16 %v3006, %v3005
    %v3160 = vpack.c.bf16 %v3008, %v3007
    %v3161 = vpack.c.bf16 %v3010, %v3009
    %v3162 = vpack.c.bf16 %v3012, %v3011
    %v3163 = vpack.c.bf16 %v3014, %v3013
    %v3164 = vpack.c.bf16 %v3016, %v3015
    %v3165 = vpack.c.bf16 %v3018, %v3017
    %v3166 = vpack.c.bf16 %v3020, %v3019
    %v3167 = vpack.c.bf16 %v3022, %v3021
    %v3168 = vpack.c.bf16 %v3024, %v3023
    %v3169 = vpack.c.bf16 %v3026, %v3025
    %v3170 = vpack.c.bf16 %v3028, %v3027
    %v3171 = vpack.c.bf16 %v3030, %v3029
    %v3172 = vpack.c.bf16 %v3032, %v3031
    %v3173 = vpack.c.bf16 %v3034, %v3033
    %v3174 = vpack.c.bf16 %v3036, %v3035
    %v3175 = vpack.c.bf16 %v3038, %v3037
    %v3176 = vpack.c.bf16 %v3040, %v3039
    %v3177 = vpack.c.bf16 %v3042, %v3041
    %v3178 = vpack.c.bf16 %v3044, %v3043
    %v3179 = vpack.c.bf16 %v3046, %v3045
    %v3180 = vpack.c.bf16 %v3048, %v3047
    %v3181 = vpack.c.bf16 %v3050, %v3049
    %v3182 = vpack.c.bf16 %v3052, %v3051
    %v3183 = vpack.c.bf16 %v3054, %v3053
    %v3184 = vpack.c.bf16 %v3056, %v3055
    %v3185 = vld [vmem:[%s6] sm:$0xf]
    %v3186 = vld [vmem:[%s6 + $0x4] sm:$0xf]
    %v3187 = vld [vmem:[%s6 + $0x8] sm:$0xf]
    %v3188 = vld [vmem:[%s6 + $0xc] sm:$0xf]
    %v3189 = vld [vmem:[%s6 + $0x10] sm:$0xf]
    %v3190 = vld [vmem:[%s6 + $0x14] sm:$0xf]
    %v3191 = vld [vmem:[%s6 + $0x18] sm:$0xf]
    %v3192 = vld [vmem:[%s6 + $0x1c] sm:$0xf]
    %v3193 = vld [vmem:[%s6 + $0x20] sm:$0xf]
    %v3194 = vld [vmem:[%s6 + $0x24] sm:$0xf]
    %v3195 = vld [vmem:[%s6 + $0x28] sm:$0xf]
    %v3196 = vld [vmem:[%s6 + $0x2c] sm:$0xf]
    %v3197 = vld [vmem:[%s6 + $0x30] sm:$0xf]
    %v3198 = vld [vmem:[%s6 + $0x34] sm:$0xf]
    %v3199 = vld [vmem:[%s6 + $0x38] sm:$0xf]
    %v3200 = vld [vmem:[%s6 + $0x3c] sm:$0xf]
    %v3201 = vld [vmem:[%s7] sm:$0x1]
    %v3203 = vlaneseq
    %v3204 = vshrl.u32 %v3203, 7
    %v3205 = vsub.s32 0, %v3204
    %v3206 = vrot.slane %v3201, %v3205
    %v3224 = vunpack.c.l.b16 %v3185
    %v3225 = vunpack.c.l.b16 %v3186
    %v3226 = vunpack.c.l.b16 %v3187
    %v3227 = vunpack.c.l.b16 %v3188
    %v3228 = vunpack.c.l.b16 %v3189
    %v3229 = vunpack.c.l.b16 %v3190
    %v3230 = vunpack.c.l.b16 %v3191
    %v3231 = vunpack.c.l.b16 %v3192
    %v3232 = vunpack.c.l.b16 %v3193
    %v3233 = vunpack.c.l.b16 %v3194
    %v3234 = vunpack.c.l.b16 %v3195
    %v3235 = vunpack.c.l.b16 %v3196
    %v3236 = vunpack.c.l.b16 %v3197
    %v3237 = vunpack.c.l.b16 %v3198
    %v3238 = vunpack.c.l.b16 %v3199
    %v3239 = vunpack.c.l.b16 %v3200
    %v3240 = vpack.c.b16 %v3225, %v3224
    %v3241 = vpack.c.b16 %v3227, %v3226
    %v3242 = vpack.c.b16 %v3229, %v3228
    %v3243 = vpack.c.b16 %v3231, %v3230
    %v3244 = vpack.c.b16 %v3233, %v3232
    %v3245 = vpack.c.b16 %v3235, %v3234
    %v3246 = vpack.c.b16 %v3237, %v3236
    %v3247 = vpack.c.b16 %v3239, %v3238
    %3256 = vmatprep.subr.bf16.mxu0 0
    %3257 = vmatpush1.bf16.msra.mxu0 %v3240
    %3258 = vmatprep.subr.bf16.mxu0 0
    %3259 = vmatpush1.bf16.msra.mxu0 %v3241
    %3260 = vmatprep.subr.bf16.mxu0 0
    %3261 = vmatpush1.bf16.msra.mxu0 %v3242
    %3262 = vmatprep.subr.bf16.mxu0 0
    %3263 = vmatpush1.bf16.msra.mxu0 %v3243
    %3264 = vmatprep.subr.bf16.mxu0 0
    %3265 = vmatpush1.bf16.msra.mxu0 %v3244
    %3266 = vmatprep.subr.bf16.mxu0 0
    %3267 = vmatpush1.bf16.msra.mxu0 %v3245
    %3268 = vmatprep.subr.bf16.mxu0 0
    %3269 = vmatpush1.bf16.msra.mxu0 %v3246
    %3270 = vmatprep.subr.bf16.mxu0 0
    %3271 = vmatpush1.bf16.msra.mxu0 %v3247
    %3272 = vmatprep.subr.bf16.mxu0 0
    %3273 = vmatpush1.bf16.msra.mxu0 0
    %3274 = vmatprep.subr.bf16.mxu0 0
    %3275 = vmatpush1.bf16.msra.mxu0 0
    %3276 = vmatprep.subr.bf16.mxu0 0
    %3277 = vmatpush1.bf16.msra.mxu0 0
    %3278 = vmatprep.subr.bf16.mxu0 0
    %3279 = vmatpush1.bf16.msra.mxu0 0
    %3280 = vmatprep.subr.bf16.mxu0 0
    %3281 = vmatpush1.bf16.msra.mxu0 0
    %3282 = vmatprep.subr.bf16.mxu0 0
    %3283 = vmatpush1.bf16.msra.mxu0 0
    %3284 = vmatprep.subr.bf16.mxu0 0
    %3285 = vmatpush1.bf16.msra.mxu0 0
    %3286 = vmatprep.subr.bf16.mxu0 0
    %3287 = vmatpush1.bf16.msra.mxu0 0
    %3288 = vmatprep.mubr.bf16.mxu0 0
    %3289 = vmatmul.mubr.bf16.gmra.mrb[0].mxu0 %v3057
    %v3290 = vpop.f32.mrb[0].mxu0
    %v3291 = vadd.f32 %v3206, %v3290
    %v3292 = vpop.f32.mrb[0].mxu0
    %v3293 = vpop.f32.mrb[0].mxu0
    %v3294 = vadd.f32 %v3206, %v3293
    %v3295 = vpop.f32.mrb[0].mxu0
    %3296 = vmatprep.mubr.bf16.mxu0 0
    %3297 = vmatmul.mubr.bf16.gmra.mrb[0].mxu0 %v3058
    %v3298 = vpop.f32.mrb[0].mxu0
    %v3299 = vadd.f32 %v3206, %v3298
    %v3300 = vpop.f32.mrb[0].mxu0
    %v3301 = vpop.f32.mrb[0].mxu0
    %v3302 = vadd.f32 %v3206, %v3301
    %v3303 = vpop.f32.mrb[0].mxu0
    %3304 = vmatprep.mubr.bf16.mxu0 0
    %3305 = vmatmul.mubr.bf16.gmra.mrb[0].mxu0 %v3059
    %v3306 = vpop.f32.mrb[0].mxu0
    %v3307 = vadd.f32 %v3206, %v3306
    %v3308 = vpop.f32.mrb[0].mxu0
    %v3309 = vpop.f32.mrb[0].mxu0
    %v3310 = vadd.f32 %v3206, %v3309
    %v3311 = vpop.f32.mrb[0].mxu0
    %3312 = vmatprep.mubr.bf16.mxu0 0
    %3313 = vmatmul.mubr.bf16.gmra.mrb[0].mxu0 %v3060
    %v3314 = vpop.f32.mrb[0].mxu0
    %v3315 = vadd.f32 %v3206, %v3314
    %v3316 = vpop.f32.mrb[0].mxu0
    %v3317 = vpop.f32.mrb[0].mxu0
    %v3318 = vadd.f32 %v3206, %v3317
    %v3319 = vpop.f32.mrb[0].mxu0
    %3320 = vmatprep.mubr.bf16.mxu0 0
    %3321 = vmatmul.mubr.bf16.gmra.mrb[0].mxu0 %v3061
    %v3322 = vpop.f32.mrb[0].mxu0
    %v3323 = vadd.f32 %v3206, %v3322
    %v3324 = vpop.f32.mrb[0].mxu0
    %v3325 = vpop.f32.mrb[0].mxu0
    %v3326 = vadd.f32 %v3206, %v3325
    %v3327 = vpop.f32.mrb[0].mxu0
    %3328 = vmatprep.mubr.bf16.mxu0 0
    %3329 = vmatmul.mubr.bf16.gmra.mrb[0].mxu0 %v3062
    %v3330 = vpop.f32.mrb[0].mxu0
    %v3331 = vadd.f32 %v3206, %v3330
    %v3332 = vpop.f32.mrb[0].mxu0
    %v3333 = vpop.f32.mrb[0].mxu0
    %v3334 = vadd.f32 %v3206, %v3333
    %v3335 = vpop.f32.mrb[0].mxu0
    %3336 = vmatprep.mubr.bf16.mxu0 0
    %3337 = vmatmul.mubr.bf16.gmra.mrb[0].mxu0 %v3063
    %v3338 = vpop.f32.mrb[0].mxu0
    %v3339 = vadd.f32 %v3206, %v3338
    %v3340 = vpop.f32.mrb[0].mxu0
    %v3341 = vpop.f32.mrb[0].mxu0
    %v3342 = vadd.f32 %v3206, %v3341
    %v3343 = vpop.f32.mrb[0].mxu0
    %3344 = vmatprep.mubr.bf16.mxu0 0
    %3345 = vmatmul.mubr.bf16.gmra.mrb[0].mxu0 %v3064
    %v3346 = vpop.f32.mrb[0].mxu0
    %v3347 = vadd.f32 %v3206, %v3346
    %v3348 = vpop.f32.mrb[0].mxu0
    %v3349 = vpop.f32.mrb[0].mxu0
    %v3350 = vadd.f32 %v3206, %v3349
    %v3351 = vpop.f32.mrb[0].mxu0
    %3352 = vmatprep.mubr.bf16.mxu0 0
    %3353 = vmatmul.mubr.bf16.gmra.mrb[0].mxu0 %v3065
    %v3354 = vpop.f32.mrb[0].mxu0
    %v3355 = vadd.f32 %v3206, %v3354
    %v3356 = vpop.f32.mrb[0].mxu0
    %v3357 = vpop.f32.mrb[0].mxu0
    %v3358 = vadd.f32 %v3206, %v3357
    %v3359 = vpop.f32.mrb[0].mxu0
    %3360 = vmatprep.mubr.bf16.mxu0 0
    %3361 = vmatmul.mubr.bf16.gmra.mrb[0].mxu0 %v3066
    %v3362 = vpop.f32.mrb[0].mxu0
    %v3363 = vadd.f32 %v3206, %v3362
    %v3364 = vpop.f32.mrb[0].mxu0
    %v3365 = vpop.f32.mrb[0].mxu0
    %v3366 = vadd.f32 %v3206, %v3365
    %v3367 = vpop.f32.mrb[0].mxu0
    %3368 = vmatprep.mubr.bf16.mxu0 0
    %3369 = vmatmul.mubr.bf16.gmra.mrb[0].mxu0 %v3067
    %v3370 = vpop.f32.mrb[0].mxu0
    %v3371 = vadd.f32 %v3206, %v3370
    %v3372 = vpop.f32.mrb[0].mxu0
    %v3373 = vpop.f32.mrb[0].mxu0
    %v3374 = vadd.f32 %v3206, %v3373
    %v3375 = vpop.f32.mrb[0].mxu0
    %3376 = vmatprep.mubr.bf16.mxu0 0
    %3377 = vmatmul.mubr.bf16.gmra.mrb[0].mxu0 %v3068
    %v3378 = vpop.f32.mrb[0].mxu0
    %v3379 = vadd.f32 %v3206, %v3378
    %v3380 = vpop.f32.mrb[0].mxu0
    %v3381 = vpop.f32.mrb[0].mxu0
    %v3382 = vadd.f32 %v3206, %v3381
    %v3383 = vpop.f32.mrb[0].mxu0
    %3384 = vmatprep.mubr.bf16.mxu0 0
    %3385 = vmatmul.mubr.bf16.gmra.mrb[0].mxu0 %v3069
    %v3386 = vpop.f32.mrb[0].mxu0
    %v3387 = vadd.f32 %v3206, %v3386
    %v3388 = vpop.f32.mrb[0].mxu0
    %v3389 = vpop.f32.mrb[0].mxu0
    %v3390 = vadd.f32 %v3206, %v3389
    %v3391 = vpop.f32.mrb[0].mxu0
    %3392 = vmatprep.mubr.bf16.mxu0 0
    %3393 = vmatmul.mubr.bf16.gmra.mrb[0].mxu0 %v3070
    %v3394 = vpop.f32.mrb[0].mxu0
    %v3395 = vadd.f32 %v3206, %v3394
    %v3396 = vpop.f32.mrb[0].mxu0
    %v3397 = vpop.f32.mrb[0].mxu0
    %v3398 = vadd.f32 %v3206, %v3397
    %v3399 = vpop.f32.mrb[0].mxu0
    %3400 = vmatprep.mubr.bf16.mxu0 0
    %3401 = vmatmul.mubr.bf16.gmra.mrb[0].mxu0 %v3071
    %v3402 = vpop.f32.mrb[0].mxu0
    %v3403 = vadd.f32 %v3206, %v3402
    %v3404 = vpop.f32.mrb[0].mxu0
    %v3405 = vpop.f32.mrb[0].mxu0
    %v3406 = vadd.f32 %v3206, %v3405
    %v3407 = vpop.f32.mrb[0].mxu0
    %3408 = vmatprep.mubr.bf16.mxu0 0
    %3409 = vmatmul.mubr.bf16.gmra.mrb[0].mxu0 %v3072
    %v3410 = vpop.f32.mrb[0].mxu0
    %v3411 = vadd.f32 %v3206, %v3410
    %v3412 = vpop.f32.mrb[0].mxu0
    %v3413 = vpop.f32.mrb[0].mxu0
    %v3414 = vadd.f32 %v3206, %v3413
    %v3415 = vpop.f32.mrb[0].mxu0
    %3416 = vmatprep.mubr.bf16.mxu0 0
    %3417 = vmatmul.mubr.bf16.gmra.mrb[0].mxu0 %v3073
    %v3418 = vpop.f32.mrb[0].mxu0
    %v3419 = vadd.f32 %v3206, %v3418
    %v3420 = vpop.f32.mrb[0].mxu0
    %v3421 = vpop.f32.mrb[0].mxu0
    %v3422 = vadd.f32 %v3206, %v3421
    %v3423 = vpop.f32.mrb[0].mxu0
    %3424 = vmatprep.mubr.bf16.mxu0 0
    %3425 = vmatmul.mubr.bf16.gmra.mrb[0].mxu0 %v3074
    %v3426 = vpop.f32.mrb[0].mxu0
    %v3427 = vadd.f32 %v3206, %v3426
    %v3428 = vpop.f32.mrb[0].mxu0
    %v3429 = vpop.f32.mrb[0].mxu0
    %v3430 = vadd.f32 %v3206, %v3429
    %v3431 = vpop.f32.mrb[0].mxu0
    %3432 = vmatprep.mubr.bf16.mxu0 0
    %3433 = vmatmul.mubr.bf16.gmra.mrb[0].mxu0 %v3075
    %v3434 = vpop.f32.mrb[0].mxu0
    %v3435 = vadd.f32 %v3206, %v3434
    %v3436 = vpop.f32.mrb[0].mxu0
    %v3437 = vpop.f32.mrb[0].mxu0
    %v3438 = vadd.f32 %v3206, %v3437
    %v3439 = vpop.f32.mrb[0].mxu0
    %3440 = vmatprep.mubr.bf16.mxu0 0
    %3441 = vmatmul.mubr.bf16.gmra.mrb[0].mxu0 %v3076
    %v3442 = vpop.f32.mrb[0].mxu0
    %v3443 = vadd.f32 %v3206, %v3442
    %v3444 = vpop.f32.mrb[0].mxu0
    %v3445 = vpop.f32.mrb[0].mxu0
    %v3446 = vadd.f32 %v3206, %v3445
    %v3447 = vpop.f32.mrb[0].mxu0
    %3448 = vmatprep.mubr.bf16.mxu0 0
    %3449 = vmatmul.mubr.bf16.gmra.mrb[0].mxu0 %v3077
    %v3450 = vpop.f32.mrb[0].mxu0
    %v3451 = vadd.f32 %v3206, %v3450
    %v3452 = vpop.f32.mrb[0].mxu0
    %v3453 = vpop.f32.mrb[0].mxu0
    %v3454 = vadd.f32 %v3206, %v3453
    %v3455 = vpop.f32.mrb[0].mxu0
    %3456 = vmatprep.mubr.bf16.mxu0 0
    %3457 = vmatmul.mubr.bf16.gmra.mrb[0].mxu0 %v3078
    %v3458 = vpop.f32.mrb[0].mxu0
    %v3459 = vadd.f32 %v3206, %v3458
    %v3460 = vpop.f32.mrb[0].mxu0
    %v3461 = vpop.f32.mrb[0].mxu0
    %v3462 = vadd.f32 %v3206, %v3461
    %v3463 = vpop.f32.mrb[0].mxu0
    %3464 = vmatprep.mubr.bf16.mxu0 0
    %3465 = vmatmul.mubr.bf16.gmra.mrb[0].mxu0 %v3079
    %v3466 = vpop.f32.mrb[0].mxu0
    %v3467 = vadd.f32 %v3206, %v3466
    %v3468 = vpop.f32.mrb[0].mxu0
    %v3469 = vpop.f32.mrb[0].mxu0
    %v3470 = vadd.f32 %v3206, %v3469
    %v3471 = vpop.f32.mrb[0].mxu0
    %3472 = vmatprep.mubr.bf16.mxu0 0
    %3473 = vmatmul.mubr.bf16.gmra.mrb[0].mxu0 %v3080
    %v3474 = vpop.f32.mrb[0].mxu0
    %v3475 = vadd.f32 %v3206, %v3474
    %v3476 = vpop.f32.mrb[0].mxu0
    %v3477 = vpop.f32.mrb[0].mxu0
    %v3478 = vadd.f32 %v3206, %v3477
    %v3479 = vpop.f32.mrb[0].mxu0
    %3480 = vmatprep.mubr.bf16.mxu0 0
    %3481 = vmatmul.mubr.bf16.gmra.mrb[0].mxu0 %v3081
    %v3482 = vpop.f32.mrb[0].mxu0
    %v3483 = vadd.f32 %v3206, %v3482
    %v3484 = vpop.f32.mrb[0].mxu0
    %v3485 = vpop.f32.mrb[0].mxu0
    %v3486 = vadd.f32 %v3206, %v3485
    %v3487 = vpop.f32.mrb[0].mxu0
    %3488 = vmatprep.mubr.bf16.mxu0 0
    %3489 = vmatmul.mubr.bf16.gmra.mrb[0].mxu0 %v3082
    %v3490 = vpop.f32.mrb[0].mxu0
    %v3491 = vadd.f32 %v3206, %v3490
    %v3492 = vpop.f32.mrb[0].mxu0
    %v3493 = vpop.f32.mrb[0].mxu0
    %v3494 = vadd.f32 %v3206, %v3493
    %v3495 = vpop.f32.mrb[0].mxu0
    %3496 = vmatprep.mubr.bf16.mxu0 0
    %3497 = vmatmul.mubr.bf16.gmra.mrb[0].mxu0 %v3083
    %v3498 = vpop.f32.mrb[0].mxu0
    %v3499 = vadd.f32 %v3206, %v3498
    %v3500 = vpop.f32.mrb[0].mxu0
    %v3501 = vpop.f32.mrb[0].mxu0
    %v3502 = vadd.f32 %v3206, %v3501
    %v3503 = vpop.f32.mrb[0].mxu0
    %3504 = vmatprep.mubr.bf16.mxu0 0
    %3505 = vmatmul.mubr.bf16.gmra.mrb[0].mxu0 %v3084
    %v3506 = vpop.f32.mrb[0].mxu0
    %v3507 = vadd.f32 %v3206, %v3506
    %v3508 = vpop.f32.mrb[0].mxu0
    %v3509 = vpop.f32.mrb[0].mxu0
    %v3510 = vadd.f32 %v3206, %v3509
    %v3511 = vpop.f32.mrb[0].mxu0
    %3512 = vmatprep.mubr.bf16.mxu0 0
    %3513 = vmatmul.mubr.bf16.gmra.mrb[0].mxu0 %v3085
    %v3514 = vpop.f32.mrb[0].mxu0
    %v3515 = vadd.f32 %v3206, %v3514
    %v3516 = vpop.f32.mrb[0].mxu0
    %v3517 = vpop.f32.mrb[0].mxu0
    %v3518 = vadd.f32 %v3206, %v3517
    %v3519 = vpop.f32.mrb[0].mxu0
    %3520 = vmatprep.mubr.bf16.mxu0 0
    %3521 = vmatmul.mubr.bf16.gmra.mrb[0].mxu0 %v3086
    %v3522 = vpop.f32.mrb[0].mxu0
    %v3523 = vadd.f32 %v3206, %v3522
    %v3524 = vpop.f32.mrb[0].mxu0
    %v3525 = vpop.f32.mrb[0].mxu0
    %v3526 = vadd.f32 %v3206, %v3525
    %v3527 = vpop.f32.mrb[0].mxu0
    %3528 = vmatprep.mubr.bf16.mxu0 0
    %3529 = vmatmul.mubr.bf16.gmra.mrb[0].mxu0 %v3087
    %v3530 = vpop.f32.mrb[0].mxu0
    %v3531 = vadd.f32 %v3206, %v3530
    %v3532 = vpop.f32.mrb[0].mxu0
    %v3533 = vpop.f32.mrb[0].mxu0
    %v3534 = vadd.f32 %v3206, %v3533
    %v3535 = vpop.f32.mrb[0].mxu0
    %3536 = vmatprep.mubr.bf16.mxu0 0
    %3537 = vmatmul.mubr.bf16.gmra.mrb[0].mxu0 %v3088
    %v3538 = vpop.f32.mrb[0].mxu0
    %v3539 = vadd.f32 %v3206, %v3538
    %v3540 = vpop.f32.mrb[0].mxu0
    %v3541 = vpop.f32.mrb[0].mxu0
    %v3542 = vadd.f32 %v3206, %v3541
    %v3543 = vpop.f32.mrb[0].mxu0
    %3544 = vmatprep.mubr.bf16.mxu0 0
    %3545 = vmatmul.mubr.bf16.gmra.mrb[0].mxu0 %v3089
    %v3546 = vpop.f32.mrb[0].mxu0
    %v3547 = vadd.f32 %v3206, %v3546
    %v3548 = vpop.f32.mrb[0].mxu0
    %v3549 = vpop.f32.mrb[0].mxu0
    %v3550 = vadd.f32 %v3206, %v3549
    %v3551 = vpop.f32.mrb[0].mxu0
    %3552 = vmatprep.mubr.bf16.mxu0 0
    %3553 = vmatmul.mubr.bf16.gmra.mrb[0].mxu0 %v3090
    %v3554 = vpop.f32.mrb[0].mxu0
    %v3555 = vadd.f32 %v3206, %v3554
    %v3556 = vpop.f32.mrb[0].mxu0
    %v3557 = vpop.f32.mrb[0].mxu0
    %v3558 = vadd.f32 %v3206, %v3557
    %v3559 = vpop.f32.mrb[0].mxu0
    %3560 = vmatprep.mubr.bf16.mxu0 0
    %3561 = vmatmul.mubr.bf16.gmra.mrb[0].mxu0 %v3091
    %v3562 = vpop.f32.mrb[0].mxu0
    %v3563 = vadd.f32 %v3206, %v3562
    %v3564 = vpop.f32.mrb[0].mxu0
    %v3565 = vpop.f32.mrb[0].mxu0
    %v3566 = vadd.f32 %v3206, %v3565
    %v3567 = vpop.f32.mrb[0].mxu0
    %3568 = vmatprep.mubr.bf16.mxu0 0
    %3569 = vmatmul.mubr.bf16.gmra.mrb[0].mxu0 %v3092
    %v3570 = vpop.f32.mrb[0].mxu0
    %v3571 = vadd.f32 %v3206, %v3570
    %v3572 = vpop.f32.mrb[0].mxu0
    %v3573 = vpop.f32.mrb[0].mxu0
    %v3574 = vadd.f32 %v3206, %v3573
    %v3575 = vpop.f32.mrb[0].mxu0
    %3576 = vmatprep.mubr.bf16.mxu0 0
    %3577 = vmatmul.mubr.bf16.gmra.mrb[0].mxu0 %v3093
    %v3578 = vpop.f32.mrb[0].mxu0
    %v3579 = vadd.f32 %v3206, %v3578
    %v3580 = vpop.f32.mrb[0].mxu0
    %v3581 = vpop.f32.mrb[0].mxu0
    %v3582 = vadd.f32 %v3206, %v3581
    %v3583 = vpop.f32.mrb[0].mxu0
    %3584 = vmatprep.mubr.bf16.mxu0 0
    %3585 = vmatmul.mubr.bf16.gmra.mrb[0].mxu0 %v3094
    %v3586 = vpop.f32.mrb[0].mxu0
    %v3587 = vadd.f32 %v3206, %v3586
    %v3588 = vpop.f32.mrb[0].mxu0
    %v3589 = vpop.f32.mrb[0].mxu0
    %v3590 = vadd.f32 %v3206, %v3589
    %v3591 = vpop.f32.mrb[0].mxu0
    %3592 = vmatprep.mubr.bf16.mxu0 0
    %3593 = vmatmul.mubr.bf16.gmra.mrb[0].mxu0 %v3095
    %v3594 = vpop.f32.mrb[0].mxu0
    %v3595 = vadd.f32 %v3206, %v3594
    %v3596 = vpop.f32.mrb[0].mxu0
    %v3597 = vpop.f32.mrb[0].mxu0
    %v3598 = vadd.f32 %v3206, %v3597
    %v3599 = vpop.f32.mrb[0].mxu0
    %3600 = vmatprep.mubr.bf16.mxu0 0
    %3601 = vmatmul.mubr.bf16.gmra.mrb[0].mxu0 %v3096
    %v3602 = vpop.f32.mrb[0].mxu0
    %v3603 = vadd.f32 %v3206, %v3602
    %v3604 = vpop.f32.mrb[0].mxu0
    %v3605 = vpop.f32.mrb[0].mxu0
    %v3606 = vadd.f32 %v3206, %v3605
    %v3607 = vpop.f32.mrb[0].mxu0
    %3608 = vmatprep.mubr.bf16.mxu0 0
    %3609 = vmatmul.mubr.bf16.gmra.mrb[0].mxu0 %v3097
    %v3610 = vpop.f32.mrb[0].mxu0
    %v3611 = vadd.f32 %v3206, %v3610
    %v3612 = vpop.f32.mrb[0].mxu0
    %v3613 = vpop.f32.mrb[0].mxu0
    %v3614 = vadd.f32 %v3206, %v3613
    %v3615 = vpop.f32.mrb[0].mxu0
    %3616 = vmatprep.mubr.bf16.mxu0 0
    %3617 = vmatmul.mubr.bf16.gmra.mrb[0].mxu0 %v3098
    %v3618 = vpop.f32.mrb[0].mxu0
    %v3619 = vadd.f32 %v3206, %v3618
    %v3620 = vpop.f32.mrb[0].mxu0
    %v3621 = vpop.f32.mrb[0].mxu0
    %v3622 = vadd.f32 %v3206, %v3621
    %v3623 = vpop.f32.mrb[0].mxu0
    %3624 = vmatprep.mubr.bf16.mxu0 0
    %3625 = vmatmul.mubr.bf16.gmra.mrb[0].mxu0 %v3099
    %v3626 = vpop.f32.mrb[0].mxu0
    %v3627 = vadd.f32 %v3206, %v3626
    %v3628 = vpop.f32.mrb[0].mxu0
    %v3629 = vpop.f32.mrb[0].mxu0
    %v3630 = vadd.f32 %v3206, %v3629
    %v3631 = vpop.f32.mrb[0].mxu0
    %3632 = vmatprep.mubr.bf16.mxu0 0
    %3633 = vmatmul.mubr.bf16.gmra.mrb[0].mxu0 %v3100
    %v3634 = vpop.f32.mrb[0].mxu0
    %v3635 = vadd.f32 %v3206, %v3634
    %v3636 = vpop.f32.mrb[0].mxu0
    %v3637 = vpop.f32.mrb[0].mxu0
    %v3638 = vadd.f32 %v3206, %v3637
    %v3639 = vpop.f32.mrb[0].mxu0
    %3640 = vmatprep.mubr.bf16.mxu0 0
    %3641 = vmatmul.mubr.bf16.gmra.mrb[0].mxu0 %v3101
    %v3642 = vpop.f32.mrb[0].mxu0
    %v3643 = vadd.f32 %v3206, %v3642
    %v3644 = vpop.f32.mrb[0].mxu0
    %v3645 = vpop.f32.mrb[0].mxu0
    %v3646 = vadd.f32 %v3206, %v3645
    %v3647 = vpop.f32.mrb[0].mxu0
    %3648 = vmatprep.mubr.bf16.mxu0 0
    %3649 = vmatmul.mubr.bf16.gmra.mrb[0].mxu0 %v3102
    %v3650 = vpop.f32.mrb[0].mxu0
    %v3651 = vadd.f32 %v3206, %v3650
    %v3652 = vpop.f32.mrb[0].mxu0
    %v3653 = vpop.f32.mrb[0].mxu0
    %v3654 = vadd.f32 %v3206, %v3653
    %v3655 = vpop.f32.mrb[0].mxu0
    %3656 = vmatprep.mubr.bf16.mxu0 0
    %3657 = vmatmul.mubr.bf16.gmra.mrb[0].mxu0 %v3103
    %v3658 = vpop.f32.mrb[0].mxu0
    %v3659 = vadd.f32 %v3206, %v3658
    %v3660 = vpop.f32.mrb[0].mxu0
    %v3661 = vpop.f32.mrb[0].mxu0
    %v3662 = vadd.f32 %v3206, %v3661
    %v3663 = vpop.f32.mrb[0].mxu0
    %3664 = vmatprep.mubr.bf16.mxu0 0
    %3665 = vmatmul.mubr.bf16.gmra.mrb[0].mxu0 %v3104
    %v3666 = vpop.f32.mrb[0].mxu0
    %v3667 = vadd.f32 %v3206, %v3666
    %v3668 = vpop.f32.mrb[0].mxu0
    %v3669 = vpop.f32.mrb[0].mxu0
    %v3670 = vadd.f32 %v3206, %v3669
    %v3671 = vpop.f32.mrb[0].mxu0
    %3672 = vmatprep.mubr.bf16.mxu0 0
    %3673 = vmatmul.mubr.bf16.gmra.mrb[0].mxu0 %v3105
    %v3674 = vpop.f32.mrb[0].mxu0
    %v3675 = vadd.f32 %v3206, %v3674
    %v3676 = vpop.f32.mrb[0].mxu0
    %v3677 = vpop.f32.mrb[0].mxu0
    %v3678 = vadd.f32 %v3206, %v3677
    %v3679 = vpop.f32.mrb[0].mxu0
    %3680 = vmatprep.mubr.bf16.mxu0 0
    %3681 = vmatmul.mubr.bf16.gmra.mrb[0].mxu0 %v3106
    %v3682 = vpop.f32.mrb[0].mxu0
    %v3683 = vadd.f32 %v3206, %v3682
    %v3684 = vpop.f32.mrb[0].mxu0
    %v3685 = vpop.f32.mrb[0].mxu0
    %v3686 = vadd.f32 %v3206, %v3685
    %v3687 = vpop.f32.mrb[0].mxu0
    %3688 = vmatprep.mubr.bf16.mxu0 0
    %3689 = vmatmul.mubr.bf16.gmra.mrb[0].mxu0 %v3107
    %v3690 = vpop.f32.mrb[0].mxu0
    %v3691 = vadd.f32 %v3206, %v3690
    %v3692 = vpop.f32.mrb[0].mxu0
    %v3693 = vpop.f32.mrb[0].mxu0
    %v3694 = vadd.f32 %v3206, %v3693
    %v3695 = vpop.f32.mrb[0].mxu0
    %3696 = vmatprep.mubr.bf16.mxu0 0
    %3697 = vmatmul.mubr.bf16.gmra.mrb[0].mxu0 %v3108
    %v3698 = vpop.f32.mrb[0].mxu0
    %v3699 = vadd.f32 %v3206, %v3698
    %v3700 = vpop.f32.mrb[0].mxu0
    %v3701 = vpop.f32.mrb[0].mxu0
    %v3702 = vadd.f32 %v3206, %v3701
    %v3703 = vpop.f32.mrb[0].mxu0
    %3704 = vmatprep.mubr.bf16.mxu0 0
    %3705 = vmatmul.mubr.bf16.gmra.mrb[0].mxu0 %v3109
    %v3706 = vpop.f32.mrb[0].mxu0
    %v3707 = vadd.f32 %v3206, %v3706
    %v3708 = vpop.f32.mrb[0].mxu0
    %v3709 = vpop.f32.mrb[0].mxu0
    %v3710 = vadd.f32 %v3206, %v3709
    %v3711 = vpop.f32.mrb[0].mxu0
    %3712 = vmatprep.mubr.bf16.mxu0 0
    %3713 = vmatmul.mubr.bf16.gmra.mrb[0].mxu0 %v3110
    %v3714 = vpop.f32.mrb[0].mxu0
    %v3715 = vadd.f32 %v3206, %v3714
    %v3716 = vpop.f32.mrb[0].mxu0
    %v3717 = vpop.f32.mrb[0].mxu0
    %v3718 = vadd.f32 %v3206, %v3717
    %v3719 = vpop.f32.mrb[0].mxu0
    %3720 = vmatprep.mubr.bf16.mxu0 0
    %3721 = vmatmul.mubr.bf16.gmra.mrb[0].mxu0 %v3111
    %v3722 = vpop.f32.mrb[0].mxu0
    %v3723 = vadd.f32 %v3206, %v3722
    %v3724 = vpop.f32.mrb[0].mxu0
    %v3725 = vpop.f32.mrb[0].mxu0
    %v3726 = vadd.f32 %v3206, %v3725
    %v3727 = vpop.f32.mrb[0].mxu0
    %3728 = vmatprep.mubr.bf16.mxu0 0
    %3729 = vmatmul.mubr.bf16.gmra.mrb[0].mxu0 %v3112
    %v3730 = vpop.f32.mrb[0].mxu0
    %v3731 = vadd.f32 %v3206, %v3730
    %v3732 = vpop.f32.mrb[0].mxu0
    %v3733 = vpop.f32.mrb[0].mxu0
    %v3734 = vadd.f32 %v3206, %v3733
    %v3735 = vpop.f32.mrb[0].mxu0
    %3736 = vmatprep.mubr.bf16.mxu0 0
    %3737 = vmatmul.mubr.bf16.gmra.mrb[0].mxu0 %v3113
    %v3738 = vpop.f32.mrb[0].mxu0
    %v3739 = vadd.f32 %v3206, %v3738
    %v3740 = vpop.f32.mrb[0].mxu0
    %v3741 = vpop.f32.mrb[0].mxu0
    %v3742 = vadd.f32 %v3206, %v3741
    %v3743 = vpop.f32.mrb[0].mxu0
    %3744 = vmatprep.mubr.bf16.mxu0 0
    %3745 = vmatmul.mubr.bf16.gmra.mrb[0].mxu0 %v3114
    %v3746 = vpop.f32.mrb[0].mxu0
    %v3747 = vadd.f32 %v3206, %v3746
    %v3748 = vpop.f32.mrb[0].mxu0
    %v3749 = vpop.f32.mrb[0].mxu0
    %v3750 = vadd.f32 %v3206, %v3749
    %v3751 = vpop.f32.mrb[0].mxu0
    %3752 = vmatprep.mubr.bf16.mxu0 0
    %3753 = vmatmul.mubr.bf16.gmra.mrb[0].mxu0 %v3115
    %v3754 = vpop.f32.mrb[0].mxu0
    %v3755 = vadd.f32 %v3206, %v3754
    %v3756 = vpop.f32.mrb[0].mxu0
    %v3757 = vpop.f32.mrb[0].mxu0
    %v3758 = vadd.f32 %v3206, %v3757
    %v3759 = vpop.f32.mrb[0].mxu0
    %3760 = vmatprep.mubr.bf16.mxu0 0
    %3761 = vmatmul.mubr.bf16.gmra.mrb[0].mxu0 %v3116
    %v3762 = vpop.f32.mrb[0].mxu0
    %v3763 = vadd.f32 %v3206, %v3762
    %v3764 = vpop.f32.mrb[0].mxu0
    %v3765 = vpop.f32.mrb[0].mxu0
    %v3766 = vadd.f32 %v3206, %v3765
    %v3767 = vpop.f32.mrb[0].mxu0
    %3768 = vmatprep.mubr.bf16.mxu0 0
    %3769 = vmatmul.mubr.bf16.gmra.mrb[0].mxu0 %v3117
    %v3770 = vpop.f32.mrb[0].mxu0
    %v3771 = vadd.f32 %v3206, %v3770
    %v3772 = vpop.f32.mrb[0].mxu0
    %v3773 = vpop.f32.mrb[0].mxu0
    %v3774 = vadd.f32 %v3206, %v3773
    %v3775 = vpop.f32.mrb[0].mxu0
    %3776 = vmatprep.mubr.bf16.mxu0 0
    %3777 = vmatmul.mubr.bf16.gmra.mrb[0].mxu0 %v3118
    %v3778 = vpop.f32.mrb[0].mxu0
    %v3779 = vadd.f32 %v3206, %v3778
    %v3780 = vpop.f32.mrb[0].mxu0
    %v3781 = vpop.f32.mrb[0].mxu0
    %v3782 = vadd.f32 %v3206, %v3781
    %v3783 = vpop.f32.mrb[0].mxu0
    %3784 = vmatprep.mubr.bf16.mxu0 0
    %3785 = vmatmul.mubr.bf16.gmra.mrb[0].mxu0 %v3119
    %v3786 = vpop.f32.mrb[0].mxu0
    %v3787 = vadd.f32 %v3206, %v3786
    %v3788 = vpop.f32.mrb[0].mxu0
    %v3789 = vpop.f32.mrb[0].mxu0
    %v3790 = vadd.f32 %v3206, %v3789
    %v3791 = vpop.f32.mrb[0].mxu0
    %3792 = vmatprep.mubr.bf16.mxu0 0
    %3793 = vmatmul.mubr.bf16.gmra.mrb[0].mxu0 %v3120
    %v3794 = vpop.f32.mrb[0].mxu0
    %v3795 = vadd.f32 %v3206, %v3794
    %v3796 = vpop.f32.mrb[0].mxu0
    %v3797 = vpop.f32.mrb[0].mxu0
    %v3798 = vadd.f32 %v3206, %v3797
    %v3799 = vpop.f32.mrb[0].mxu0
    %3800 = vmatprep.mubr.bf16.mxu0 0
    %3801 = vmatmul.mubr.bf16.gmra.mrb[0].mxu0 %v3121
    %v3802 = vpop.f32.mrb[0].mxu0
    %v3803 = vadd.f32 %v3206, %v3802
    %v3804 = vpop.f32.mrb[0].mxu0
    %v3805 = vpop.f32.mrb[0].mxu0
    %v3806 = vadd.f32 %v3206, %v3805
    %v3807 = vpop.f32.mrb[0].mxu0
    %3808 = vmatprep.mubr.bf16.mxu0 0
    %3809 = vmatmul.mubr.bf16.gmra.mrb[0].mxu0 %v3122
    %v3810 = vpop.f32.mrb[0].mxu0
    %v3811 = vadd.f32 %v3206, %v3810
    %v3812 = vpop.f32.mrb[0].mxu0
    %v3813 = vpop.f32.mrb[0].mxu0
    %v3814 = vadd.f32 %v3206, %v3813
    %v3815 = vpop.f32.mrb[0].mxu0
    %3816 = vmatprep.mubr.bf16.mxu0 0
    %3817 = vmatmul.mubr.bf16.gmra.mrb[0].mxu0 %v3123
    %v3818 = vpop.f32.mrb[0].mxu0
    %v3819 = vadd.f32 %v3206, %v3818
    %v3820 = vpop.f32.mrb[0].mxu0
    %v3821 = vpop.f32.mrb[0].mxu0
    %v3822 = vadd.f32 %v3206, %v3821
    %v3823 = vpop.f32.mrb[0].mxu0
    %3824 = vmatprep.mubr.bf16.mxu0 0
    %3825 = vmatmul.mubr.bf16.gmra.mrb[0].mxu0 %v3124
    %v3826 = vpop.f32.mrb[0].mxu0
    %v3827 = vadd.f32 %v3206, %v3826
    %v3828 = vpop.f32.mrb[0].mxu0
    %v3829 = vpop.f32.mrb[0].mxu0
    %v3830 = vadd.f32 %v3206, %v3829
    %v3831 = vpop.f32.mrb[0].mxu0
    %3832 = vmatprep.mubr.bf16.mxu0 0
    %3833 = vmatmul.mubr.bf16.gmra.mrb[0].mxu0 %v3125
    %v3834 = vpop.f32.mrb[0].mxu0
    %v3835 = vadd.f32 %v3206, %v3834
    %v3836 = vpop.f32.mrb[0].mxu0
    %v3837 = vpop.f32.mrb[0].mxu0
    %v3838 = vadd.f32 %v3206, %v3837
    %v3839 = vpop.f32.mrb[0].mxu0
    %3840 = vmatprep.mubr.bf16.mxu0 0
    %3841 = vmatmul.mubr.bf16.gmra.mrb[0].mxu0 %v3126
    %v3842 = vpop.f32.mrb[0].mxu0
    %v3843 = vadd.f32 %v3206, %v3842
    %v3844 = vpop.f32.mrb[0].mxu0
    %v3845 = vpop.f32.mrb[0].mxu0
    %v3846 = vadd.f32 %v3206, %v3845
    %v3847 = vpop.f32.mrb[0].mxu0
    %3848 = vmatprep.mubr.bf16.mxu0 0
    %3849 = vmatmul.mubr.bf16.gmra.mrb[0].mxu0 %v3127
    %v3850 = vpop.f32.mrb[0].mxu0
    %v3851 = vadd.f32 %v3206, %v3850
    %v3852 = vpop.f32.mrb[0].mxu0
    %v3853 = vpop.f32.mrb[0].mxu0
    %v3854 = vadd.f32 %v3206, %v3853
    %v3855 = vpop.f32.mrb[0].mxu0
    %3856 = vmatprep.mubr.bf16.mxu0 0
    %3857 = vmatmul.mubr.bf16.gmra.mrb[0].mxu0 %v3128
    %v3858 = vpop.f32.mrb[0].mxu0
    %v3859 = vadd.f32 %v3206, %v3858
    %v3860 = vpop.f32.mrb[0].mxu0
    %v3861 = vpop.f32.mrb[0].mxu0
    %v3862 = vadd.f32 %v3206, %v3861
    %v3863 = vpop.f32.mrb[0].mxu0
    %3864 = vmatprep.mubr.bf16.mxu0 0
    %3865 = vmatmul.mubr.bf16.gmra.mrb[0].mxu0 %v3129
    %v3866 = vpop.f32.mrb[0].mxu0
    %v3867 = vadd.f32 %v3206, %v3866
    %v3868 = vpop.f32.mrb[0].mxu0
    %v3869 = vpop.f32.mrb[0].mxu0
    %v3870 = vadd.f32 %v3206, %v3869
    %v3871 = vpop.f32.mrb[0].mxu0
    %3872 = vmatprep.mubr.bf16.mxu0 0
    %3873 = vmatmul.mubr.bf16.gmra.mrb[0].mxu0 %v3130
    %v3874 = vpop.f32.mrb[0].mxu0
    %v3875 = vadd.f32 %v3206, %v3874
    %v3876 = vpop.f32.mrb[0].mxu0
    %v3877 = vpop.f32.mrb[0].mxu0
    %v3878 = vadd.f32 %v3206, %v3877
    %v3879 = vpop.f32.mrb[0].mxu0
    %3880 = vmatprep.mubr.bf16.mxu0 0
    %3881 = vmatmul.mubr.bf16.gmra.mrb[0].mxu0 %v3131
    %v3882 = vpop.f32.mrb[0].mxu0
    %v3883 = vadd.f32 %v3206, %v3882
    %v3884 = vpop.f32.mrb[0].mxu0
    %v3885 = vpop.f32.mrb[0].mxu0
    %v3886 = vadd.f32 %v3206, %v3885
    %v3887 = vpop.f32.mrb[0].mxu0
    %3888 = vmatprep.mubr.bf16.mxu0 0
    %3889 = vmatmul.mubr.bf16.gmra.mrb[0].mxu0 %v3132
    %v3890 = vpop.f32.mrb[0].mxu0
    %v3891 = vadd.f32 %v3206, %v3890
    %v3892 = vpop.f32.mrb[0].mxu0
    %v3893 = vpop.f32.mrb[0].mxu0
    %v3894 = vadd.f32 %v3206, %v3893
    %v3895 = vpop.f32.mrb[0].mxu0
    %3896 = vmatprep.mubr.bf16.mxu0 0
    %3897 = vmatmul.mubr.bf16.gmra.mrb[0].mxu0 %v3133
    %v3898 = vpop.f32.mrb[0].mxu0
    %v3899 = vadd.f32 %v3206, %v3898
    %v3900 = vpop.f32.mrb[0].mxu0
    %v3901 = vpop.f32.mrb[0].mxu0
    %v3902 = vadd.f32 %v3206, %v3901
    %v3903 = vpop.f32.mrb[0].mxu0
    %3904 = vmatprep.mubr.bf16.mxu0 0
    %3905 = vmatmul.mubr.bf16.gmra.mrb[0].mxu0 %v3134
    %v3906 = vpop.f32.mrb[0].mxu0
    %v3907 = vadd.f32 %v3206, %v3906
    %v3908 = vpop.f32.mrb[0].mxu0
    %v3909 = vpop.f32.mrb[0].mxu0
    %v3910 = vadd.f32 %v3206, %v3909
    %v3911 = vpop.f32.mrb[0].mxu0
    %3912 = vmatprep.mubr.bf16.mxu0 0
    %3913 = vmatmul.mubr.bf16.gmra.mrb[0].mxu0 %v3135
    %v3914 = vpop.f32.mrb[0].mxu0
    %v3915 = vadd.f32 %v3206, %v3914
    %v3916 = vpop.f32.mrb[0].mxu0
    %v3917 = vpop.f32.mrb[0].mxu0
    %v3918 = vadd.f32 %v3206, %v3917
    %v3919 = vpop.f32.mrb[0].mxu0
    %3920 = vmatprep.mubr.bf16.mxu0 0
    %3921 = vmatmul.mubr.bf16.gmra.mrb[0].mxu0 %v3136
    %v3922 = vpop.f32.mrb[0].mxu0
    %v3923 = vadd.f32 %v3206, %v3922
    %v3924 = vpop.f32.mrb[0].mxu0
    %v3925 = vpop.f32.mrb[0].mxu0
    %v3926 = vadd.f32 %v3206, %v3925
    %v3927 = vpop.f32.mrb[0].mxu0
    %3928 = vmatprep.mubr.bf16.mxu0 0
    %3929 = vmatmul.mubr.bf16.gmra.mrb[0].mxu0 %v3137
    %v3930 = vpop.f32.mrb[0].mxu0
    %v3931 = vadd.f32 %v3206, %v3930
    %v3932 = vpop.f32.mrb[0].mxu0
    %v3933 = vpop.f32.mrb[0].mxu0
    %v3934 = vadd.f32 %v3206, %v3933
    %v3935 = vpop.f32.mrb[0].mxu0
    %3936 = vmatprep.mubr.bf16.mxu0 0
    %3937 = vmatmul.mubr.bf16.gmra.mrb[0].mxu0 %v3138
    %v3938 = vpop.f32.mrb[0].mxu0
    %v3939 = vadd.f32 %v3206, %v3938
    %v3940 = vpop.f32.mrb[0].mxu0
    %v3941 = vpop.f32.mrb[0].mxu0
    %v3942 = vadd.f32 %v3206, %v3941
    %v3943 = vpop.f32.mrb[0].mxu0
    %3944 = vmatprep.mubr.bf16.mxu0 0
    %3945 = vmatmul.mubr.bf16.gmra.mrb[0].mxu0 %v3139
    %v3946 = vpop.f32.mrb[0].mxu0
    %v3947 = vadd.f32 %v3206, %v3946
    %v3948 = vpop.f32.mrb[0].mxu0
    %v3949 = vpop.f32.mrb[0].mxu0
    %v3950 = vadd.f32 %v3206, %v3949
    %v3951 = vpop.f32.mrb[0].mxu0
    %3952 = vmatprep.mubr.bf16.mxu0 0
    %3953 = vmatmul.mubr.bf16.gmra.mrb[0].mxu0 %v3140
    %v3954 = vpop.f32.mrb[0].mxu0
    %v3955 = vadd.f32 %v3206, %v3954
    %v3956 = vpop.f32.mrb[0].mxu0
    %v3957 = vpop.f32.mrb[0].mxu0
    %v3958 = vadd.f32 %v3206, %v3957
    %v3959 = vpop.f32.mrb[0].mxu0
    %3960 = vmatprep.mubr.bf16.mxu0 0
    %3961 = vmatmul.mubr.bf16.gmra.mrb[0].mxu0 %v3141
    %v3962 = vpop.f32.mrb[0].mxu0
    %v3963 = vadd.f32 %v3206, %v3962
    %v3964 = vpop.f32.mrb[0].mxu0
    %v3965 = vpop.f32.mrb[0].mxu0
    %v3966 = vadd.f32 %v3206, %v3965
    %v3967 = vpop.f32.mrb[0].mxu0
    %3968 = vmatprep.mubr.bf16.mxu0 0
    %3969 = vmatmul.mubr.bf16.gmra.mrb[0].mxu0 %v3142
    %v3970 = vpop.f32.mrb[0].mxu0
    %v3971 = vadd.f32 %v3206, %v3970
    %v3972 = vpop.f32.mrb[0].mxu0
    %v3973 = vpop.f32.mrb[0].mxu0
    %v3974 = vadd.f32 %v3206, %v3973
    %v3975 = vpop.f32.mrb[0].mxu0
    %3976 = vmatprep.mubr.bf16.mxu0 0
    %3977 = vmatmul.mubr.bf16.gmra.mrb[0].mxu0 %v3143
    %v3978 = vpop.f32.mrb[0].mxu0
    %v3979 = vadd.f32 %v3206, %v3978
    %v3980 = vpop.f32.mrb[0].mxu0
    %v3981 = vpop.f32.mrb[0].mxu0
    %v3982 = vadd.f32 %v3206, %v3981
    %v3983 = vpop.f32.mrb[0].mxu0
    %3984 = vmatprep.mubr.bf16.mxu0 0
    %3985 = vmatmul.mubr.bf16.gmra.mrb[0].mxu0 %v3144
    %v3986 = vpop.f32.mrb[0].mxu0
    %v3987 = vadd.f32 %v3206, %v3986
    %v3988 = vpop.f32.mrb[0].mxu0
    %v3989 = vpop.f32.mrb[0].mxu0
    %v3990 = vadd.f32 %v3206, %v3989
    %v3991 = vpop.f32.mrb[0].mxu0
    %3992 = vmatprep.mubr.bf16.mxu0 0
    %3993 = vmatmul.mubr.bf16.gmra.mrb[0].mxu0 %v3145
    %v3994 = vpop.f32.mrb[0].mxu0
    %v3995 = vadd.f32 %v3206, %v3994
    %v3996 = vpop.f32.mrb[0].mxu0
    %v3997 = vpop.f32.mrb[0].mxu0
    %v3998 = vadd.f32 %v3206, %v3997
    %v3999 = vpop.f32.mrb[0].mxu0
    %4000 = vmatprep.mubr.bf16.mxu0 0
    %4001 = vmatmul.mubr.bf16.gmra.mrb[0].mxu0 %v3146
    %v4002 = vpop.f32.mrb[0].mxu0
    %v4003 = vadd.f32 %v3206, %v4002
    %v4004 = vpop.f32.mrb[0].mxu0
    %v4005 = vpop.f32.mrb[0].mxu0
    %v4006 = vadd.f32 %v3206, %v4005
    %v4007 = vpop.f32.mrb[0].mxu0
    %4008 = vmatprep.mubr.bf16.mxu0 0
    %4009 = vmatmul.mubr.bf16.gmra.mrb[0].mxu0 %v3147
    %v4010 = vpop.f32.mrb[0].mxu0
    %v4011 = vadd.f32 %v3206, %v4010
    %v4012 = vpop.f32.mrb[0].mxu0
    %v4013 = vpop.f32.mrb[0].mxu0
    %v4014 = vadd.f32 %v3206, %v4013
    %v4015 = vpop.f32.mrb[0].mxu0
    %4016 = vmatprep.mubr.bf16.mxu0 0
    %4017 = vmatmul.mubr.bf16.gmra.mrb[0].mxu0 %v3148
    %v4018 = vpop.f32.mrb[0].mxu0
    %v4019 = vadd.f32 %v3206, %v4018
    %v4020 = vpop.f32.mrb[0].mxu0
    %v4021 = vpop.f32.mrb[0].mxu0
    %v4022 = vadd.f32 %v3206, %v4021
    %v4023 = vpop.f32.mrb[0].mxu0
    %4024 = vmatprep.mubr.bf16.mxu0 0
    %4025 = vmatmul.mubr.bf16.gmra.mrb[0].mxu0 %v3149
    %v4026 = vpop.f32.mrb[0].mxu0
    %v4027 = vadd.f32 %v3206, %v4026
    %v4028 = vpop.f32.mrb[0].mxu0
    %v4029 = vpop.f32.mrb[0].mxu0
    %v4030 = vadd.f32 %v3206, %v4029
    %v4031 = vpop.f32.mrb[0].mxu0
    %4032 = vmatprep.mubr.bf16.mxu0 0
    %4033 = vmatmul.mubr.bf16.gmra.mrb[0].mxu0 %v3150
    %v4034 = vpop.f32.mrb[0].mxu0
    %v4035 = vadd.f32 %v3206, %v4034
    %v4036 = vpop.f32.mrb[0].mxu0
    %v4037 = vpop.f32.mrb[0].mxu0
    %v4038 = vadd.f32 %v3206, %v4037
    %v4039 = vpop.f32.mrb[0].mxu0
    %4040 = vmatprep.mubr.bf16.mxu0 0
    %4041 = vmatmul.mubr.bf16.gmra.mrb[0].mxu0 %v3151
    %v4042 = vpop.f32.mrb[0].mxu0
    %v4043 = vadd.f32 %v3206, %v4042
    %v4044 = vpop.f32.mrb[0].mxu0
    %v4045 = vpop.f32.mrb[0].mxu0
    %v4046 = vadd.f32 %v3206, %v4045
    %v4047 = vpop.f32.mrb[0].mxu0
    %4048 = vmatprep.mubr.bf16.mxu0 0
    %4049 = vmatmul.mubr.bf16.gmra.mrb[0].mxu0 %v3152
    %v4050 = vpop.f32.mrb[0].mxu0
    %v4051 = vadd.f32 %v3206, %v4050
    %v4052 = vpop.f32.mrb[0].mxu0
    %v4053 = vpop.f32.mrb[0].mxu0
    %v4054 = vadd.f32 %v3206, %v4053
    %v4055 = vpop.f32.mrb[0].mxu0
    %4056 = vmatprep.mubr.bf16.mxu0 0
    %4057 = vmatmul.mubr.bf16.gmra.mrb[0].mxu0 %v3153
    %v4058 = vpop.f32.mrb[0].mxu0
    %v4059 = vadd.f32 %v3206, %v4058
    %v4060 = vpop.f32.mrb[0].mxu0
    %v4061 = vpop.f32.mrb[0].mxu0
    %v4062 = vadd.f32 %v3206, %v4061
    %v4063 = vpop.f32.mrb[0].mxu0
    %4064 = vmatprep.mubr.bf16.mxu0 0
    %4065 = vmatmul.mubr.bf16.gmra.mrb[0].mxu0 %v3154
    %v4066 = vpop.f32.mrb[0].mxu0
    %v4067 = vadd.f32 %v3206, %v4066
    %v4068 = vpop.f32.mrb[0].mxu0
    %v4069 = vpop.f32.mrb[0].mxu0
    %v4070 = vadd.f32 %v3206, %v4069
    %v4071 = vpop.f32.mrb[0].mxu0
    %4072 = vmatprep.mubr.bf16.mxu0 0
    %4073 = vmatmul.mubr.bf16.gmra.mrb[0].mxu0 %v3155
    %v4074 = vpop.f32.mrb[0].mxu0
    %v4075 = vadd.f32 %v3206, %v4074
    %v4076 = vpop.f32.mrb[0].mxu0
    %v4077 = vpop.f32.mrb[0].mxu0
    %v4078 = vadd.f32 %v3206, %v4077
    %v4079 = vpop.f32.mrb[0].mxu0
    %4080 = vmatprep.mubr.bf16.mxu0 0
    %4081 = vmatmul.mubr.bf16.gmra.mrb[0].mxu0 %v3156
    %v4082 = vpop.f32.mrb[0].mxu0
    %v4083 = vadd.f32 %v3206, %v4082
    %v4084 = vpop.f32.mrb[0].mxu0
    %v4085 = vpop.f32.mrb[0].mxu0
    %v4086 = vadd.f32 %v3206, %v4085
    %v4087 = vpop.f32.mrb[0].mxu0
    %4088 = vmatprep.mubr.bf16.mxu0 0
    %4089 = vmatmul.mubr.bf16.gmra.mrb[0].mxu0 %v3157
    %v4090 = vpop.f32.mrb[0].mxu0
    %v4091 = vadd.f32 %v3206, %v4090
    %v4092 = vpop.f32.mrb[0].mxu0
    %v4093 = vpop.f32.mrb[0].mxu0
    %v4094 = vadd.f32 %v3206, %v4093
    %v4095 = vpop.f32.mrb[0].mxu0
    %4096 = vmatprep.mubr.bf16.mxu0 0
    %4097 = vmatmul.mubr.bf16.gmra.mrb[0].mxu0 %v3158
    %v4098 = vpop.f32.mrb[0].mxu0
    %v4099 = vadd.f32 %v3206, %v4098
    %v4100 = vpop.f32.mrb[0].mxu0
    %v4101 = vpop.f32.mrb[0].mxu0
    %v4102 = vadd.f32 %v3206, %v4101
    %v4103 = vpop.f32.mrb[0].mxu0
    %4104 = vmatprep.mubr.bf16.mxu0 0
    %4105 = vmatmul.mubr.bf16.gmra.mrb[0].mxu0 %v3159
    %v4106 = vpop.f32.mrb[0].mxu0
    %v4107 = vadd.f32 %v3206, %v4106
    %v4108 = vpop.f32.mrb[0].mxu0
    %v4109 = vpop.f32.mrb[0].mxu0
    %v4110 = vadd.f32 %v3206, %v4109
    %v4111 = vpop.f32.mrb[0].mxu0
    %4112 = vmatprep.mubr.bf16.mxu0 0
    %4113 = vmatmul.mubr.bf16.gmra.mrb[0].mxu0 %v3160
    %v4114 = vpop.f32.mrb[0].mxu0
    %v4115 = vadd.f32 %v3206, %v4114
    %v4116 = vpop.f32.mrb[0].mxu0
    %v4117 = vpop.f32.mrb[0].mxu0
    %v4118 = vadd.f32 %v3206, %v4117
    %v4119 = vpop.f32.mrb[0].mxu0
    %4120 = vmatprep.mubr.bf16.mxu0 0
    %4121 = vmatmul.mubr.bf16.gmra.mrb[0].mxu0 %v3161
    %v4122 = vpop.f32.mrb[0].mxu0
    %v4123 = vadd.f32 %v3206, %v4122
    %v4124 = vpop.f32.mrb[0].mxu0
    %v4125 = vpop.f32.mrb[0].mxu0
    %v4126 = vadd.f32 %v3206, %v4125
    %v4127 = vpop.f32.mrb[0].mxu0
    %4128 = vmatprep.mubr.bf16.mxu0 0
    %4129 = vmatmul.mubr.bf16.gmra.mrb[0].mxu0 %v3162
    %v4130 = vpop.f32.mrb[0].mxu0
    %v4131 = vadd.f32 %v3206, %v4130
    %v4132 = vpop.f32.mrb[0].mxu0
    %v4133 = vpop.f32.mrb[0].mxu0
    %v4134 = vadd.f32 %v3206, %v4133
    %v4135 = vpop.f32.mrb[0].mxu0
    %4136 = vmatprep.mubr.bf16.mxu0 0
    %4137 = vmatmul.mubr.bf16.gmra.mrb[0].mxu0 %v3163
    %v4138 = vpop.f32.mrb[0].mxu0
    %v4139 = vadd.f32 %v3206, %v4138
    %v4140 = vpop.f32.mrb[0].mxu0
    %v4141 = vpop.f32.mrb[0].mxu0
    %v4142 = vadd.f32 %v3206, %v4141
    %v4143 = vpop.f32.mrb[0].mxu0
    %4144 = vmatprep.mubr.bf16.mxu0 0
    %4145 = vmatmul.mubr.bf16.gmra.mrb[0].mxu0 %v3164
    %v4146 = vpop.f32.mrb[0].mxu0
    %v4147 = vadd.f32 %v3206, %v4146
    %v4148 = vpop.f32.mrb[0].mxu0
    %v4149 = vpop.f32.mrb[0].mxu0
    %v4150 = vadd.f32 %v3206, %v4149
    %v4151 = vpop.f32.mrb[0].mxu0
    %4152 = vmatprep.mubr.bf16.mxu0 0
    %4153 = vmatmul.mubr.bf16.gmra.mrb[0].mxu0 %v3165
    %v4154 = vpop.f32.mrb[0].mxu0
    %v4155 = vadd.f32 %v3206, %v4154
    %v4156 = vpop.f32.mrb[0].mxu0
    %v4157 = vpop.f32.mrb[0].mxu0
    %v4158 = vadd.f32 %v3206, %v4157
    %v4159 = vpop.f32.mrb[0].mxu0
    %4160 = vmatprep.mubr.bf16.mxu0 0
    %4161 = vmatmul.mubr.bf16.gmra.mrb[0].mxu0 %v3166
    %v4162 = vpop.f32.mrb[0].mxu0
    %v4163 = vadd.f32 %v3206, %v4162
    %v4164 = vpop.f32.mrb[0].mxu0
    %v4165 = vpop.f32.mrb[0].mxu0
    %v4166 = vadd.f32 %v3206, %v4165
    %v4167 = vpop.f32.mrb[0].mxu0
    %4168 = vmatprep.mubr.bf16.mxu0 0
    %4169 = vmatmul.mubr.bf16.gmra.mrb[0].mxu0 %v3167
    %v4170 = vpop.f32.mrb[0].mxu0
    %v4171 = vadd.f32 %v3206, %v4170
    %v4172 = vpop.f32.mrb[0].mxu0
    %v4173 = vpop.f32.mrb[0].mxu0
    %v4174 = vadd.f32 %v3206, %v4173
    %v4175 = vpop.f32.mrb[0].mxu0
    %4176 = vmatprep.mubr.bf16.mxu0 0
    %4177 = vmatmul.mubr.bf16.gmra.mrb[0].mxu0 %v3168
    %v4178 = vpop.f32.mrb[0].mxu0
    %v4179 = vadd.f32 %v3206, %v4178
    %v4180 = vpop.f32.mrb[0].mxu0
    %v4181 = vpop.f32.mrb[0].mxu0
    %v4182 = vadd.f32 %v3206, %v4181
    %v4183 = vpop.f32.mrb[0].mxu0
    %4184 = vmatprep.mubr.bf16.mxu0 0
    %4185 = vmatmul.mubr.bf16.gmra.mrb[0].mxu0 %v3169
    %v4186 = vpop.f32.mrb[0].mxu0
    %v4187 = vadd.f32 %v3206, %v4186
    %v4188 = vpop.f32.mrb[0].mxu0
    %v4189 = vpop.f32.mrb[0].mxu0
    %v4190 = vadd.f32 %v3206, %v4189
    %v4191 = vpop.f32.mrb[0].mxu0
    %4192 = vmatprep.mubr.bf16.mxu0 0
    %4193 = vmatmul.mubr.bf16.gmra.mrb[0].mxu0 %v3170
    %v4194 = vpop.f32.mrb[0].mxu0
    %v4195 = vadd.f32 %v3206, %v4194
    %v4196 = vpop.f32.mrb[0].mxu0
    %v4197 = vpop.f32.mrb[0].mxu0
    %v4198 = vadd.f32 %v3206, %v4197
    %v4199 = vpop.f32.mrb[0].mxu0
    %4200 = vmatprep.mubr.bf16.mxu0 0
    %4201 = vmatmul.mubr.bf16.gmra.mrb[0].mxu0 %v3171
    %v4202 = vpop.f32.mrb[0].mxu0
    %v4203 = vadd.f32 %v3206, %v4202
    %v4204 = vpop.f32.mrb[0].mxu0
    %v4205 = vpop.f32.mrb[0].mxu0
    %v4206 = vadd.f32 %v3206, %v4205
    %v4207 = vpop.f32.mrb[0].mxu0
    %4208 = vmatprep.mubr.bf16.mxu0 0
    %4209 = vmatmul.mubr.bf16.gmra.mrb[0].mxu0 %v3172
    %v4210 = vpop.f32.mrb[0].mxu0
    %v4211 = vadd.f32 %v3206, %v4210
    %v4212 = vpop.f32.mrb[0].mxu0
    %v4213 = vpop.f32.mrb[0].mxu0
    %v4214 = vadd.f32 %v3206, %v4213
    %v4215 = vpop.f32.mrb[0].mxu0
    %4216 = vmatprep.mubr.bf16.mxu0 0
    %4217 = vmatmul.mubr.bf16.gmra.mrb[0].mxu0 %v3173
    %v4218 = vpop.f32.mrb[0].mxu0
    %v4219 = vadd.f32 %v3206, %v4218
    %v4220 = vpop.f32.mrb[0].mxu0
    %v4221 = vpop.f32.mrb[0].mxu0
    %v4222 = vadd.f32 %v3206, %v4221
    %v4223 = vpop.f32.mrb[0].mxu0
    %4224 = vmatprep.mubr.bf16.mxu0 0
    %4225 = vmatmul.mubr.bf16.gmra.mrb[0].mxu0 %v3174
    %v4226 = vpop.f32.mrb[0].mxu0
    %v4227 = vadd.f32 %v3206, %v4226
    %v4228 = vpop.f32.mrb[0].mxu0
    %v4229 = vpop.f32.mrb[0].mxu0
    %v4230 = vadd.f32 %v3206, %v4229
    %v4231 = vpop.f32.mrb[0].mxu0
    %4232 = vmatprep.mubr.bf16.mxu0 0
    %4233 = vmatmul.mubr.bf16.gmra.mrb[0].mxu0 %v3175
    %v4234 = vpop.f32.mrb[0].mxu0
    %v4235 = vadd.f32 %v3206, %v4234
    %v4236 = vpop.f32.mrb[0].mxu0
    %v4237 = vpop.f32.mrb[0].mxu0
    %v4238 = vadd.f32 %v3206, %v4237
    %v4239 = vpop.f32.mrb[0].mxu0
    %4240 = vmatprep.mubr.bf16.mxu0 0
    %4241 = vmatmul.mubr.bf16.gmra.mrb[0].mxu0 %v3176
    %v4242 = vpop.f32.mrb[0].mxu0
    %v4243 = vadd.f32 %v3206, %v4242
    %v4244 = vpop.f32.mrb[0].mxu0
    %v4245 = vpop.f32.mrb[0].mxu0
    %v4246 = vadd.f32 %v3206, %v4245
    %v4247 = vpop.f32.mrb[0].mxu0
    %4248 = vmatprep.mubr.bf16.mxu0 0
    %4249 = vmatmul.mubr.bf16.gmra.mrb[0].mxu0 %v3177
    %v4250 = vpop.f32.mrb[0].mxu0
    %v4251 = vadd.f32 %v3206, %v4250
    %v4252 = vpop.f32.mrb[0].mxu0
    %v4253 = vpop.f32.mrb[0].mxu0
    %v4254 = vadd.f32 %v3206, %v4253
    %v4255 = vpop.f32.mrb[0].mxu0
    %4256 = vmatprep.mubr.bf16.mxu0 0
    %4257 = vmatmul.mubr.bf16.gmra.mrb[0].mxu0 %v3178
    %v4258 = vpop.f32.mrb[0].mxu0
    %v4259 = vadd.f32 %v3206, %v4258
    %v4260 = vpop.f32.mrb[0].mxu0
    %v4261 = vpop.f32.mrb[0].mxu0
    %v4262 = vadd.f32 %v3206, %v4261
    %v4263 = vpop.f32.mrb[0].mxu0
    %4264 = vmatprep.mubr.bf16.mxu0 0
    %4265 = vmatmul.mubr.bf16.gmra.mrb[0].mxu0 %v3179
    %v4266 = vpop.f32.mrb[0].mxu0
    %v4267 = vadd.f32 %v3206, %v4266
    %v4268 = vpop.f32.mrb[0].mxu0
    %v4269 = vpop.f32.mrb[0].mxu0
    %v4270 = vadd.f32 %v3206, %v4269
    %v4271 = vpop.f32.mrb[0].mxu0
    %4272 = vmatprep.mubr.bf16.mxu0 0
    %4273 = vmatmul.mubr.bf16.gmra.mrb[0].mxu0 %v3180
    %v4274 = vpop.f32.mrb[0].mxu0
    %v4275 = vadd.f32 %v3206, %v4274
    %v4276 = vpop.f32.mrb[0].mxu0
    %v4277 = vpop.f32.mrb[0].mxu0
    %v4278 = vadd.f32 %v3206, %v4277
    %v4279 = vpop.f32.mrb[0].mxu0
    %4280 = vmatprep.mubr.bf16.mxu0 0
    %4281 = vmatmul.mubr.bf16.gmra.mrb[0].mxu0 %v3181
    %v4282 = vpop.f32.mrb[0].mxu0
    %v4283 = vadd.f32 %v3206, %v4282
    %v4284 = vpop.f32.mrb[0].mxu0
    %v4285 = vpop.f32.mrb[0].mxu0
    %v4286 = vadd.f32 %v3206, %v4285
    %v4287 = vpop.f32.mrb[0].mxu0
    %4288 = vmatprep.mubr.bf16.mxu0 0
    %4289 = vmatmul.mubr.bf16.gmra.mrb[0].mxu0 %v3182
    %v4290 = vpop.f32.mrb[0].mxu0
    %v4291 = vadd.f32 %v3206, %v4290
    %v4292 = vpop.f32.mrb[0].mxu0
    %v4293 = vpop.f32.mrb[0].mxu0
    %v4294 = vadd.f32 %v3206, %v4293
    %v4295 = vpop.f32.mrb[0].mxu0
    %4296 = vmatprep.mubr.bf16.mxu0 0
    %4297 = vmatmul.mubr.bf16.gmra.mrb[0].mxu0 %v3183
    %v4298 = vpop.f32.mrb[0].mxu0
    %v4299 = vadd.f32 %v3206, %v4298
    %v4300 = vpop.f32.mrb[0].mxu0
    %v4301 = vpop.f32.mrb[0].mxu0
    %v4302 = vadd.f32 %v3206, %v4301
    %v4303 = vpop.f32.mrb[0].mxu0
    %4304 = vmatprep.mubr.bf16.mxu0 0
    %4305 = vmatmul.mubr.bf16.gmra.mrb[0].mxu0 %v3184
    %v4306 = vpop.f32.mrb[0].mxu0
    %v4307 = vadd.f32 %v3206, %v4306
    %v4308 = vpop.f32.mrb[0].mxu0
    %v4309 = vpop.f32.mrb[0].mxu0
    %v4310 = vadd.f32 %v3206, %v4309
    %v4311 = vpop.f32.mrb[0].mxu0
    %4312 = vdwg.mxu0
    %v4313 = vmax.f32 %v3291, 0.0
    %v4314 = vmax.f32 %v3294, 0.0
    %v4315 = vmax.f32 %v3299, 0.0
    %v4316 = vmax.f32 %v3302, 0.0
    %v4317 = vmax.f32 %v3307, 0.0
    %v4318 = vmax.f32 %v3310, 0.0
    %v4319 = vmax.f32 %v3315, 0.0
    %v4320 = vmax.f32 %v3318, 0.0
    %v4321 = vmax.f32 %v3323, 0.0
    %v4322 = vmax.f32 %v3326, 0.0
    %v4323 = vmax.f32 %v3331, 0.0
    %v4324 = vmax.f32 %v3334, 0.0
    %v4325 = vmax.f32 %v3339, 0.0
    %v4326 = vmax.f32 %v3342, 0.0
    %v4327 = vmax.f32 %v3347, 0.0
    %v4328 = vmax.f32 %v3350, 0.0
    %v4329 = vmax.f32 %v3355, 0.0
    %v4330 = vmax.f32 %v3358, 0.0
    %v4331 = vmax.f32 %v3363, 0.0
    %v4332 = vmax.f32 %v3366, 0.0
    %v4333 = vmax.f32 %v3371, 0.0
    %v4334 = vmax.f32 %v3374, 0.0
    %v4335 = vmax.f32 %v3379, 0.0
    %v4336 = vmax.f32 %v3382, 0.0
    %v4337 = vmax.f32 %v3387, 0.0
    %v4338 = vmax.f32 %v3390, 0.0
    %v4339 = vmax.f32 %v3395, 0.0
    %v4340 = vmax.f32 %v3398, 0.0
    %v4341 = vmax.f32 %v3403, 0.0
    %v4342 = vmax.f32 %v3406, 0.0
    %v4343 = vmax.f32 %v3411, 0.0
    %v4344 = vmax.f32 %v3414, 0.0
    %v4345 = vmax.f32 %v3419, 0.0
    %v4346 = vmax.f32 %v3422, 0.0
    %v4347 = vmax.f32 %v3427, 0.0
    %v4348 = vmax.f32 %v3430, 0.0
    %v4349 = vmax.f32 %v3435, 0.0
    %v4350 = vmax.f32 %v3438, 0.0
    %v4351 = vmax.f32 %v3443, 0.0
    %v4352 = vmax.f32 %v3446, 0.0
    %v4353 = vmax.f32 %v3451, 0.0
    %v4354 = vmax.f32 %v3454, 0.0
    %v4355 = vmax.f32 %v3459, 0.0
    %v4356 = vmax.f32 %v3462, 0.0
    %v4357 = vmax.f32 %v3467, 0.0
    %v4358 = vmax.f32 %v3470, 0.0
    %v4359 = vmax.f32 %v3475, 0.0
    %v4360 = vmax.f32 %v3478, 0.0
    %v4361 = vmax.f32 %v3483, 0.0
    %v4362 = vmax.f32 %v3486, 0.0
    %v4363 = vmax.f32 %v3491, 0.0
    %v4364 = vmax.f32 %v3494, 0.0
    %v4365 = vmax.f32 %v3499, 0.0
    %v4366 = vmax.f32 %v3502, 0.0
    %v4367 = vmax.f32 %v3507, 0.0
    %v4368 = vmax.f32 %v3510, 0.0
    %v4369 = vmax.f32 %v3515, 0.0
    %v4370 = vmax.f32 %v3518, 0.0
    %v4371 = vmax.f32 %v3523, 0.0
    %v4372 = vmax.f32 %v3526, 0.0
    %v4373 = vmax.f32 %v3531, 0.0
    %v4374 = vmax.f32 %v3534, 0.0
    %v4375 = vmax.f32 %v3539, 0.0
    %v4376 = vmax.f32 %v3542, 0.0
    %v4377 = vmax.f32 %v3547, 0.0
    %v4378 = vmax.f32 %v3550, 0.0
    %v4379 = vmax.f32 %v3555, 0.0
    %v4380 = vmax.f32 %v3558, 0.0
    %v4381 = vmax.f32 %v3563, 0.0
    %v4382 = vmax.f32 %v3566, 0.0
    %v4383 = vmax.f32 %v3571, 0.0
    %v4384 = vmax.f32 %v3574, 0.0
    %v4385 = vmax.f32 %v3579, 0.0
    %v4386 = vmax.f32 %v3582, 0.0
    %v4387 = vmax.f32 %v3587, 0.0
    %v4388 = vmax.f32 %v3590, 0.0
    %v4389 = vmax.f32 %v3595, 0.0
    %v4390 = vmax.f32 %v3598, 0.0
    %v4391 = vmax.f32 %v3603, 0.0
    %v4392 = vmax.f32 %v3606, 0.0
    %v4393 = vmax.f32 %v3611, 0.0
    %v4394 = vmax.f32 %v3614, 0.0
    %v4395 = vmax.f32 %v3619, 0.0
    %v4396 = vmax.f32 %v3622, 0.0
    %v4397 = vmax.f32 %v3627, 0.0
    %v4398 = vmax.f32 %v3630, 0.0
    %v4399 = vmax.f32 %v3635, 0.0
    %v4400 = vmax.f32 %v3638, 0.0
    %v4401 = vmax.f32 %v3643, 0.0
    %v4402 = vmax.f32 %v3646, 0.0
    %v4403 = vmax.f32 %v3651, 0.0
    %v4404 = vmax.f32 %v3654, 0.0
    %v4405 = vmax.f32 %v3659, 0.0
    %v4406 = vmax.f32 %v3662, 0.0
    %v4407 = vmax.f32 %v3667, 0.0
    %v4408 = vmax.f32 %v3670, 0.0
    %v4409 = vmax.f32 %v3675, 0.0
    %v4410 = vmax.f32 %v3678, 0.0
    %v4411 = vmax.f32 %v3683, 0.0
    %v4412 = vmax.f32 %v3686, 0.0
    %v4413 = vmax.f32 %v3691, 0.0
    %v4414 = vmax.f32 %v3694, 0.0
    %v4415 = vmax.f32 %v3699, 0.0
    %v4416 = vmax.f32 %v3702, 0.0
    %v4417 = vmax.f32 %v3707, 0.0
    %v4418 = vmax.f32 %v3710, 0.0
    %v4419 = vmax.f32 %v3715, 0.0
    %v4420 = vmax.f32 %v3718, 0.0
    %v4421 = vmax.f32 %v3723, 0.0
    %v4422 = vmax.f32 %v3726, 0.0
    %v4423 = vmax.f32 %v3731, 0.0
    %v4424 = vmax.f32 %v3734, 0.0
    %v4425 = vmax.f32 %v3739, 0.0
    %v4426 = vmax.f32 %v3742, 0.0
    %v4427 = vmax.f32 %v3747, 0.0
    %v4428 = vmax.f32 %v3750, 0.0
    %v4429 = vmax.f32 %v3755, 0.0
    %v4430 = vmax.f32 %v3758, 0.0
    %v4431 = vmax.f32 %v3763, 0.0
    %v4432 = vmax.f32 %v3766, 0.0
    %v4433 = vmax.f32 %v3771, 0.0
    %v4434 = vmax.f32 %v3774, 0.0
    %v4435 = vmax.f32 %v3779, 0.0
    %v4436 = vmax.f32 %v3782, 0.0
    %v4437 = vmax.f32 %v3787, 0.0
    %v4438 = vmax.f32 %v3790, 0.0
    %v4439 = vmax.f32 %v3795, 0.0
    %v4440 = vmax.f32 %v3798, 0.0
    %v4441 = vmax.f32 %v3803, 0.0
    %v4442 = vmax.f32 %v3806, 0.0
    %v4443 = vmax.f32 %v3811, 0.0
    %v4444 = vmax.f32 %v3814, 0.0
    %v4445 = vmax.f32 %v3819, 0.0
    %v4446 = vmax.f32 %v3822, 0.0
    %v4447 = vmax.f32 %v3827, 0.0
    %v4448 = vmax.f32 %v3830, 0.0
    %v4449 = vmax.f32 %v3835, 0.0
    %v4450 = vmax.f32 %v3838, 0.0
    %v4451 = vmax.f32 %v3843, 0.0
    %v4452 = vmax.f32 %v3846, 0.0
    %v4453 = vmax.f32 %v3851, 0.0
    %v4454 = vmax.f32 %v3854, 0.0
    %v4455 = vmax.f32 %v3859, 0.0
    %v4456 = vmax.f32 %v3862, 0.0
    %v4457 = vmax.f32 %v3867, 0.0
    %v4458 = vmax.f32 %v3870, 0.0
    %v4459 = vmax.f32 %v3875, 0.0
    %v4460 = vmax.f32 %v3878, 0.0
    %v4461 = vmax.f32 %v3883, 0.0
    %v4462 = vmax.f32 %v3886, 0.0
    %v4463 = vmax.f32 %v3891, 0.0
    %v4464 = vmax.f32 %v3894, 0.0
    %v4465 = vmax.f32 %v3899, 0.0
    %v4466 = vmax.f32 %v3902, 0.0
    %v4467 = vmax.f32 %v3907, 0.0
    %v4468 = vmax.f32 %v3910, 0.0
    %v4469 = vmax.f32 %v3915, 0.0
    %v4470 = vmax.f32 %v3918, 0.0
    %v4471 = vmax.f32 %v3923, 0.0
    %v4472 = vmax.f32 %v3926, 0.0
    %v4473 = vmax.f32 %v3931, 0.0
    %v4474 = vmax.f32 %v3934, 0.0
    %v4475 = vmax.f32 %v3939, 0.0
    %v4476 = vmax.f32 %v3942, 0.0
    %v4477 = vmax.f32 %v3947, 0.0
    %v4478 = vmax.f32 %v3950, 0.0
    %v4479 = vmax.f32 %v3955, 0.0
    %v4480 = vmax.f32 %v3958, 0.0
    %v4481 = vmax.f32 %v3963, 0.0
    %v4482 = vmax.f32 %v3966, 0.0
    %v4483 = vmax.f32 %v3971, 0.0
    %v4484 = vmax.f32 %v3974, 0.0
    %v4485 = vmax.f32 %v3979, 0.0
    %v4486 = vmax.f32 %v3982, 0.0
    %v4487 = vmax.f32 %v3987, 0.0
    %v4488 = vmax.f32 %v3990, 0.0
    %v4489 = vmax.f32 %v3995, 0.0
    %v4490 = vmax.f32 %v3998, 0.0
    %v4491 = vmax.f32 %v4003, 0.0
    %v4492 = vmax.f32 %v4006, 0.0
    %v4493 = vmax.f32 %v4011, 0.0
    %v4494 = vmax.f32 %v4014, 0.0
    %v4495 = vmax.f32 %v4019, 0.0
    %v4496 = vmax.f32 %v4022, 0.0
    %v4497 = vmax.f32 %v4027, 0.0
    %v4498 = vmax.f32 %v4030, 0.0
    %v4499 = vmax.f32 %v4035, 0.0
    %v4500 = vmax.f32 %v4038, 0.0
    %v4501 = vmax.f32 %v4043, 0.0
    %v4502 = vmax.f32 %v4046, 0.0
    %v4503 = vmax.f32 %v4051, 0.0
    %v4504 = vmax.f32 %v4054, 0.0
    %v4505 = vmax.f32 %v4059, 0.0
    %v4506 = vmax.f32 %v4062, 0.0
    %v4507 = vmax.f32 %v4067, 0.0
    %v4508 = vmax.f32 %v4070, 0.0
    %v4509 = vmax.f32 %v4075, 0.0
    %v4510 = vmax.f32 %v4078, 0.0
    %v4511 = vmax.f32 %v4083, 0.0
    %v4512 = vmax.f32 %v4086, 0.0
    %v4513 = vmax.f32 %v4091, 0.0
    %v4514 = vmax.f32 %v4094, 0.0
    %v4515 = vmax.f32 %v4099, 0.0
    %v4516 = vmax.f32 %v4102, 0.0
    %v4517 = vmax.f32 %v4107, 0.0
    %v4518 = vmax.f32 %v4110, 0.0
    %v4519 = vmax.f32 %v4115, 0.0
    %v4520 = vmax.f32 %v4118, 0.0
    %v4521 = vmax.f32 %v4123, 0.0
    %v4522 = vmax.f32 %v4126, 0.0
    %v4523 = vmax.f32 %v4131, 0.0
    %v4524 = vmax.f32 %v4134, 0.0
    %v4525 = vmax.f32 %v4139, 0.0
    %v4526 = vmax.f32 %v4142, 0.0
    %v4527 = vmax.f32 %v4147, 0.0
    %v4528 = vmax.f32 %v4150, 0.0
    %v4529 = vmax.f32 %v4155, 0.0
    %v4530 = vmax.f32 %v4158, 0.0
    %v4531 = vmax.f32 %v4163, 0.0
    %v4532 = vmax.f32 %v4166, 0.0
    %v4533 = vmax.f32 %v4171, 0.0
    %v4534 = vmax.f32 %v4174, 0.0
    %v4535 = vmax.f32 %v4179, 0.0
    %v4536 = vmax.f32 %v4182, 0.0
    %v4537 = vmax.f32 %v4187, 0.0
    %v4538 = vmax.f32 %v4190, 0.0
    %v4539 = vmax.f32 %v4195, 0.0
    %v4540 = vmax.f32 %v4198, 0.0
    %v4541 = vmax.f32 %v4203, 0.0
    %v4542 = vmax.f32 %v4206, 0.0
    %v4543 = vmax.f32 %v4211, 0.0
    %v4544 = vmax.f32 %v4214, 0.0
    %v4545 = vmax.f32 %v4219, 0.0
    %v4546 = vmax.f32 %v4222, 0.0
    %v4547 = vmax.f32 %v4227, 0.0
    %v4548 = vmax.f32 %v4230, 0.0
    %v4549 = vmax.f32 %v4235, 0.0
    %v4550 = vmax.f32 %v4238, 0.0
    %v4551 = vmax.f32 %v4243, 0.0
    %v4552 = vmax.f32 %v4246, 0.0
    %v4553 = vmax.f32 %v4251, 0.0
    %v4554 = vmax.f32 %v4254, 0.0
    %v4555 = vmax.f32 %v4259, 0.0
    %v4556 = vmax.f32 %v4262, 0.0
    %v4557 = vmax.f32 %v4267, 0.0
    %v4558 = vmax.f32 %v4270, 0.0
    %v4559 = vmax.f32 %v4275, 0.0
    %v4560 = vmax.f32 %v4278, 0.0
    %v4561 = vmax.f32 %v4283, 0.0
    %v4562 = vmax.f32 %v4286, 0.0
    %v4563 = vmax.f32 %v4291, 0.0
    %v4564 = vmax.f32 %v4294, 0.0
    %v4565 = vmax.f32 %v4299, 0.0
    %v4566 = vmax.f32 %v4302, 0.0
    %v4567 = vmax.f32 %v4307, 0.0
    %v4568 = vmax.f32 %v4310, 0.0
    %v4569 = vld [vmem:[#allocation2] sm:$0xff]
    %v4570 = vld [vmem:[#allocation2 + $0x8] sm:$0xff]
    %v4571 = vmax.f32 %v4313, %v4314
    %v4572 = vmax.f32 %v4571, %v4315
    %v4573 = vmax.f32 %v4572, %v4316
    %v4574 = vmax.f32 %v4573, %v4317
    %v4575 = vmax.f32 %v4574, %v4318
    %v4576 = vmax.f32 %v4575, %v4319
    %v4577 = vmax.f32 %v4576, %v4320
    %v4578 = vmax.f32 %v4577, %v4321
    %v4579 = vmax.f32 %v4578, %v4322
    %v4580 = vmax.f32 %v4579, %v4323
    %v4581 = vmax.f32 %v4580, %v4324
    %v4582 = vmax.f32 %v4581, %v4325
    %v4583 = vmax.f32 %v4582, %v4326
    %v4584 = vmax.f32 %v4583, %v4327
    %v4585 = vmax.f32 %v4584, %v4328
    %v4586 = vrot.slane %v4585, 4
    %v4587 = vmax.f32 %v4585, %v4586
    %v4588 = vrot.slane %v4587, 2
    %v4589 = vmax.f32 %v4587, %v4588
    %v4590 = vrot.slane %v4589, 1
    %v4591 = vmax.f32 %v4589, %v4590
    %v4592 = vmax.f32 %v4329, %v4330
    %v4593 = vmax.f32 %v4592, %v4331
    %v4594 = vmax.f32 %v4593, %v4332
    %v4595 = vmax.f32 %v4594, %v4333
    %v4596 = vmax.f32 %v4595, %v4334
    %v4597 = vmax.f32 %v4596, %v4335
    %v4598 = vmax.f32 %v4597, %v4336
    %v4599 = vmax.f32 %v4598, %v4337
    %v4600 = vmax.f32 %v4599, %v4338
    %v4601 = vmax.f32 %v4600, %v4339
    %v4602 = vmax.f32 %v4601, %v4340
    %v4603 = vmax.f32 %v4602, %v4341
    %v4604 = vmax.f32 %v4603, %v4342
    %v4605 = vmax.f32 %v4604, %v4343
    %v4606 = vmax.f32 %v4605, %v4344
    %v4607 = vrot.slane %v4606, 4
    %v4608 = vmax.f32 %v4606, %v4607
    %v4609 = vrot.slane %v4608, 2
    %v4610 = vmax.f32 %v4608, %v4609
    %v4611 = vrot.slane %v4610, 1
    %v4612 = vmax.f32 %v4610, %v4611
    %v4613 = vmax.f32 %v4345, %v4346
    %v4614 = vmax.f32 %v4613, %v4347
    %v4615 = vmax.f32 %v4614, %v4348
    %v4616 = vmax.f32 %v4615, %v4349
    %v4617 = vmax.f32 %v4616, %v4350
    %v4618 = vmax.f32 %v4617, %v4351
    %v4619 = vmax.f32 %v4618, %v4352
    %v4620 = vmax.f32 %v4619, %v4353
    %v4621 = vmax.f32 %v4620, %v4354
    %v4622 = vmax.f32 %v4621, %v4355
    %v4623 = vmax.f32 %v4622, %v4356
    %v4624 = vmax.f32 %v4623, %v4357
    %v4625 = vmax.f32 %v4624, %v4358
    %v4626 = vmax.f32 %v4625, %v4359
    %v4627 = vmax.f32 %v4626, %v4360
    %v4628 = vrot.slane %v4627, 4
    %v4629 = vmax.f32 %v4627, %v4628
    %v4630 = vrot.slane %v4629, 2
    %v4631 = vmax.f32 %v4629, %v4630
    %v4632 = vrot.slane %v4631, 1
    %v4633 = vmax.f32 %v4631, %v4632
    %v4634 = vmax.f32 %v4361, %v4362
    %v4635 = vmax.f32 %v4634, %v4363
    %v4636 = vmax.f32 %v4635, %v4364
    %v4637 = vmax.f32 %v4636, %v4365
    %v4638 = vmax.f32 %v4637, %v4366
    %v4639 = vmax.f32 %v4638, %v4367
    %v4640 = vmax.f32 %v4639, %v4368
    %v4641 = vmax.f32 %v4640, %v4369
    %v4642 = vmax.f32 %v4641, %v4370
    %v4643 = vmax.f32 %v4642, %v4371
    %v4644 = vmax.f32 %v4643, %v4372
    %v4645 = vmax.f32 %v4644, %v4373
    %v4646 = vmax.f32 %v4645, %v4374
    %v4647 = vmax.f32 %v4646, %v4375
    %v4648 = vmax.f32 %v4647, %v4376
    %v4649 = vrot.slane %v4648, 4
    %v4650 = vmax.f32 %v4648, %v4649
    %v4651 = vrot.slane %v4650, 2
    %v4652 = vmax.f32 %v4650, %v4651
    %v4653 = vrot.slane %v4652, 1
    %v4654 = vmax.f32 %v4652, %v4653
    %v4655 = vmax.f32 %v4377, %v4378
    %v4656 = vmax.f32 %v4655, %v4379
    %v4657 = vmax.f32 %v4656, %v4380
    %v4658 = vmax.f32 %v4657, %v4381
    %v4659 = vmax.f32 %v4658, %v4382
    %v4660 = vmax.f32 %v4659, %v4383
    %v4661 = vmax.f32 %v4660, %v4384
    %v4662 = vmax.f32 %v4661, %v4385
    %v4663 = vmax.f32 %v4662, %v4386
    %v4664 = vmax.f32 %v4663, %v4387
    %v4665 = vmax.f32 %v4664, %v4388
    %v4666 = vmax.f32 %v4665, %v4389
    %v4667 = vmax.f32 %v4666, %v4390
    %v4668 = vmax.f32 %v4667, %v4391
    %v4669 = vmax.f32 %v4668, %v4392
    %v4670 = vrot.slane %v4669, 4
    %v4671 = vmax.f32 %v4669, %v4670
    %v4672 = vrot.slane %v4671, 2
    %v4673 = vmax.f32 %v4671, %v4672
    %v4674 = vrot.slane %v4673, 1
    %v4675 = vmax.f32 %v4673, %v4674
    %v4676 = vmax.f32 %v4393, %v4394
    %v4677 = vmax.f32 %v4676, %v4395
    %v4678 = vmax.f32 %v4677, %v4396
    %v4679 = vmax.f32 %v4678, %v4397
    %v4680 = vmax.f32 %v4679, %v4398
    %v4681 = vmax.f32 %v4680, %v4399
    %v4682 = vmax.f32 %v4681, %v4400
    %v4683 = vmax.f32 %v4682, %v4401
    %v4684 = vmax.f32 %v4683, %v4402
    %v4685 = vmax.f32 %v4684, %v4403
    %v4686 = vmax.f32 %v4685, %v4404
    %v4687 = vmax.f32 %v4686, %v4405
    %v4688 = vmax.f32 %v4687, %v4406
    %v4689 = vmax.f32 %v4688, %v4407
    %v4690 = vmax.f32 %v4689, %v4408
    %v4691 = vrot.slane %v4690, 4
    %v4692 = vmax.f32 %v4690, %v4691
    %v4693 = vrot.slane %v4692, 2
    %v4694 = vmax.f32 %v4692, %v4693
    %v4695 = vrot.slane %v4694, 1
    %v4696 = vmax.f32 %v4694, %v4695
    %v4697 = vmax.f32 %v4409, %v4410
    %v4698 = vmax.f32 %v4697, %v4411
    %v4699 = vmax.f32 %v4698, %v4412
    %v4700 = vmax.f32 %v4699, %v4413
    %v4701 = vmax.f32 %v4700, %v4414
    %v4702 = vmax.f32 %v4701, %v4415
    %v4703 = vmax.f32 %v4702, %v4416
    %v4704 = vmax.f32 %v4703, %v4417
    %v4705 = vmax.f32 %v4704, %v4418
    %v4706 = vmax.f32 %v4705, %v4419
    %v4707 = vmax.f32 %v4706, %v4420
    %v4708 = vmax.f32 %v4707, %v4421
    %v4709 = vmax.f32 %v4708, %v4422
    %v4710 = vmax.f32 %v4709, %v4423
    %v4711 = vmax.f32 %v4710, %v4424
    %v4712 = vrot.slane %v4711, 4
    %v4713 = vmax.f32 %v4711, %v4712
    %v4714 = vrot.slane %v4713, 2
    %v4715 = vmax.f32 %v4713, %v4714
    %v4716 = vrot.slane %v4715, 1
    %v4717 = vmax.f32 %v4715, %v4716
    %v4718 = vmax.f32 %v4425, %v4426
    %v4719 = vmax.f32 %v4718, %v4427
    %v4720 = vmax.f32 %v4719, %v4428
    %v4721 = vmax.f32 %v4720, %v4429
    %v4722 = vmax.f32 %v4721, %v4430
    %v4723 = vmax.f32 %v4722, %v4431
    %v4724 = vmax.f32 %v4723, %v4432
    %v4725 = vmax.f32 %v4724, %v4433
    %v4726 = vmax.f32 %v4725, %v4434
    %v4727 = vmax.f32 %v4726, %v4435
    %v4728 = vmax.f32 %v4727, %v4436
    %v4729 = vmax.f32 %v4728, %v4437
    %v4730 = vmax.f32 %v4729, %v4438
    %v4731 = vmax.f32 %v4730, %v4439
    %v4732 = vmax.f32 %v4731, %v4440
    %v4733 = vrot.slane %v4732, 4
    %v4734 = vmax.f32 %v4732, %v4733
    %v4735 = vrot.slane %v4734, 2
    %v4736 = vmax.f32 %v4734, %v4735
    %v4737 = vrot.slane %v4736, 1
    %v4738 = vmax.f32 %v4736, %v4737
    %v4739 = vmax.f32 %v4441, %v4442
    %v4740 = vmax.f32 %v4739, %v4443
    %v4741 = vmax.f32 %v4740, %v4444
    %v4742 = vmax.f32 %v4741, %v4445
    %v4743 = vmax.f32 %v4742, %v4446
    %v4744 = vmax.f32 %v4743, %v4447
    %v4745 = vmax.f32 %v4744, %v4448
    %v4746 = vmax.f32 %v4745, %v4449
    %v4747 = vmax.f32 %v4746, %v4450
    %v4748 = vmax.f32 %v4747, %v4451
    %v4749 = vmax.f32 %v4748, %v4452
    %v4750 = vmax.f32 %v4749, %v4453
    %v4751 = vmax.f32 %v4750, %v4454
    %v4752 = vmax.f32 %v4751, %v4455
    %v4753 = vmax.f32 %v4752, %v4456
    %v4754 = vrot.slane %v4753, 4
    %v4755 = vmax.f32 %v4753, %v4754
    %v4756 = vrot.slane %v4755, 2
    %v4757 = vmax.f32 %v4755, %v4756
    %v4758 = vrot.slane %v4757, 1
    %v4759 = vmax.f32 %v4757, %v4758
    %v4760 = vmax.f32 %v4457, %v4458
    %v4761 = vmax.f32 %v4760, %v4459
    %v4762 = vmax.f32 %v4761, %v4460
    %v4763 = vmax.f32 %v4762, %v4461
    %v4764 = vmax.f32 %v4763, %v4462
    %v4765 = vmax.f32 %v4764, %v4463
    %v4766 = vmax.f32 %v4765, %v4464
    %v4767 = vmax.f32 %v4766, %v4465
    %v4768 = vmax.f32 %v4767, %v4466
    %v4769 = vmax.f32 %v4768, %v4467
    %v4770 = vmax.f32 %v4769, %v4468
    %v4771 = vmax.f32 %v4770, %v4469
    %v4772 = vmax.f32 %v4771, %v4470
    %v4773 = vmax.f32 %v4772, %v4471
    %v4774 = vmax.f32 %v4773, %v4472
    %v4775 = vrot.slane %v4774, 4
    %v4776 = vmax.f32 %v4774, %v4775
    %v4777 = vrot.slane %v4776, 2
    %v4778 = vmax.f32 %v4776, %v4777
    %v4779 = vrot.slane %v4778, 1
    %v4780 = vmax.f32 %v4778, %v4779
    %v4781 = vmax.f32 %v4473, %v4474
    %v4782 = vmax.f32 %v4781, %v4475
    %v4783 = vmax.f32 %v4782, %v4476
    %v4784 = vmax.f32 %v4783, %v4477
    %v4785 = vmax.f32 %v4784, %v4478
    %v4786 = vmax.f32 %v4785, %v4479
    %v4787 = vmax.f32 %v4786, %v4480
    %v4788 = vmax.f32 %v4787, %v4481
    %v4789 = vmax.f32 %v4788, %v4482
    %v4790 = vmax.f32 %v4789, %v4483
    %v4791 = vmax.f32 %v4790, %v4484
    %v4792 = vmax.f32 %v4791, %v4485
    %v4793 = vmax.f32 %v4792, %v4486
    %v4794 = vmax.f32 %v4793, %v4487
    %v4795 = vmax.f32 %v4794, %v4488
    %v4796 = vrot.slane %v4795, 4
    %v4797 = vmax.f32 %v4795, %v4796
    %v4798 = vrot.slane %v4797, 2
    %v4799 = vmax.f32 %v4797, %v4798
    %v4800 = vrot.slane %v4799, 1
    %v4801 = vmax.f32 %v4799, %v4800
    %v4802 = vmax.f32 %v4489, %v4490
    %v4803 = vmax.f32 %v4802, %v4491
    %v4804 = vmax.f32 %v4803, %v4492
    %v4805 = vmax.f32 %v4804, %v4493
    %v4806 = vmax.f32 %v4805, %v4494
    %v4807 = vmax.f32 %v4806, %v4495
    %v4808 = vmax.f32 %v4807, %v4496
    %v4809 = vmax.f32 %v4808, %v4497
    %v4810 = vmax.f32 %v4809, %v4498
    %v4811 = vmax.f32 %v4810, %v4499
    %v4812 = vmax.f32 %v4811, %v4500
    %v4813 = vmax.f32 %v4812, %v4501
    %v4814 = vmax.f32 %v4813, %v4502
    %v4815 = vmax.f32 %v4814, %v4503
    %v4816 = vmax.f32 %v4815, %v4504
    %v4817 = vrot.slane %v4816, 4
    %v4818 = vmax.f32 %v4816, %v4817
    %v4819 = vrot.slane %v4818, 2
    %v4820 = vmax.f32 %v4818, %v4819
    %v4821 = vrot.slane %v4820, 1
    %v4822 = vmax.f32 %v4820, %v4821
    %v4823 = vmax.f32 %v4505, %v4506
    %v4824 = vmax.f32 %v4823, %v4507
    %v4825 = vmax.f32 %v4824, %v4508
    %v4826 = vmax.f32 %v4825, %v4509
    %v4827 = vmax.f32 %v4826, %v4510
    %v4828 = vmax.f32 %v4827, %v4511
    %v4829 = vmax.f32 %v4828, %v4512
    %v4830 = vmax.f32 %v4829, %v4513
    %v4831 = vmax.f32 %v4830, %v4514
    %v4832 = vmax.f32 %v4831, %v4515
    %v4833 = vmax.f32 %v4832, %v4516
    %v4834 = vmax.f32 %v4833, %v4517
    %v4835 = vmax.f32 %v4834, %v4518
    %v4836 = vmax.f32 %v4835, %v4519
    %v4837 = vmax.f32 %v4836, %v4520
    %v4838 = vrot.slane %v4837, 4
    %v4839 = vmax.f32 %v4837, %v4838
    %v4840 = vrot.slane %v4839, 2
    %v4841 = vmax.f32 %v4839, %v4840
    %v4842 = vrot.slane %v4841, 1
    %v4843 = vmax.f32 %v4841, %v4842
    %v4844 = vmax.f32 %v4521, %v4522
    %v4845 = vmax.f32 %v4844, %v4523
    %v4846 = vmax.f32 %v4845, %v4524
    %v4847 = vmax.f32 %v4846, %v4525
    %v4848 = vmax.f32 %v4847, %v4526
    %v4849 = vmax.f32 %v4848, %v4527
    %v4850 = vmax.f32 %v4849, %v4528
    %v4851 = vmax.f32 %v4850, %v4529
    %v4852 = vmax.f32 %v4851, %v4530
    %v4853 = vmax.f32 %v4852, %v4531
    %v4854 = vmax.f32 %v4853, %v4532
    %v4855 = vmax.f32 %v4854, %v4533
    %v4856 = vmax.f32 %v4855, %v4534
    %v4857 = vmax.f32 %v4856, %v4535
    %v4858 = vmax.f32 %v4857, %v4536
    %v4859 = vrot.slane %v4858, 4
    %v4860 = vmax.f32 %v4858, %v4859
    %v4861 = vrot.slane %v4860, 2
    %v4862 = vmax.f32 %v4860, %v4861
    %v4863 = vrot.slane %v4862, 1
    %v4864 = vmax.f32 %v4862, %v4863
    %v4865 = vmax.f32 %v4537, %v4538
    %v4866 = vmax.f32 %v4865, %v4539
    %v4867 = vmax.f32 %v4866, %v4540
    %v4868 = vmax.f32 %v4867, %v4541
    %v4869 = vmax.f32 %v4868, %v4542
    %v4870 = vmax.f32 %v4869, %v4543
    %v4871 = vmax.f32 %v4870, %v4544
    %v4872 = vmax.f32 %v4871, %v4545
    %v4873 = vmax.f32 %v4872, %v4546
    %v4874 = vmax.f32 %v4873, %v4547
    %v4875 = vmax.f32 %v4874, %v4548
    %v4876 = vmax.f32 %v4875, %v4549
    %v4877 = vmax.f32 %v4876, %v4550
    %v4878 = vmax.f32 %v4877, %v4551
    %v4879 = vmax.f32 %v4878, %v4552
    %v4880 = vrot.slane %v4879, 4
    %v4881 = vmax.f32 %v4879, %v4880
    %v4882 = vrot.slane %v4881, 2
    %v4883 = vmax.f32 %v4881, %v4882
    %v4884 = vrot.slane %v4883, 1
    %v4885 = vmax.f32 %v4883, %v4884
    %v4886 = vmax.f32 %v4553, %v4554
    %v4887 = vmax.f32 %v4886, %v4555
    %v4888 = vmax.f32 %v4887, %v4556
    %v4889 = vmax.f32 %v4888, %v4557
    %v4890 = vmax.f32 %v4889, %v4558
    %v4891 = vmax.f32 %v4890, %v4559
    %v4892 = vmax.f32 %v4891, %v4560
    %v4893 = vmax.f32 %v4892, %v4561
    %v4894 = vmax.f32 %v4893, %v4562
    %v4895 = vmax.f32 %v4894, %v4563
    %v4896 = vmax.f32 %v4895, %v4564
    %v4897 = vmax.f32 %v4896, %v4565
    %v4898 = vmax.f32 %v4897, %v4566
    %v4899 = vmax.f32 %v4898, %v4567
    %v4900 = vmax.f32 %v4899, %v4568
    %v4901 = vrot.slane %v4900, 4
    %v4902 = vmax.f32 %v4900, %v4901
    %v4903 = vrot.slane %v4902, 2
    %v4904 = vmax.f32 %v4902, %v4903
    %v4905 = vrot.slane %v4904, 1
    %v4906 = vmax.f32 %v4904, %v4905
    %vm4923 = vcmask 1041409
    %v4924 = vsel %vm4923, %v4612, %v4591
    %vm4925 = vcmask 1042434
    %v4926 = vsel %vm4925, %v4633, %v4924
    %vm4927 = vcmask 1043459
    %v4928 = vsel %vm4927, %v4654, %v4926
    %vm4929 = vcmask 1044484
    %v4930 = vsel %vm4929, %v4675, %v4928
    %vm4931 = vcmask 1045509
    %v4932 = vsel %vm4931, %v4696, %v4930
    %vm4933 = vcmask 1046534
    %v4934 = vsel %vm4933, %v4717, %v4932
    %vm4935 = vcmask 1047559
    %v4936 = vsel %vm4935, %v4738, %v4934
    %v4937 = vsel %vm4923, %v4780, %v4759
    %v4938 = vsel %vm4925, %v4801, %v4937
    %v4939 = vsel %vm4927, %v4822, %v4938
    %v4940 = vsel %vm4929, %v4843, %v4939
    %v4941 = vsel %vm4931, %v4864, %v4940
    %v4942 = vsel %vm4933, %v4885, %v4941
    %v4943 = vsel %vm4935, %v4906, %v4942
    %v4946 = vmax.f32 %v4569, %v4936
    %v4947 = vmax.f32 %v4570, %v4943
    %4948 = vst [vmem:[#allocation2] sm:$0xff] %v4946
    %4949 = vst [vmem:[#allocation2 + $0x8] sm:$0xff] %v4947
    // Predicated region
    $region66: #{tpu_custom_call.1} parent=1 // pred_check
      %p4950 = pneg %p55
    $region67: #{tpu_custom_call.1} parent=1 // pred_check_branch
      %4952 = sbr.rel (%p4950) target = $region69
    $region68: #{tpu_custom_call.1} parent=1 // pred_region
      %v4953 = vld [vmem:[#allocation2] sm:$0xff]
      %v4954 = vld [vmem:[#allocation2 + $0x8] sm:$0xff]
      %v4955 = vpack.c.bf16 %v4954, %v4953
      %v4956 = vld [vmem:[%s8] sm:$0xf]
      %v4957 = vld [vmem:[%s8 + $0x4] sm:$0xf]
      %v4958 = vld [vmem:[%s8 + $0x8] sm:$0xf]
      %v4959 = vld [vmem:[%s8 + $0xc] sm:$0xf]
      %v4960 = vld [vmem:[%s8 + $0x10] sm:$0xf]
      %v4961 = vld [vmem:[%s8 + $0x14] sm:$0xf]
      %v4962 = vld [vmem:[%s8 + $0x18] sm:$0xf]
      %v4963 = vld [vmem:[%s8 + $0x1c] sm:$0xf]
      %v4964 = vld [vmem:[%s8 + $0x20] sm:$0xf]
      %v4965 = vld [vmem:[%s8 + $0x24] sm:$0xf]
      %v4966 = vld [vmem:[%s8 + $0x28] sm:$0xf]
      %v4967 = vld [vmem:[%s8 + $0x2c] sm:$0xf]
      %v4968 = vld [vmem:[%s8 + $0x30] sm:$0xf]
      %v4969 = vld [vmem:[%s8 + $0x34] sm:$0xf]
      %v4970 = vld [vmem:[%s8 + $0x38] sm:$0xf]
      %v4971 = vld [vmem:[%s8 + $0x3c] sm:$0xf]
      %v4972 = vld [vmem:[%s9] sm:$0x1]
      %v4974 = vlaneseq
      %v4975 = vshrl.u32 %v4974, 7
      %v4976 = vsub.s32 0, %v4975
      %v4977 = vrot.slane %v4972, %v4976
      %v4995 = vunpack.c.l.b16 %v4956
      %v4996 = vunpack.c.l.b16 %v4957
      %v4997 = vunpack.c.l.b16 %v4958
      %v4998 = vunpack.c.l.b16 %v4959
      %v4999 = vunpack.c.l.b16 %v4960
      %v5000 = vunpack.c.l.b16 %v4961
      %v5001 = vunpack.c.l.b16 %v4962
      %v5002 = vunpack.c.l.b16 %v4963
      %v5003 = vunpack.c.l.b16 %v4964
      %v5004 = vunpack.c.l.b16 %v4965
      %v5005 = vunpack.c.l.b16 %v4966
      %v5006 = vunpack.c.l.b16 %v4967
      %v5007 = vunpack.c.l.b16 %v4968
      %v5008 = vunpack.c.l.b16 %v4969
      %v5009 = vunpack.c.l.b16 %v4970
      %v5010 = vunpack.c.l.b16 %v4971
      %v5011 = vpack.c.b16 %v4996, %v4995
      %v5012 = vpack.c.b16 %v4998, %v4997
      %v5013 = vpack.c.b16 %v5000, %v4999
      %v5014 = vpack.c.b16 %v5002, %v5001
      %v5015 = vpack.c.b16 %v5004, %v5003
      %v5016 = vpack.c.b16 %v5006, %v5005
      %v5017 = vpack.c.b16 %v5008, %v5007
      %v5018 = vpack.c.b16 %v5010, %v5009
      %5027 = vmatprep.subr.bf16.mxu0 0
      %5028 = vmatpush1.bf16.msra.mxu0 %v5011
      %5029 = vmatprep.subr.bf16.mxu0 0
      %5030 = vmatpush1.bf16.msra.mxu0 %v5012
      %5031 = vmatprep.subr.bf16.mxu0 0
      %5032 = vmatpush1.bf16.msra.mxu0 %v5013
      %5033 = vmatprep.subr.bf16.mxu0 0
      %5034 = vmatpush1.bf16.msra.mxu0 %v5014
      %5035 = vmatprep.subr.bf16.mxu0 0
      %5036 = vmatpush1.bf16.msra.mxu0 %v5015
      %5037 = vmatprep.subr.bf16.mxu0 0
      %5038 = vmatpush1.bf16.msra.mxu0 %v5016
      %5039 = vmatprep.subr.bf16.mxu0 0
      %5040 = vmatpush1.bf16.msra.mxu0 %v5017
      %5041 = vmatprep.subr.bf16.mxu0 0
      %5042 = vmatpush1.bf16.msra.mxu0 %v5018
      %5043 = vmatprep.subr.bf16.mxu0 0
      %5044 = vmatpush1.bf16.msra.mxu0 0
      %5045 = vmatprep.subr.bf16.mxu0 0
      %5046 = vmatpush1.bf16.msra.mxu0 0
      %5047 = vmatprep.subr.bf16.mxu0 0
      %5048 = vmatpush1.bf16.msra.mxu0 0
      %5049 = vmatprep.subr.bf16.mxu0 0
      %5050 = vmatpush1.bf16.msra.mxu0 0
      %5051 = vmatprep.subr.bf16.mxu0 0
      %5052 = vmatpush1.bf16.msra.mxu0 0
      %5053 = vmatprep.subr.bf16.mxu0 0
      %5054 = vmatpush1.bf16.msra.mxu0 0
      %5055 = vmatprep.subr.bf16.mxu0 0
      %5056 = vmatpush1.bf16.msra.mxu0 0
      %5057 = vmatprep.subr.bf16.mxu0 0
      %5058 = vmatpush1.bf16.msra.mxu0 0
      %5059 = vmatprep.mubr.bf16.mxu0 0
      %5060 = vmatmul.mubr.bf16.gmra.mrb[0].mxu0 %v4955
      %v5061 = vpop.f32.mrb[0].mxu0
      %v5062 = vadd.f32 %v4977, %v5061
      %v5063 = vpop.f32.mrb[0].mxu0
      %v5064 = vpop.f32.mrb[0].mxu0
      %v5065 = vadd.f32 %v4977, %v5064
      %v5066 = vpop.f32.mrb[0].mxu0
      %5067 = vdwg.mxu0
      %v5068 = vmul.f32 %v5062, 0.5
      %v5069 = vmul.f32 %v5065, 0.5
      %v5070 = vmul.f32 %v5068, 1.442695
      %v5071 = vpow.pop %v5070
      %v5072 = vmul.f32 %v5069, 1.442695
      %v5073 = vpow.pop %v5072
      %v5074 = vld [vmem:[%s2] sm:$0xff]
      %v5075 = vld [vmem:[%s2 + $0x8] sm:$0xff]
      %5078 = vrot.lane.b32.xlu0 %v5071, 120
      %v5079 = vpop.permute.xlu0 %5078
      %5080 = vrot.lane.b32.xlu0 %v5073, 120
      %v5081 = vpop.permute.xlu0 %5080
      %v5084 = vmul.f32 %v5074, %v5079
      %v5085 = vmul.f32 %v5075, %v5081
      %v5086 = vadd.f32 %v5062, %v5084
      %v5087 = vadd.f32 %v5065, %v5085
      %v5088 = vld [vmem:[#allocation3 + $0x8] sm:$0xff]
      %v5089 = vld [vmem:[#allocation3 + $0x18] sm:$0xff]
      %v5090 = vpack.c.bf16 %v5087, %v5086
      %v5091 = vld [vmem:[%s10] sm:$0xf]
      %vm5092 = vcmask 64512
      %v5094 = vsel %vm5092, %v5090, 0
      %vm5096 = vcmask 1043456
      %v5098 = vsel %vm5096, %v5091, 0
      %5100 = vmatprep.subr.bf16.mxu0 0
      %5101 = vmatpush1.bf16.msra.mxu0 %v5098
      %5102 = vmatprep.subr.bf16.mxu0 0
      %5103 = vmatpush1.bf16.msra.mxu0 0
      %5104 = vmatprep.subr.bf16.mxu0 0
      %5105 = vmatpush1.bf16.msra.mxu0 0
      %5106 = vmatprep.subr.bf16.mxu0 0
      %5107 = vmatpush1.bf16.msra.mxu0 0
      %5108 = vmatprep.subr.bf16.mxu0 0
      %5109 = vmatpush1.bf16.msra.mxu0 0
      %5110 = vmatprep.subr.bf16.mxu0 0
      %5111 = vmatpush1.bf16.msra.mxu0 0
      %5112 = vmatprep.subr.bf16.mxu0 0
      %5113 = vmatpush1.bf16.msra.mxu0 0
      %5114 = vmatprep.subr.bf16.mxu0 0
      %5115 = vmatpush1.bf16.msra.mxu0 0
      %5116 = vmatprep.subr.bf16.mxu0 0
      %5117 = vmatpush1.bf16.msra.mxu0 0
      %5118 = vmatprep.subr.bf16.mxu0 0
      %5119 = vmatpush1.bf16.msra.mxu0 0
      %5120 = vmatprep.subr.bf16.mxu0 0
      %5121 = vmatpush1.bf16.msra.mxu0 0
      %5122 = vmatprep.subr.bf16.mxu0 0
      %5123 = vmatpush1.bf16.msra.mxu0 0
      %5124 = vmatprep.subr.bf16.mxu0 0
      %5125 = vmatpush1.bf16.msra.mxu0 0
      %5126 = vmatprep.subr.bf16.mxu0 0
      %5127 = vmatpush1.bf16.msra.mxu0 0
      %5128 = vmatprep.subr.bf16.mxu0 0
      %5129 = vmatpush1.bf16.msra.mxu0 0
      %5130 = vmatprep.subr.bf16.mxu0 0
      %5131 = vmatpush1.bf16.msra.mxu0 0
      %5132 = vmatprep.mubr.bf16.mxu0 0
      %5133 = vmatmul.mubr.bf16.gmra.mrb[0].mxu0 %v5094
      %v5134 = vpop.f32.mrb[0].mxu0
      %v5135 = vadd.f32 %v5088, %v5134
      %v5136 = vpop.f32.mrb[0].mxu0
      %v5137 = vpop.f32.mrb[0].mxu0
      %v5138 = vadd.f32 %v5089, %v5137
      %v5139 = vpop.f32.mrb[0].mxu0
      %5140 = vdwg.mxu0
      %v5141 = vmax.f32 %v5135, 0.0
      %v5142 = vmax.f32 %v5138, 0.0
      %v5143 = vpack.c.bf16 %v5142, %v5141
      %v5144 = vld [vmem:[%s11] sm:$0xf]
      %v5145 = vld [vmem:[%s11 + $0x4] sm:$0xf]
      %v5146 = vld [vmem:[%s11 + $0x8] sm:$0xf]
      %v5147 = vld [vmem:[%s11 + $0xc] sm:$0xf]
      %v5148 = vld [vmem:[%s11 + $0x10] sm:$0xf]
      %v5149 = vld [vmem:[%s11 + $0x14] sm:$0xf]
      %v5150 = vld [vmem:[%s11 + $0x18] sm:$0xf]
      %v5151 = vld [vmem:[%s11 + $0x1c] sm:$0xf]
      %v5152 = vld [vmem:[%s11 + $0x20] sm:$0xf]
      %v5153 = vld [vmem:[%s11 + $0x24] sm:$0xf]
      %v5154 = vld [vmem:[%s11 + $0x28] sm:$0xf]
      %v5155 = vld [vmem:[%s11 + $0x2c] sm:$0xf]
      %v5156 = vld [vmem:[%s11 + $0x30] sm:$0xf]
      %v5157 = vld [vmem:[%s11 + $0x34] sm:$0xf]
      %v5158 = vld [vmem:[%s11 + $0x38] sm:$0xf]
      %v5159 = vld [vmem:[%s11 + $0x3c] sm:$0xf]
      %v5160 = vld [vmem:[%s12] sm:$0x1]
      %v5162 = vlaneseq
      %v5163 = vshrl.u32 %v5162, 7
      %v5164 = vsub.s32 0, %v5163
      %v5165 = vrot.slane %v5160, %v5164
      %v5183 = vunpack.c.l.b16 %v5144
      %v5184 = vunpack.c.l.b16 %v5145
      %v5185 = vunpack.c.l.b16 %v5146
      %v5186 = vunpack.c.l.b16 %v5147
      %v5187 = vunpack.c.l.b16 %v5148
      %v5188 = vunpack.c.l.b16 %v5149
      %v5189 = vunpack.c.l.b16 %v5150
      %v5190 = vunpack.c.l.b16 %v5151
      %v5191 = vunpack.c.l.b16 %v5152
      %v5192 = vunpack.c.l.b16 %v5153
      %v5193 = vunpack.c.l.b16 %v5154
      %v5194 = vunpack.c.l.b16 %v5155
      %v5195 = vunpack.c.l.b16 %v5156
      %v5196 = vunpack.c.l.b16 %v5157
      %v5197 = vunpack.c.l.b16 %v5158
      %v5198 = vunpack.c.l.b16 %v5159
      %v5199 = vpack.c.b16 %v5184, %v5183
      %v5200 = vpack.c.b16 %v5186, %v5185
      %v5201 = vpack.c.b16 %v5188, %v5187
      %v5202 = vpack.c.b16 %v5190, %v5189
      %v5203 = vpack.c.b16 %v5192, %v5191
      %v5204 = vpack.c.b16 %v5194, %v5193
      %v5205 = vpack.c.b16 %v5196, %v5195
      %v5206 = vpack.c.b16 %v5198, %v5197
      %5215 = vmatprep.subr.bf16.mxu0 0
      %5216 = vmatpush1.bf16.msra.mxu0 %v5199
      %5217 = vmatprep.subr.bf16.mxu0 0
      %5218 = vmatpush1.bf16.msra.mxu0 %v5200
      %5219 = vmatprep.subr.bf16.mxu0 0
      %5220 = vmatpush1.bf16.msra.mxu0 %v5201
      %5221 = vmatprep.subr.bf16.mxu0 0
      %5222 = vmatpush1.bf16.msra.mxu0 %v5202
      %5223 = vmatprep.subr.bf16.mxu0 0
      %5224 = vmatpush1.bf16.msra.mxu0 %v5203
      %5225 = vmatprep.subr.bf16.mxu0 0
      %5226 = vmatpush1.bf16.msra.mxu0 %v5204
      %5227 = vmatprep.subr.bf16.mxu0 0
      %5228 = vmatpush1.bf16.msra.mxu0 %v5205
      %5229 = vmatprep.subr.bf16.mxu0 0
      %5230 = vmatpush1.bf16.msra.mxu0 %v5206
      %5231 = vmatprep.subr.bf16.mxu0 0
      %5232 = vmatpush1.bf16.msra.mxu0 0
      %5233 = vmatprep.subr.bf16.mxu0 0
      %5234 = vmatpush1.bf16.msra.mxu0 0
      %5235 = vmatprep.subr.bf16.mxu0 0
      %5236 = vmatpush1.bf16.msra.mxu0 0
      %5237 = vmatprep.subr.bf16.mxu0 0
      %5238 = vmatpush1.bf16.msra.mxu0 0
      %5239 = vmatprep.subr.bf16.mxu0 0
      %5240 = vmatpush1.bf16.msra.mxu0 0
      %5241 = vmatprep.subr.bf16.mxu0 0
      %5242 = vmatpush1.bf16.msra.mxu0 0
      %5243 = vmatprep.subr.bf16.mxu0 0
      %5244 = vmatpush1.bf16.msra.mxu0 0
      %5245 = vmatprep.subr.bf16.mxu0 0
      %5246 = vmatpush1.bf16.msra.mxu0 0
      %5247 = vmatprep.mubr.bf16.mxu0 0
      %5248 = vmatmul.mubr.bf16.gmra.mrb[0].mxu0 %v5143
      %v5249 = vpop.f32.mrb[0].mxu0
      %v5250 = vadd.f32 %v5165, %v5249
      %v5251 = vpop.f32.mrb[0].mxu0
      %v5252 = vpop.f32.mrb[0].mxu0
      %v5253 = vadd.f32 %v5165, %v5252
      %v5254 = vpop.f32.mrb[0].mxu0
      %5255 = vdwg.mxu0
      %v5256 = vmax.f32 %v5250, 0.0
      %v5257 = vmax.f32 %v5253, 0.0
      %v5258 = vpack.c.bf16 %v5257, %v5256
      %v5259 = vld [vmem:[%s13] sm:$0xff]
      %v5260 = vld [vmem:[%s13 + $0x8] sm:$0xf]
      %v5261 = vld [vmem:[%s13 + $0xc] sm:$0xff]
      %v5262 = vld [vmem:[%s13 + $0x14] sm:$0xf]
      %v5263 = vld [vmem:[%s13 + $0x18] sm:$0xff]
      %v5264 = vld [vmem:[%s13 + $0x20] sm:$0xf]
      %v5265 = vld [vmem:[%s13 + $0x24] sm:$0xff]
      %v5266 = vld [vmem:[%s13 + $0x2c] sm:$0xf]
      %v5267 = vld [vmem:[%s13 + $0x30] sm:$0xff]
      %v5268 = vld [vmem:[%s13 + $0x38] sm:$0xf]
      %v5269 = vld [vmem:[%s13 + $0x3c] sm:$0xff]
      %v5270 = vld [vmem:[%s13 + $0x44] sm:$0xf]
      %v5271 = vld [vmem:[%s13 + $0x48] sm:$0xff]
      %v5272 = vld [vmem:[%s13 + $0x50] sm:$0xf]
      %v5273 = vld [vmem:[%s13 + $0x54] sm:$0xff]
      %v5274 = vld [vmem:[%s13 + $0x5c] sm:$0xf]
      %v5275 = vld [vmem:[%s13 + $0x60] sm:$0xff]
      %v5276 = vld [vmem:[%s13 + $0x68] sm:$0xf]
      %v5277 = vld [vmem:[%s13 + $0x6c] sm:$0xff]
      %v5278 = vld [vmem:[%s13 + $0x74] sm:$0xf]
      %v5279 = vld [vmem:[%s13 + $0x78] sm:$0xff]
      %v5280 = vld [vmem:[%s13 + $0x80] sm:$0xf]
      %v5281 = vld [vmem:[%s13 + $0x84] sm:$0xff]
      %v5282 = vld [vmem:[%s13 + $0x8c] sm:$0xf]
      %v5283 = vld [vmem:[%s13 + $0x90] sm:$0xff]
      %v5284 = vld [vmem:[%s13 + $0x98] sm:$0xf]
      %v5285 = vld [vmem:[%s13 + $0x9c] sm:$0xff]
      %v5286 = vld [vmem:[%s13 + $0xa4] sm:$0xf]
      %v5287 = vld [vmem:[%s13 + $0xa8] sm:$0xff]
      %v5288 = vld [vmem:[%s13 + $0xb0] sm:$0xf]
      %v5289 = vld [vmem:[%s13 + $0xb4] sm:$0xff]
      %v5290 = vld [vmem:[%s13 + $0xbc] sm:$0xf]
      %v5291 = vld [vmem:[%s14] sm:$0x7]
      %v5293 = vlaneseq
      %v5294 = vshrl.u32 %v5293, 7
      %v5295 = vsub.s32 0, %v5294
      %v5296 = vrot.slane %v5291, %v5295
      %v5297 = vlaneseq
      %v5298 = vshrl.u32 %v5297, 7
      %v5299 = vsub.s32 1, %v5298
      %v5300 = vrot.slane %v5291, %v5299
      %v5301 = vlaneseq
      %v5302 = vshrl.u32 %v5301, 7
      %v5303 = vsub.s32 2, %v5302
      %v5304 = vrot.slane %v5291, %v5303
      %v5340 = vunpack.c.l.b16 %v5259
      %v5341 = vunpack.c.h.b16 %v5259
      %v5342 = vunpack.c.l.b16 %v5260
      %v5343 = vunpack.c.l.b16 %v5261
      %v5344 = vunpack.c.h.b16 %v5261
      %v5345 = vunpack.c.l.b16 %v5262
      %v5346 = vunpack.c.l.b16 %v5263
      %v5347 = vunpack.c.h.b16 %v5263
      %v5348 = vunpack.c.l.b16 %v5264
      %v5349 = vunpack.c.l.b16 %v5265
      %v5350 = vunpack.c.h.b16 %v5265
      %v5351 = vunpack.c.l.b16 %v5266
      %v5352 = vunpack.c.l.b16 %v5267
      %v5353 = vunpack.c.h.b16 %v5267
      %v5354 = vunpack.c.l.b16 %v5268
      %v5355 = vunpack.c.l.b16 %v5269
      %v5356 = vunpack.c.h.b16 %v5269
      %v5357 = vunpack.c.l.b16 %v5270
      %v5358 = vunpack.c.l.b16 %v5271
      %v5359 = vunpack.c.h.b16 %v5271
      %v5360 = vunpack.c.l.b16 %v5272
      %v5361 = vunpack.c.l.b16 %v5273
      %v5362 = vunpack.c.h.b16 %v5273
      %v5363 = vunpack.c.l.b16 %v5274
      %v5364 = vunpack.c.l.b16 %v5275
      %v5365 = vunpack.c.h.b16 %v5275
      %v5366 = vunpack.c.l.b16 %v5276
      %v5367 = vunpack.c.l.b16 %v5277
      %v5368 = vunpack.c.h.b16 %v5277
      %v5369 = vunpack.c.l.b16 %v5278
      %v5370 = vunpack.c.l.b16 %v5279
      %v5371 = vunpack.c.h.b16 %v5279
      %v5372 = vunpack.c.l.b16 %v5280
      %v5373 = vunpack.c.l.b16 %v5281
      %v5374 = vunpack.c.h.b16 %v5281
      %v5375 = vunpack.c.l.b16 %v5282
      %v5376 = vunpack.c.l.b16 %v5283
      %v5377 = vunpack.c.h.b16 %v5283
      %v5378 = vunpack.c.l.b16 %v5284
      %v5379 = vunpack.c.l.b16 %v5285
      %v5380 = vunpack.c.h.b16 %v5285
      %v5381 = vunpack.c.l.b16 %v5286
      %v5382 = vunpack.c.l.b16 %v5287
      %v5383 = vunpack.c.h.b16 %v5287
      %v5384 = vunpack.c.l.b16 %v5288
      %v5385 = vunpack.c.l.b16 %v5289
      %v5386 = vunpack.c.h.b16 %v5289
      %v5387 = vunpack.c.l.b16 %v5290
      %v5388 = vpack.c.b16 %v5343, %v5340
      %v5389 = vpack.c.b16 %v5344, %v5341
      %v5390 = vpack.c.b16 %v5345, %v5342
      %v5391 = vpack.c.b16 %v5349, %v5346
      %v5392 = vpack.c.b16 %v5350, %v5347
      %v5393 = vpack.c.b16 %v5351, %v5348
      %v5394 = vpack.c.b16 %v5355, %v5352
      %v5395 = vpack.c.b16 %v5356, %v5353
      %v5396 = vpack.c.b16 %v5357, %v5354
      %v5397 = vpack.c.b16 %v5361, %v5358
      %v5398 = vpack.c.b16 %v5362, %v5359
      %v5399 = vpack.c.b16 %v5363, %v5360
      %v5400 = vpack.c.b16 %v5367, %v5364
      %v5401 = vpack.c.b16 %v5368, %v5365
      %v5402 = vpack.c.b16 %v5369, %v5366
      %v5403 = vpack.c.b16 %v5373, %v5370
      %v5404 = vpack.c.b16 %v5374, %v5371
      %v5405 = vpack.c.b16 %v5375, %v5372
      %v5406 = vpack.c.b16 %v5379, %v5376
      %v5407 = vpack.c.b16 %v5380, %v5377
      %v5408 = vpack.c.b16 %v5381, %v5378
      %v5409 = vpack.c.b16 %v5385, %v5382
      %v5410 = vpack.c.b16 %v5386, %v5383
      %v5411 = vpack.c.b16 %v5387, %v5384
      %5436 = vmatprep.subr.bf16.mxu0 %v5389
      %5437 = vmatpush1.bf16.msra.mxu0 %v5388
      %5438 = vmatprep.subr.bf16.mxu0 %v5392
      %5439 = vmatpush1.bf16.msra.mxu0 %v5391
      %5440 = vmatprep.subr.bf16.mxu0 %v5395
      %5441 = vmatpush1.bf16.msra.mxu0 %v5394
      %5442 = vmatprep.subr.bf16.mxu0 %v5398
      %5443 = vmatpush1.bf16.msra.mxu0 %v5397
      %5444 = vmatprep.subr.bf16.mxu0 %v5401
      %5445 = vmatpush1.bf16.msra.mxu0 %v5400
      %5446 = vmatprep.subr.bf16.mxu0 %v5404
      %5447 = vmatpush1.bf16.msra.mxu0 %v5403
      %5448 = vmatprep.subr.bf16.mxu0 %v5407
      %5449 = vmatpush1.bf16.msra.mxu0 %v5406
      %5450 = vmatprep.subr.bf16.mxu0 %v5410
      %5451 = vmatpush1.bf16.msra.mxu0 %v5409
      %5452 = vmatprep.subr.bf16.mxu0 0
      %5453 = vmatpush1.bf16.msra.mxu0 0
      %5454 = vmatprep.subr.bf16.mxu0 0
      %5455 = vmatpush1.bf16.msra.mxu0 0
      %5456 = vmatprep.subr.bf16.mxu0 0
      %5457 = vmatpush1.bf16.msra.mxu0 0
      %5458 = vmatprep.subr.bf16.mxu0 0
      %5459 = vmatpush1.bf16.msra.mxu0 0
      %5460 = vmatprep.subr.bf16.mxu0 0
      %5461 = vmatpush1.bf16.msra.mxu0 0
      %5462 = vmatprep.subr.bf16.mxu0 0
      %5463 = vmatpush1.bf16.msra.mxu0 0
      %5464 = vmatprep.subr.bf16.mxu0 0
      %5465 = vmatpush1.bf16.msra.mxu0 0
      %5466 = vmatprep.subr.bf16.mxu0 0
      %5467 = vmatpush1.bf16.msra.mxu0 0
      %5468 = vmatprep.mubr.bf16.mxu0 0
      %5469 = vmatmul.mubr.bf16.gmra.mrb[0].mxu0 %v5258
      %v5470 = vpop.f32.mrb[0].mxu0
      %v5471 = vadd.f32 %v5296, %v5470
      %v5472 = vpop.f32.mrb[0].mxu0
      %v5473 = vadd.f32 %v5300, %v5472
      %v5474 = vpop.f32.mrb[0].mxu0
      %v5475 = vadd.f32 %v5296, %v5474
      %v5476 = vpop.f32.mrb[0].mxu0
      %v5477 = vadd.f32 %v5300, %v5476
      %5478 = vdwg.mxu0
      %5479 = vmatprep.subr.bf16.mxu0 0
      %5480 = vmatpush1.bf16.msra.mxu0 %v5390
      %5481 = vmatprep.subr.bf16.mxu0 0
      %5482 = vmatpush1.bf16.msra.mxu0 %v5393
      %5483 = vmatprep.subr.bf16.mxu0 0
      %5484 = vmatpush1.bf16.msra.mxu0 %v5396
      %5485 = vmatprep.subr.bf16.mxu0 0
      %5486 = vmatpush1.bf16.msra.mxu0 %v5399
      %5487 = vmatprep.subr.bf16.mxu0 0
      %5488 = vmatpush1.bf16.msra.mxu0 %v5402
      %5489 = vmatprep.subr.bf16.mxu0 0
      %5490 = vmatpush1.bf16.msra.mxu0 %v5405
      %5491 = vmatprep.subr.bf16.mxu0 0
      %5492 = vmatpush1.bf16.msra.mxu0 %v5408
      %5493 = vmatprep.subr.bf16.mxu0 0
      %5494 = vmatpush1.bf16.msra.mxu0 %v5411
      %5495 = vmatprep.subr.bf16.mxu0 0
      %5496 = vmatpush1.bf16.msra.mxu0 0
      %5497 = vmatprep.subr.bf16.mxu0 0
      %5498 = vmatpush1.bf16.msra.mxu0 0
      %5499 = vmatprep.subr.bf16.mxu0 0
      %5500 = vmatpush1.bf16.msra.mxu0 0
      %5501 = vmatprep.subr.bf16.mxu0 0
      %5502 = vmatpush1.bf16.msra.mxu0 0
      %5503 = vmatprep.subr.bf16.mxu0 0
      %5504 = vmatpush1.bf16.msra.mxu0 0
      %5505 = vmatprep.subr.bf16.mxu0 0
      %5506 = vmatpush1.bf16.msra.mxu0 0
      %5507 = vmatprep.subr.bf16.mxu0 0
      %5508 = vmatpush1.bf16.msra.mxu0 0
      %5509 = vmatprep.subr.bf16.mxu0 0
      %5510 = vmatpush1.bf16.msra.mxu0 0
      %5511 = vmatprep.mubr.bf16.mxu0 0
      %5512 = vmatmul.mubr.bf16.gmra.mrb[0].mxu0 %v5258
      %v5513 = vpop.f32.mrb[0].mxu0
      %v5514 = vadd.f32 %v5304, %v5513
      %v5515 = vpop.f32.mrb[0].mxu0
      %v5516 = vpop.f32.mrb[0].mxu0
      %v5517 = vadd.f32 %v5304, %v5516
      %v5518 = vpop.f32.mrb[0].mxu0
      %5519 = vdwg.mxu0
      %5520 = vst [vmem:[#allocation4] sm:$0xff] %v5471
      %5521 = vst [vmem:[#allocation4 + $0x8] sm:$0xff] %v5473
      %5522 = vst [vmem:[#allocation4 + $0x10] sm:$0xff] %v5514
      %5523 = vst [vmem:[#allocation4 + $0x18] sm:$0xff] %v5475
      %5524 = vst [vmem:[#allocation4 + $0x20] sm:$0xff] %v5477
      %5525 = vst [vmem:[#allocation4 + $0x28] sm:$0xff] %v5517
      %5526 = vst [vmem:[#allocation6] sm:$0xff] 0.0
      %5527 = vst [vmem:[#allocation6 + $0x8] sm:$0xff] 0.0
      %vm5528 = vcmask 130048
      %5529 = vst.msk [vmem:[#allocation6] sm:$0xff] %vm5528, %v5062
      %5530 = vst.msk [vmem:[#allocation6 + $0x8] sm:$0xff] %vm5528, %v5065
      %5533 = vrot.lane.b32.xlu0 %v5086, 16
      %v5534 = vpop.permute.xlu0 %5533
      %5535 = vrot.lane.b32.xlu0 %v5087, 16
      %v5536 = vpop.permute.xlu0 %5535
      %vm5539 = vcmask 195712
      %5540 = vst.msk [vmem:[#allocation6] sm:$0xff] %vm5539, %v5534
      %5541 = vst.msk [vmem:[#allocation6 + $0x8] sm:$0xff] %vm5539, %v5536
    $region69: #{tpu_custom_call.1} parent=1 // pred_fallthru
      _
    // Predicated region
    $region70: #{tpu_custom_call.1} parent=1 // pred_check
      _
    $region71: #{tpu_custom_call.1} parent=1 // pred_check_branch
      %5543 = sbr.rel (0) target = $region73
    $region72: #{tpu_custom_call.1} parent=1 // pred_region
      %s5545 = ssub.s32 768, 768
      %5546 = vsyncadd [#allocation5], %s5545
      %s5547 = sshll.u32 [#allocation4], 4
      %s5548 = int_to_ptr.vmem [resolvable:$true] %s5547
      %5553 = dma.vmem_to_hbm [thread:$0]  %s5548, 768, %s15, [#allocation5], 384, 384, 24
    $region73: #{tpu_custom_call.1} parent=1 // pred_fallthru
      _
    // Predicated region
    $region74: #{tpu_custom_call.1} parent=1 // pred_check
      _
    $region75: #{tpu_custom_call.1} parent=1 // pred_check_branch
      %5555 = sbr.rel (0) target = $region77
    $region76: #{tpu_custom_call.1} parent=1 // pred_region
      %s5557 = ssub.s32 256, 256
      %5558 = vsyncadd [#allocation7], %s5557
      %s5559 = sshll.u32 [#allocation6], 4
      %s5560 = int_to_ptr.vmem [resolvable:$true] %s5559
      %5565 = dma.vmem_to_hbm [thread:$0]  %s5560, 256, %s16, [#allocation7], 128, 128, 8
    $region77: #{tpu_custom_call.1} parent=1 // pred_fallthru
      _
    // Predicated region
    $region78: #{tpu_custom_call.1} parent=1 // pred_check
      _
    $region79: #{tpu_custom_call.1} parent=1 // pred_check_branch
      %5567 = sbr.rel (0) target = $region81
    $region80: #{tpu_custom_call.1} parent=1 // pred_region
      %5568 = dma.done [#allocation5], 768
    $region81: #{tpu_custom_call.1} parent=1 // pred_fallthru
      _
    // Predicated region
    $region82: #{tpu_custom_call.1} parent=1 // pred_check
      _
    $region83: #{tpu_custom_call.1} parent=1 // pred_check_branch
      %5570 = sbr.rel (0) target = $region85
    $region84: #{tpu_custom_call.1} parent=1 // pred_region
      %5571 = dma.done [#allocation7], 256
    $region85: #{tpu_custom_call.1} parent=1 // pred_fallthru
      _
    %5572 = vsyncpa [#allocation5], 1
    %5573 = vsyncpa [#allocation7], 1

</llo_original>
